<compile_context>
chip_gen: v7x
topology: tpu7x:2x2x1
jax: 0.10.0
libtpu: 0.0.40
codegen_flags: <defaults>
</compile_context>

<pallas_src>
import functools

import jax
import jax.numpy as jnp
from jax.experimental import pallas as pl
from jax.experimental.pallas import tpu as pltpu


def _round_up(x, m):
    return (x + m - 1) // m * m


# ----------------------------- in-kernel helpers ----------------------------

def _accum_stats(stats_ref, y, stat_lanes, rows=slice(None)):
    """Accumulate per-channel [sum | sum_sq] of f32 `y` into stats_ref[rows].

    stat_lanes == 128: lane-partial accumulation (VPU adds only; the single
    cross-lane reduce happens once, outside the kernels).
    stat_lanes == 1:   plain reduction fallback (L not a multiple of 128).
    """
    l = y.shape[1]
    if stat_lanes == 1:
        stats_ref[rows, 0:1] += jnp.sum(y, axis=1, keepdims=True)
        stats_ref[rows, 1:2] += jnp.sum(y * y, axis=1, keepdims=True)
    else:
        w = stat_lanes
        s = y[:, 0:w]
        q = y[:, 0:w] * y[:, 0:w]
        for j in range(1, l // w):
            c = y[:, j * w:(j + 1) * w]
            s = s + c
            q = q + c * c
        stats_ref[rows, 0:w] += s
        stats_ref[rows, w:2 * w] += q


# ------------------------------- Pallas kernels -----------------------------

def _heads_kernel(x_ref, w_ref, *refs, splits, cdt, stat_lanes):
    # x_ref: (1, C_in, L) f32; w_ref: (C_tot, C_in) cdt (bf16 by default).
    # refs: len(splits) y-outputs (cdt) followed by len(splits) stats (f32).
    n = len(splits)
    y_refs, s_refs = refs[:n], refs[n:]

    @pl.when(pl.program_id(0) == 0)
    def _():
        for s_ref in s_refs:
            s_ref[...] = jnp.zeros_like(s_ref)

    # One MXU pass for every 1x1 conv of the block; f32 accumulation.
    y = jnp.dot(w_ref[...], x_ref[0].astype(cdt),
                preferred_element_type=jnp.float32)         # (C_tot, L) f32

    off = 0
    for y_ref, s_ref, c in zip(y_refs, s_refs, splits):
        part = y[off:off + c]
        y_ref[0] = part.astype(cdt)                          # bf16 HBM store
        _accum_stats(s_ref, part, stat_lanes)                # stats from f32
        off += c


def _branches_kernel(y_ref, hscale_ref, hshift_ref, wstk_ref,
                     mid_ref, mstats_ref, hp_ref, *,
                     dilations, pads, n_taps, cb, v, left, l_out, cdt,
                     stat_lanes):
    # y_ref:     (1, n_relu*Cb, L) cdt   pre-BN 1x1-conv heads (ReLU'd branches)
    # hscale/hshift: (n_relu*Cb, 1) f32  fused head-BN affine (precomputed)
    # wstk_ref:  (nd, Cb, K*Cb) cdt      stacked dilated-conv weights
    # mid_ref:   (1, (nd+1)*Cb, L) cdt   pre-BN branch outputs (tconvs+maxpool)
    # mstats_ref:((nd+1)*Cb, 2*W) f32    lane-partial stats accumulator
    # hp_ref:    (n_relu*Cb, Lp) f32     zero-padded BN+ReLU slab (VMEM only)
    @pl.when(pl.program_id(0) == 0)
    def _():
        mstats_ref[...] = jnp.zeros_like(mstats_ref)
        hp_ref[...] = jnp.zeros_like(hp_ref)   # zero the pads once; interior
                                               # is rewritten every step

    # head BN + ReLU into the 128-aligned interior of the padded slab
    h = jnp.maximum(
        y_ref[0].astype(jnp.float32) * hscale_ref[...] + hshift_ref[...], 0.0)
    hp_ref[:, left:left + l_out] = h

    nd = len(dilations)
    for i, d in enumerate(dilations):
        rows = slice(i * cb, (i + 1) * cb)
        base = left - pads[i] * v
        # Stacked contraction over the K taps: one (Cb, K*Cb)x(K*Cb, L) MXU
        # dot instead of K small dots + (K-1) VALU adds.
        taps = [hp_ref[rows, base + k * d * v: base + k * d * v + l_out]
                for k in range(n_taps)]
        rhs = jnp.concatenate(taps, axis=0).astype(cdt)      # (K*Cb, L)
        acc = jnp.dot(wstk_ref[i], rhs,
                      preferred_element_type=jnp.float32)    # (Cb, L) f32
        mid_ref[0, rows, :] = acc.astype(cdt)
        _accum_stats(mstats_ref, acc, stat_lanes, rows=rows)

    # maxpool branch: MaxPool2d((3,1), stride 1, pad 1) over T.  Zero padding
    # == -inf padding because the ReLU above guarantees values >= 0.
    rows = slice(nd * cb, (nd + 1) * cb)
    base = left - v
    m = hp_ref[rows, base: base + l_out]
    for k in (1, 2):
        off = base + k * v
        m = jnp.maximum(m, hp_ref[rows, off: off + l_out])
    mid_ref[0, rows, :] = m.astype(cdt)
    _accum_stats(mstats_ref, m, stat_lanes, rows=rows)


def _output_kernel(*refs, res_mode, n_mid_c):
    # res_mode: 0 = no residual, 1 = add raw residual (identity),
    #           2 = BN(conv residual) then add.
    if res_mode == 2:
        (mid_ref, mscale_ref, mshift_ref, yplain_ref, pscale_ref, pshift_ref,
         yres_ref, rscale_ref, rshift_ref, out_ref) = refs
    elif res_mode == 1:
        (mid_ref, mscale_ref, mshift_ref, yplain_ref, pscale_ref, pshift_ref,
         res_ref, out_ref) = refs
    else:
        (mid_ref, mscale_ref, mshift_ref, yplain_ref, pscale_ref, pshift_ref,
         out_ref) = refs

    z_mid = mid_ref[0].astype(jnp.float32) * mscale_ref[...] + mshift_ref[...]
    z_pl = yplain_ref[0].astype(jnp.float32) * pscale_ref[...] + pshift_ref[...]

    if res_mode == 2:
        r = yres_ref[0].astype(jnp.float32) * rscale_ref[...] + rshift_ref[...]
    elif res_mode == 1:
        r = res_ref[0].astype(jnp.float32)
    if res_mode:
        z_mid = z_mid + r[:n_mid_c]
        z_pl = z_pl + r[n_mid_c:]

    # Direct channel-slice writes of the concatenated branches: no torch.cat.
    out_ref[0, :n_mid_c, :] = z_mid
    out_ref[0, n_mid_c:, :] = z_pl


# ---------------------------- pallas_call wrappers ---------------------------

_VMEM_LIMIT = 64 * 1024 * 1024


def _pass1_heads(x3, w_all, splits, *, cdt, stat_lanes):
    n, c_in, l = x3.shape
    c_tot = w_all.shape[0]
    kernel = functools.partial(_heads_kernel, splits=tuple(splits), cdt=cdt,
                               stat_lanes=stat_lanes)
    out_shape = tuple(
        [jax.ShapeDtypeStruct((n, c, l), cdt) for c in splits]
        + [jax.ShapeDtypeStruct((c, 2 * stat_lanes), jnp.float32)
           for c in splits])
    out_specs = (
        [pl.BlockSpec((1, c, l), lambda i: (i, 0, 0)) for c in splits]
        + [pl.BlockSpec((c, 2 * stat_lanes), lambda i: (0, 0)) for c in splits])
    return pl.pallas_call(
        kernel,
        out_shape=out_shape,
        grid_spec=pltpu.PrefetchScalarGridSpec(
            num_scalar_prefetch=0,
            grid=(n,),
            in_specs=[pl.BlockSpec((1, c_in, l), lambda i: (i, 0, 0)),
                      pl.BlockSpec((c_tot, c_in), lambda i: (0, 0))],
            out_specs=out_specs),
        compiler_params=pltpu.CompilerParams(
            dimension_semantics=("arbitrary",),
            vmem_limit_bytes=_VMEM_LIMIT),
        cost_estimate=pl.CostEstimate(
            flops=2 * n * c_tot * c_in * l, transcendentals=0,
            bytes_accessed=(4 * n * c_in * l
                            + cdt.itemsize * (c_tot * c_in + n * c_tot * l))),
    )(x3, w_all)


def _pass2_branches(y_relu, hscale, hshift, w_stk, *, dilations, pads, n_taps,
                    cb, v, cdt, stat_lanes):
    n, n_relu_c, l = y_relu.shape
    nd = len(dilations)
    n_mid_c = (nd + 1) * cb
    pad_max = max(list(pads) + [1])
    left = _round_up(pad_max * v, 128)       # 128-aligned interior slab writes
    right = _round_up(pad_max * v, 128)
    lp = left + l + right
    kernel = functools.partial(_branches_kernel, dilations=tuple(dilations),
                               pads=tuple(pads), n_taps=n_taps, cb=cb, v=v,
                               left=left, l_out=l, cdt=cdt,
                               stat_lanes=stat_lanes)
    return pl.pallas_call(
        kernel,
        out_shape=(jax.ShapeDtypeStruct((n, n_mid_c, l), cdt),
                   jax.ShapeDtypeStruct((n_mid_c, 2 * stat_lanes), jnp.float32)),
        grid_spec=pltpu.PrefetchScalarGridSpec(
            num_scalar_prefetch=0,
            grid=(n,),
            in_specs=[pl.BlockSpec((1, n_relu_c, l), lambda i: (i, 0, 0)),
                      pl.BlockSpec((n_relu_c, 1), lambda i: (0, 0)),
                      pl.BlockSpec((n_relu_c, 1), lambda i: (0, 0)),
                      pl.BlockSpec((nd, cb, n_taps * cb), lambda i: (0, 0, 0))],
            out_specs=[pl.BlockSpec((1, n_mid_c, l), lambda i: (i, 0, 0)),
                       pl.BlockSpec((n_mid_c, 2 * stat_lanes), lambda i: (0, 0))],
            scratch_shapes=[pltpu.VMEM((n_relu_c, lp), jnp.float32)]),
        compiler_params=pltpu.CompilerParams(
            dimension_semantics=("arbitrary",),
            vmem_limit_bytes=_VMEM_LIMIT),
        cost_estimate=pl.CostEstimate(
            flops=2 * n * nd * cb * (n_taps * cb) * l, transcendentals=0,
            bytes_accessed=cdt.itemsize * (n * n_relu_c * l + n * n_mid_c * l
                                           + nd * cb * n_taps * cb)),
    )(y_relu, hscale, hshift, w_stk)


def _pass3_output(mid, mscale, mshift, y_plain, pscale, pshift, *, cb,
                  res=None, rscale=None, rshift=None):
    n, n_mid_c, l = mid.shape
    c_out = n_mid_c + cb
    if res is None:
        res_mode = 0
    elif rscale is None:
        res_mode = 1
    else:
        res_mode = 2
    kernel = functools.partial(_output_kernel, res_mode=res_mode,
                               n_mid_c=n_mid_c)
    args = [mid, mscale, mshift, y_plain, pscale, pshift]
    in_specs = [pl.BlockSpec((1, n_mid_c, l), lambda i: (i, 0, 0)),
                pl.BlockSpec((n_mid_c, 1), lambda i: (0, 0)),
                pl.BlockSpec((n_mid_c, 1), lambda i: (0, 0)),
                pl.BlockSpec((1, cb, l), lambda i: (i, 0, 0)),
                pl.BlockSpec((cb, 1), lambda i: (0, 0)),
                pl.BlockSpec((cb, 1), lambda i: (0, 0))]
    if res_mode >= 1:
        args.append(res)
        in_specs.append(pl.BlockSpec((1, c_out, l), lambda i: (i, 0, 0)))
    if res_mode == 2:
        args += [rscale, rshift]
        in_specs += [pl.BlockSpec((c_out, 1), lambda i: (0, 0)),
                     pl.BlockSpec((c_out, 1), lambda i: (0, 0))]
    return pl.pallas_call(
        kernel,
        out_shape=jax.ShapeDtypeStruct((n, c_out, l), jnp.float32),
        grid_spec=pltpu.PrefetchScalarGridSpec(
            num_scalar_prefetch=0,
            grid=(n,),
            in_specs=in_specs,
            out_specs=pl.BlockSpec((1, c_out, l), lambda i: (i, 0, 0))),
        compiler_params=pltpu.CompilerParams(
            dimension_semantics=("parallel",),
            vmem_limit_bytes=_VMEM_LIMIT),
    )(*args)


# ----------------------------- wrapper-side math ----------------------------

def _bn_scale_shift(stats, gamma, beta, count, eps):
    # stats: (C, 2*W) f32 lane partials; returns fused affine (scale, shift).
    w = stats.shape[1] // 2
    s = jnp.sum(stats[:, :w], axis=1, keepdims=True)
    q = jnp.sum(stats[:, w:], axis=1, keepdims=True)
    mean = s / count
    var = jnp.maximum(q / count - mean * mean, 0.0)   # guard cancellation
    scale = jax.lax.rsqrt(var + eps) * gamma.reshape(-1, 1)
    shift = beta.reshape(-1, 1) - mean * scale
    return scale, shift


# -------------------------------- forward pass -------------------------------

def multiscale_tcn_forward(x, params, *, kernel_size=3, dilations=(1, 2, 3, 4),
                           stride=1, residual=True, residual_kernel_size=1,
                           eps=1e-5, compute_dtype=jnp.bfloat16):
    """x: (N, C_in, T, V) float32 -> (N, C_out, T, V) float32."""
    assert isinstance(kernel_size, int)  # TODO(synk): per-branch kernel_size list
    assert stride == 1                   # TODO(synk): stride > 1 not implemented
    assert residual_kernel_size == 1     # TODO(synk): residual_kernel_size > 1

    n, c_in, t, v = x.shape
    nd = len(dilations)
    nb = nd + 2
    cb = params['head_gamma'].shape[0] // nb
    c_out = nb * cb
    assert cb % 8 == 0, "branch channels must be a multiple of 8 for TPU tiling"
    l = t * v
    count = float(n * l)
    cdt = jnp.dtype(compute_dtype)
    stat_lanes = 128 if l % 128 == 0 else 1
    n_relu_c = (nd + 1) * cb

    pads = [((kernel_size - 1) * d) // 2 for d in dilations]
    for d, p in zip(dilations, pads):
        assert t + 2 * p - d * (kernel_size - 1) == t, \
            "temporal length must be preserved (odd effective kernel)"

    if not residual:
        res_kind = 'none'
    elif c_in == c_out:
        res_kind = 'identity'
    else:
        res_kind = 'conv'

    x3 = x.reshape(n, c_in, l)

    # ---- pass 1: every 1x1 conv of the block + lane-partial BN stats ----
    if res_kind == 'conv':
        w_all = jnp.concatenate([params['head_w'], params['res_w']], axis=0)
        splits = (n_relu_c, cb, c_out)
    else:
        w_all = params['head_w']
        splits = (n_relu_c, cb)
    outs = _pass1_heads(x3, w_all.astype(cdt), splits, cdt=cdt,
                        stat_lanes=stat_lanes)
    ys, stats = outs[:len(splits)], outs[len(splits):]
    y_relu, y_plain = ys[0], ys[1]
    s_relu, s_plain = stats[0], stats[1]
    y_res = ys[2] if res_kind == 'conv' else None
    s_res = stats[2] if res_kind == 'conv' else None

    # tiny per-channel BN affines finished in plain XLA between passes
    hscale, hshift = _bn_scale_shift(s_relu, params['head_gamma'][:n_relu_c],
                                     params['head_beta'][:n_relu_c], count, eps)
    pscale, pshift = _bn_scale_shift(s_plain, params['head_gamma'][n_relu_c:],
                                     params['head_beta'][n_relu_c:], count, eps)

    # ---- pass 2: fused head BN+ReLU+pad (VMEM) -> dilated tconvs + maxpool ----
    w_stk = jnp.transpose(params['tconv_w'], (0, 2, 1, 3)).reshape(
        nd, cb, kernel_size * cb).astype(cdt)
    mid, s_mid = _pass2_branches(y_relu, hscale, hshift, w_stk,
                                 dilations=dilations, pads=pads,
                                 n_taps=kernel_size, cb=cb, v=v, cdt=cdt,
                                 stat_lanes=stat_lanes)

    mid_gamma = jnp.concatenate([params['tconv_gamma'].reshape(-1),
                                 params['pool_gamma']])
    mid_beta = jnp.concatenate([params['tconv_beta'].reshape(-1),
                                params['pool_beta']])
    mscale, mshift = _bn_scale_shift(s_mid, mid_gamma, mid_beta, count, eps)

    # ---- pass 3: per-branch BN + residual, written straight into the output ----
    if res_kind == 'conv':
        rscale, rshift = _bn_scale_shift(s_res, params['res_gamma'],
                                         params['res_beta'], count, eps)
        out = _pass3_output(mid, mscale, mshift, y_plain, pscale, pshift,
                            cb=cb, res=y_res, rscale=rscale, rshift=rshift)
    elif res_kind == 'identity':
        out = _pass3_output(mid, mscale, mshift, y_plain, pscale, pshift,
                            cb=cb, res=x3)
    else:
        out = _pass3_output(mid, mscale, mshift, y_plain, pscale, pshift, cb=cb)
    return out.reshape(n, c_out, t, v)


# ------------------------ deterministic parameter init ----------------------

def init_params(key, in_channels, out_channels, kernel_size=3,
                dilations=(1, 2, 3, 4)):
    nd = len(dilations)
    nb = nd + 2
    assert out_channels % nb == 0
    cb = out_channels // nb
    k = jax.random.split(key, 8)
    # kaiming_normal_(mode='fan_out'); conv biases are 0 (and cancelled by BN).
    head_w = (2.0 / cb) ** 0.5 * jax.random.normal(
        k[0], (nb * cb, in_channels), jnp.float32)
    head_gamma = 1.0 + 0.02 * jax.random.normal(k[1], (nb * cb,), jnp.float32)
    head_beta = jnp.zeros((nb * cb,), jnp.float32)
    tconv_w = (2.0 / (cb * kernel_size)) ** 0.5 * jax.random.normal(
        k[2], (nd, kernel_size, cb, cb), jnp.float32)
    tconv_gamma = 1.0 + 0.02 * jax.random.normal(k[3], (nd, cb), jnp.float32)
    tconv_beta = jnp.zeros((nd, cb), jnp.float32)
    pool_gamma = 1.0 + 0.02 * jax.random.normal(k[4], (cb,), jnp.float32)
    pool_beta = jnp.zeros((cb,), jnp.float32)
    res_w = (2.0 / out_channels) ** 0.5 * jax.random.normal(
        k[5], (out_channels, in_channels), jnp.float32)
    res_gamma = 1.0 + 0.02 * jax.random.normal(k[6], (out_channels,), jnp.float32)
    res_beta = jnp.zeros((out_channels,), jnp.float32)
    return dict(head_w=head_w, head_gamma=head_gamma, head_beta=head_beta,
                tconv_w=tconv_w, tconv_gamma=tconv_gamma, tconv_beta=tconv_beta,
                pool_gamma=pool_gamma, pool_beta=pool_beta,
                res_w=res_w, res_gamma=res_gamma, res_beta=res_beta)


# ---------------------------- pure-JAX reference -----------------------------

def reference_forward(x, params, *, kernel_size=3, dilations=(1, 2, 3, 4),
                      stride=1, residual=True, eps=1e-5):
    assert stride == 1
    n, c_in, t, v = x.shape
    nd = len(dilations)
    nb = nd + 2
    cb = params['head_gamma'].shape[0] // nb
    c_out = nb * cb
    hi = jax.lax.Precision.HIGHEST

    def bn(y, g, b):
        mean = y.mean(axis=(0, 2, 3), keepdims=True)
        var = ((y - mean) ** 2).mean(axis=(0, 2, 3), keepdims=True)
        return ((y - mean) * jax.lax.rsqrt(var + eps) * g.reshape(1, -1, 1, 1)
                + b.reshape(1, -1, 1, 1))

    heads = jnp.einsum('oc,nctv->notv', params['head_w'], x, precision=hi)
    outs = []
    for i, d in enumerate(dilations):
        sl = slice(i * cb, (i + 1) * cb)
        h = jnp.maximum(bn(heads[:, sl], params['head_gamma'][sl],
                           params['head_beta'][sl]), 0.0)
        p = ((kernel_size - 1) * d) // 2
        hpad = jnp.pad(h, ((0, 0), (0, 0), (p, p), (0, 0)))
        yb = jnp.zeros((n, cb, t, v), jnp.float32)
        for kk in range(kernel_size):
            yb = yb + jnp.einsum('oc,nctv->notv', params['tconv_w'][i][kk],
                                 hpad[:, :, kk * d:kk * d + t, :], precision=hi)
        outs.append(bn(yb, params['tconv_gamma'][i], params['tconv_beta'][i]))
    i = nd
    sl = slice(i * cb, (i + 1) * cb)
    h = jnp.maximum(bn(heads[:, sl], params['head_gamma'][sl],
                       params['head_beta'][sl]), 0.0)
    hpad = jnp.pad(h, ((0, 0), (0, 0), (1, 1), (0, 0)), constant_values=-jnp.inf)
    ym = jnp.maximum(jnp.maximum(hpad[:, :, 0:t], hpad[:, :, 1:t + 1]),
                     hpad[:, :, 2:t + 2])
    outs.append(bn(ym, params['pool_gamma'], params['pool_beta']))
    i = nd + 1
    sl = slice(i * cb, (i + 1) * cb)
    outs.append(bn(heads[:, sl], params['head_gamma'][sl], params['head_beta'][sl]))
    out = jnp.concatenate(outs, axis=1)
    if not residual:
        res = 0.0
    elif c_in == c_out:
        res = x
    else:
        res = bn(jnp.einsum('oc,nctv->notv', params['res_w'], x, precision=hi),
                 params['res_gamma'], params['res_beta'])
    return out + res


# ----------------------------------- main ------------------------------------

if __name__ == "__main__":
    key = jax.random.PRNGKey(0)
    k_x, k_p = jax.random.split(key)

    N, C_in, T, V = 2, 4, 16, 16
    C_out = 48                      # 6 branches -> 8 channels per branch
    K = 3
    dilations = (1, 2, 3, 4)

    x = jax.random.normal(k_x, (N, C_in, T, V), dtype=jnp.float32)
    params = init_params(k_p, C_in, C_out, kernel_size=K, dilations=dilations)

    ref = jax.block_until_ready(
        reference_forward(x, params, kernel_size=K, dilations=dilations,
                          stride=1, residual=True))

    # f32 compute path: tight correctness check against the reference.
    fwd_f32 = jax.jit(functools.partial(
        multiscale_tcn_forward, kernel_size=K, dilations=dilations, stride=1,
        residual=True, compute_dtype=jnp.float32))
    out_f32 = jax.block_until_ready(fwd_f32(x, params))
    assert out_f32.shape == (N, C_out, T, V), out_f32.shape
    assert jnp.allclose(out_f32, ref, atol=2e-3, rtol=2e-3), \
        float(jnp.max(jnp.abs(out_f32 - ref)))

    # bf16 compute/storage path (performance default: native MXU matmuls and
    # half the HBM traffic); the train-mode BN after every conv absorbs the
    # bf16 rounding, so a looser tolerance vs the f32 reference is expected.
    fwd_bf16 = jax.jit(functools.partial(
        multiscale_tcn_forward, kernel_size=K, dilations=dilations, stride=1,
        residual=True, compute_dtype=jnp.bfloat16))
    out_bf16 = jax.block_until_ready(fwd_bf16(x, params))
    assert out_bf16.shape == (N, C_out, T, V), out_bf16.shape
    assert jnp.allclose(out_bf16, ref, atol=6e-2, rtol=6e-2), \
        float(jnp.max(jnp.abs(out_bf16 - ref)))

    print("KERNEL_OK")
</pallas_src>

<mosaic_0001>
module attributes {stable_mosaic.version = 11 : i64} {
  func.func @_heads_kernel(%arg0: i32, %arg1: memref<1x4x256xf32, #tpu.memory_space<vmem>>, %arg2: memref<96x4xf32, #tpu.memory_space<vmem>>, %arg3: memref<1x40x256xf32, #tpu.memory_space<vmem>>, %arg4: memref<1x8x256xf32, #tpu.memory_space<vmem>>, %arg5: memref<1x48x256xf32, #tpu.memory_space<vmem>>, %arg6: memref<40x256xf32, #tpu.memory_space<vmem>>, %arg7: memref<8x256xf32, #tpu.memory_space<vmem>>, %arg8: memref<48x256xf32, #tpu.memory_space<vmem>>) attributes {dimension_semantics = [#tpu.dimension_semantics<arbitrary>], iteration_bounds = array<i64: 2>, scalar_prefetch = 0 : i64, scratch_operands = 0 : i64, tpu.core_type = #tpu.core_type<tc>, window_params = [{transform_indices = @transform_0, window_bounds = array<i64: 1, 4, 256>}, {pipeline_mode = #tpu.pipeline_mode<synchronous>, transform_indices = @transform_1, window_bounds = array<i64: 96, 4>}, {transform_indices = @transform_2, window_bounds = array<i64: 1, 40, 256>}, {transform_indices = @transform_3, window_bounds = array<i64: 1, 8, 256>}, {transform_indices = @transform_4, window_bounds = array<i64: 1, 48, 256>}, {pipeline_mode = #tpu.pipeline_mode<synchronous>, transform_indices = @transform_5, window_bounds = array<i64: 40, 256>}, {pipeline_mode = #tpu.pipeline_mode<synchronous>, transform_indices = @transform_6, window_bounds = array<i64: 8, 256>}, {pipeline_mode = #tpu.pipeline_mode<synchronous>, transform_indices = @transform_7, window_bounds = array<i64: 48, 256>}]} {
    %c0_i32 = arith.constant 0 : i32
    %0 = arith.cmpi eq, %arg0, %c0_i32 : i32
    %1 = arith.extui %0 : i1 to i32
    %c0_i32_0 = arith.constant 0 : i32
    %2 = arith.cmpi ne, %1, %c0_i32_0 : i32
    scf.if %2 {
      %cst_37 = arith.constant 0.000000e+00 : f32
      %61 = vector.broadcast %cst_37 : f32 to vector<40x256xf32>
      %c0_38 = arith.constant 0 : index
      %c0_39 = arith.constant 0 : index
      %62 = vector.load %arg6[%c0_38, %c0_39] : memref<40x256xf32, #tpu.memory_space<vmem>>, vector<40x256xf32>
      tpu.vector_store %arg6[%c0_38, %c0_39], %61 {strides = array<i32>} : memref<40x256xf32, #tpu.memory_space<vmem>>, vector<40x256xf32>,
      %cst_40 = arith.constant 0.000000e+00 : f32
      %63 = vector.broadcast %cst_40 : f32 to vector<8x256xf32>
      %c0_41 = arith.constant 0 : index
      %c0_42 = arith.constant 0 : index
      %64 = vector.load %arg7[%c0_41, %c0_42] : memref<8x256xf32, #tpu.memory_space<vmem>>, vector<8x256xf32>
      tpu.vector_store %arg7[%c0_41, %c0_42], %63 {strides = array<i32>} : memref<8x256xf32, #tpu.memory_space<vmem>>, vector<8x256xf32>,
      %cst_43 = arith.constant 0.000000e+00 : f32
      %65 = vector.broadcast %cst_43 : f32 to vector<48x256xf32>
      %c0_44 = arith.constant 0 : index
      %c0_45 = arith.constant 0 : index
      %66 = vector.load %arg8[%c0_44, %c0_45] : memref<48x256xf32, #tpu.memory_space<vmem>>, vector<48x256xf32>
      tpu.vector_store %arg8[%c0_44, %c0_45], %65 {strides = array<i32>} : memref<48x256xf32, #tpu.memory_space<vmem>>, vector<48x256xf32>,
    } else {
    }
    %c0 = arith.constant 0 : index
    %c0_1 = arith.constant 0 : index
    %3 = vector.load %arg2[%c0, %c0_1] : memref<96x4xf32, #tpu.memory_space<vmem>>, vector<96x4xf32>
    %c0_2 = arith.constant 0 : index
    %c0_3 = arith.constant 0 : index
    %c0_4 = arith.constant 0 : index
    %4 = vector.load %arg1[%c0_2, %c0_3, %c0_4] : memref<1x4x256xf32, #tpu.memory_space<vmem>>, vector<1x4x256xf32>
    %5 = vector.shape_cast %4 : vector<1x4x256xf32> to vector<4x256xf32>
    %cst = arith.constant dense<0.000000e+00> : vector<96x256xf32>
    %6 = tpu.matmul %3, %5, %cst {dimension_numbers = #tpu.dot_dimension_numbers<[1], [0], [0], [1], [0, 0, 1, 1], [], []>} : vector<96x4xf32>, vector<4x256xf32>, vector<96x256xf32> -> vector<96x256xf32>
    %7 = vector.extract_strided_slice %6 {offsets = [0, 0], sizes = [40, 256], strides = [1, 1]} : vector<96x256xf32> to vector<40x256xf32>
    %c0_5 = arith.constant 0 : index
    %c0_6 = arith.constant 0 : index
    %c0_7 = arith.constant 0 : index
    %8 = vector.load %arg3[%c0_5, %c0_6, %c0_7] : memref<1x40x256xf32, #tpu.memory_space<vmem>>, vector<1x40x256xf32>
    %9 = vector.shape_cast %8 : vector<1x40x256xf32> to vector<40x256xf32>
    %10 = vector.shape_cast %7 : vector<40x256xf32> to vector<1x40x256xf32>
    tpu.vector_store %arg3[%c0_5, %c0_6, %c0_7], %10 {strides = array<i32>} : memref<1x40x256xf32, #tpu.memory_space<vmem>>, vector<1x40x256xf32>,
    %11 = vector.extract_strided_slice %7 {offsets = [0, 0], sizes = [40, 128], strides = [1, 1]} : vector<40x256xf32> to vector<40x128xf32>
    %12 = vector.extract_strided_slice %7 {offsets = [0, 0], sizes = [40, 128], strides = [1, 1]} : vector<40x256xf32> to vector<40x128xf32>
    %13 = vector.extract_strided_slice %7 {offsets = [0, 0], sizes = [40, 128], strides = [1, 1]} : vector<40x256xf32> to vector<40x128xf32>
    %14 = arith.mulf %12, %13 : vector<40x128xf32>
    %15 = vector.extract_strided_slice %7 {offsets = [0, 128], sizes = [40, 128], strides = [1, 1]} : vector<40x256xf32> to vector<40x128xf32>
    %16 = arith.addf %11, %15 : vector<40x128xf32>
    %17 = arith.mulf %15, %15 : vector<40x128xf32>
    %18 = arith.addf %14, %17 : vector<40x128xf32>
    %c0_8 = arith.constant 0 : index
    %c0_9 = arith.constant 0 : index
    %19 = vector.load %arg6[%c0_8, %c0_9] : memref<40x256xf32, #tpu.memory_space<vmem>>, vector<40x128xf32>
    %20 = arith.addf %19, %16 : vector<40x128xf32>
    %c0_10 = arith.constant 0 : index
    %c0_11 = arith.constant 0 : index
    %21 = vector.load %arg6[%c0_10, %c0_11] : memref<40x256xf32, #tpu.memory_space<vmem>>, vector<40x128xf32>
    tpu.vector_store %arg6[%c0_10, %c0_11], %20 {strides = array<i32>} : memref<40x256xf32, #tpu.memory_space<vmem>>, vector<40x128xf32>,
    %c0_12 = arith.constant 0 : index
    %c128 = arith.constant 128 : index
    %22 = vector.load %arg6[%c0_12, %c128] : memref<40x256xf32, #tpu.memory_space<vmem>>, vector<40x128xf32>
    %23 = arith.addf %22, %18 : vector<40x128xf32>
    %c0_13 = arith.constant 0 : index
    %c128_14 = arith.constant 128 : index
    %24 = vector.load %arg6[%c0_13, %c128_14] : memref<40x256xf32, #tpu.memory_space<vmem>>, vector<40x128xf32>
    tpu.vector_store %arg6[%c0_13, %c128_14], %23 {strides = array<i32>} : memref<40x256xf32, #tpu.memory_space<vmem>>, vector<40x128xf32>,
    %25 = vector.extract_strided_slice %6 {offsets = [40, 0], sizes = [8, 256], strides = [1, 1]} : vector<96x256xf32> to vector<8x256xf32>
    %c0_15 = arith.constant 0 : index
    %c0_16 = arith.constant 0 : index
    %c0_17 = arith.constant 0 : index
    %26 = vector.load %arg4[%c0_15, %c0_16, %c0_17] : memref<1x8x256xf32, #tpu.memory_space<vmem>>, vector<1x8x256xf32>
    %27 = vector.shape_cast %26 : vector<1x8x256xf32> to vector<8x256xf32>
    %28 = vector.shape_cast %25 : vector<8x256xf32> to vector<1x8x256xf32>
    tpu.vector_store %arg4[%c0_15, %c0_16, %c0_17], %28 {strides = array<i32>} : memref<1x8x256xf32, #tpu.memory_space<vmem>>, vector<1x8x256xf32>,
    %29 = vector.extract_strided_slice %25 {offsets = [0, 0], sizes = [8, 128], strides = [1, 1]} : vector<8x256xf32> to vector<8x128xf32>
    %30 = vector.extract_strided_slice %25 {offsets = [0, 0], sizes = [8, 128], strides = [1, 1]} : vector<8x256xf32> to vector<8x128xf32>
    %31 = vector.extract_strided_slice %25 {offsets = [0, 0], sizes = [8, 128], strides = [1, 1]} : vector<8x256xf32> to vector<8x128xf32>
    %32 = arith.mulf %30, %31 : vector<8x128xf32>
    %33 = vector.extract_strided_slice %25 {offsets = [0, 128], sizes = [8, 128], strides = [1, 1]} : vector<8x256xf32> to vector<8x128xf32>
    %34 = arith.addf %29, %33 : vector<8x128xf32>
    %35 = arith.mulf %33, %33 : vector<8x128xf32>
    %36 = arith.addf %32, %35 : vector<8x128xf32>
    %c0_18 = arith.constant 0 : index
    %c0_19 = arith.constant 0 : index
    %37 = vector.load %arg7[%c0_18, %c0_19] : memref<8x256xf32, #tpu.memory_space<vmem>>, vector<8x128xf32>
    %38 = arith.addf %37, %34 : vector<8x128xf32>
    %c0_20 = arith.constant 0 : index
    %c0_21 = arith.constant 0 : index
    %39 = vector.load %arg7[%c0_20, %c0_21] : memref<8x256xf32, #tpu.memory_space<vmem>>, vector<8x128xf32>
    tpu.vector_store %arg7[%c0_20, %c0_21], %38 {strides = array<i32>} : memref<8x256xf32, #tpu.memory_space<vmem>>, vector<8x128xf32>,
    %c0_22 = arith.constant 0 : index
    %c128_23 = arith.constant 128 : index
    %40 = vector.load %arg7[%c0_22, %c128_23] : memref<8x256xf32, #tpu.memory_space<vmem>>, vector<8x128xf32>
    %41 = arith.addf %40, %36 : vector<8x128xf32>
    %c0_24 = arith.constant 0 : index
    %c128_25 = arith.constant 128 : index
    %42 = vector.load %arg7[%c0_24, %c128_25] : memref<8x256xf32, #tpu.memory_space<vmem>>, vector<8x128xf32>
    tpu.vector_store %arg7[%c0_24, %c128_25], %41 {strides = array<i32>} : memref<8x256xf32, #tpu.memory_space<vmem>>, vector<8x128xf32>,
    %43 = vector.extract_strided_slice %6 {offsets = [48, 0], sizes = [48, 256], strides = [1, 1]} : vector<96x256xf32> to vector<48x256xf32>
    %c0_26 = arith.constant 0 : index
    %c0_27 = arith.constant 0 : index
    %c0_28 = arith.constant 0 : index
    %44 = vector.load %arg5[%c0_26, %c0_27, %c0_28] : memref<1x48x256xf32, #tpu.memory_space<vmem>>, vector<1x48x256xf32>
    %45 = vector.shape_cast %44 : vector<1x48x256xf32> to vector<48x256xf32>
    %46 = vector.shape_cast %43 : vector<48x256xf32> to vector<1x48x256xf32>
    tpu.vector_store %arg5[%c0_26, %c0_27, %c0_28], %46 {strides = array<i32>} : memref<1x48x256xf32, #tpu.memory_space<vmem>>, vector<1x48x256xf32>,
    %47 = vector.extract_strided_slice %43 {offsets = [0, 0], sizes = [48, 128], strides = [1, 1]} : vector<48x256xf32> to vector<48x128xf32>
    %48 = vector.extract_strided_slice %43 {offsets = [0, 0], sizes = [48, 128], strides = [1, 1]} : vector<48x256xf32> to vector<48x128xf32>
    %49 = vector.extract_strided_slice %43 {offsets = [0, 0], sizes = [48, 128], strides = [1, 1]} : vector<48x256xf32> to vector<48x128xf32>
    %50 = arith.mulf %48, %49 : vector<48x128xf32>
    %51 = vector.extract_strided_slice %43 {offsets = [0, 128], sizes = [48, 128], strides = [1, 1]} : vector<48x256xf32> to vector<48x128xf32>
    %52 = arith.addf %47, %51 : vector<48x128xf32>
    %53 = arith.mulf %51, %51 : vector<48x128xf32>
    %54 = arith.addf %50, %53 : vector<48x128xf32>
    %c0_29 = arith.constant 0 : index
    %c0_30 = arith.constant 0 : index
    %55 = vector.load %arg8[%c0_29, %c0_30] : memref<48x256xf32, #tpu.memory_space<vmem>>, vector<48x128xf32>
    %56 = arith.addf %55, %52 : vector<48x128xf32>
    %c0_31 = arith.constant 0 : index
    %c0_32 = arith.constant 0 : index
    %57 = vector.load %arg8[%c0_31, %c0_32] : memref<48x256xf32, #tpu.memory_space<vmem>>, vector<48x128xf32>
    tpu.vector_store %arg8[%c0_31, %c0_32], %56 {strides = array<i32>} : memref<48x256xf32, #tpu.memory_space<vmem>>, vector<48x128xf32>,
    %c0_33 = arith.constant 0 : index
    %c128_34 = arith.constant 128 : index
    %58 = vector.load %arg8[%c0_33, %c128_34] : memref<48x256xf32, #tpu.memory_space<vmem>>, vector<48x128xf32>
    %59 = arith.addf %58, %54 : vector<48x128xf32>
    %c0_35 = arith.constant 0 : index
    %c128_36 = arith.constant 128 : index
    %60 = vector.load %arg8[%c0_35, %c128_36] : memref<48x256xf32, #tpu.memory_space<vmem>>, vector<48x128xf32>
    tpu.vector_store %arg8[%c0_35, %c128_36], %59 {strides = array<i32>} : memref<48x256xf32, #tpu.memory_space<vmem>>, vector<48x128xf32>,
    return
  }
  func.func @transform_0(%arg0: i32) -> (i32, i32, i32) {
    %c0_i32 = arith.constant 0 : i32
    %c0_i32_0 = arith.constant 0 : i32
    %c0_i32_1 = arith.constant 0 : i32
    return %arg0, %c0_i32, %c0_i32_0 : i32, i32, i32
  }
  func.func @transform_1(%arg0: i32) -> (i32, i32) {
    %c0_i32 = arith.constant 0 : i32
    %c0_i32_0 = arith.constant 0 : i32
    %c0_i32_1 = arith.constant 0 : i32
    return %c0_i32, %c0_i32_0 : i32, i32
  }
  func.func @transform_2(%arg0: i32) -> (i32, i32, i32) {
    %c0_i32 = arith.constant 0 : i32
    %c0_i32_0 = arith.constant 0 : i32
    %c0_i32_1 = arith.constant 0 : i32
    return %arg0, %c0_i32, %c0_i32_0 : i32, i32, i32
  }
  func.func @transform_3(%arg0: i32) -> (i32, i32, i32) {
    %c0_i32 = arith.constant 0 : i32
    %c0_i32_0 = arith.constant 0 : i32
    %c0_i32_1 = arith.constant 0 : i32
    return %arg0, %c0_i32, %c0_i32_0 : i32, i32, i32
  }
  func.func @transform_4(%arg0: i32) -> (i32, i32, i32) {
    %c0_i32 = arith.constant 0 : i32
    %c0_i32_0 = arith.constant 0 : i32
    %c0_i32_1 = arith.constant 0 : i32
    return %arg0, %c0_i32, %c0_i32_0 : i32, i32, i32
  }
  func.func @transform_5(%arg0: i32) -> (i32, i32) {
    %c0_i32 = arith.constant 0 : i32
    %c0_i32_0 = arith.constant 0 : i32
    %c0_i32_1 = arith.constant 0 : i32
    return %c0_i32, %c0_i32_0 : i32, i32
  }
  func.func @transform_6(%arg0: i32) -> (i32, i32) {
    %c0_i32 = arith.constant 0 : i32
    %c0_i32_0 = arith.constant 0 : i32
    %c0_i32_1 = arith.constant 0 : i32
    return %c0_i32, %c0_i32_0 : i32, i32
  }
  func.func @transform_7(%arg0: i32) -> (i32, i32) {
    %c0_i32 = arith.constant 0 : i32
    %c0_i32_0 = arith.constant 0 : i32
    %c0_i32_1 = arith.constant 0 : i32
    return %c0_i32, %c0_i32_0 : i32, i32
  }
}

module attributes {stable_mosaic.version = 11 : i64} {
  func.func @_branches_kernel(%arg0: i32, %arg1: memref<1x40x256xf32, #tpu.memory_space<vmem>>, %arg2: memref<40x1xf32, #tpu.memory_space<vmem>>, %arg3: memref<40x1xf32, #tpu.memory_space<vmem>>, %arg4: memref<4x8x24xf32, #tpu.memory_space<vmem>>, %arg5: memref<1x40x256xf32, #tpu.memory_space<vmem>>, %arg6: memref<40x256xf32, #tpu.memory_space<vmem>>, %arg7: memref<40x512xf32, #tpu.memory_space<vmem>>) attributes {dimension_semantics = [#tpu.dimension_semantics<arbitrary>], iteration_bounds = array<i64: 2>, scalar_prefetch = 0 : i64, scratch_operands = 1 : i64, tpu.core_type = #tpu.core_type<tc>, window_params = [{transform_indices = @transform_0, window_bounds = array<i64: 1, 40, 256>}, {pipeline_mode = #tpu.pipeline_mode<synchronous>, transform_indices = @transform_1, window_bounds = array<i64: 40, 1>}, {pipeline_mode = #tpu.pipeline_mode<synchronous>, transform_indices = @transform_2, window_bounds = array<i64: 40, 1>}, {pipeline_mode = #tpu.pipeline_mode<synchronous>, transform_indices = @transform_3, window_bounds = array<i64: 4, 8, 24>}, {transform_indices = @transform_4, window_bounds = array<i64: 1, 40, 256>}, {pipeline_mode = #tpu.pipeline_mode<synchronous>, transform_indices = @transform_5, window_bounds = array<i64: 40, 256>}]} {
    %c0_i32 = arith.constant 0 : i32
    %0 = arith.cmpi eq, %arg0, %c0_i32 : i32
    %1 = arith.extui %0 : i1 to i32
    %c0_i32_0 = arith.constant 0 : i32
    %2 = arith.cmpi ne, %1, %c0_i32_0 : i32
    scf.if %2 {
      %cst_94 = arith.constant 0.000000e+00 : f32
      %132 = vector.broadcast %cst_94 : f32 to vector<40x256xf32>
      %c0_95 = arith.constant 0 : index
      %c0_96 = arith.constant 0 : index
      %133 = vector.load %arg6[%c0_95, %c0_96] : memref<40x256xf32, #tpu.memory_space<vmem>>, vector<40x256xf32>
      tpu.vector_store %arg6[%c0_95, %c0_96], %132 {strides = array<i32>} : memref<40x256xf32, #tpu.memory_space<vmem>>, vector<40x256xf32>,
      %cst_97 = arith.constant 0.000000e+00 : f32
      %134 = vector.broadcast %cst_97 : f32 to vector<40x512xf32>
      %c0_98 = arith.constant 0 : index
      %c0_99 = arith.constant 0 : index
      %135 = vector.load %arg7[%c0_98, %c0_99] : memref<40x512xf32, #tpu.memory_space<vmem>>, vector<40x512xf32>
      tpu.vector_store %arg7[%c0_98, %c0_99], %134 {strides = array<i32>} : memref<40x512xf32, #tpu.memory_space<vmem>>, vector<40x512xf32>,
    } else {
    }
    %c0 = arith.constant 0 : index
    %c0_1 = arith.constant 0 : index
    %c0_2 = arith.constant 0 : index
    %3 = vector.load %arg1[%c0, %c0_1, %c0_2] : memref<1x40x256xf32, #tpu.memory_space<vmem>>, vector<1x40x256xf32>
    %4 = vector.shape_cast %3 : vector<1x40x256xf32> to vector<40x256xf32>
    %c0_3 = arith.constant 0 : index
    %c0_4 = arith.constant 0 : index
    %5 = vector.load %arg2[%c0_3, %c0_4] : memref<40x1xf32, #tpu.memory_space<vmem>>, vector<40x1xf32>
    %6 = vector.broadcast %5 : vector<40x1xf32> to vector<40x256xf32>
    %7 = arith.mulf %4, %6 : vector<40x256xf32>
    %c0_5 = arith.constant 0 : index
    %c0_6 = arith.constant 0 : index
    %8 = vector.load %arg3[%c0_5, %c0_6] : memref<40x1xf32, #tpu.memory_space<vmem>>, vector<40x1xf32>
    %9 = vector.broadcast %8 : vector<40x1xf32> to vector<40x256xf32>
    %10 = arith.addf %7, %9 : vector<40x256xf32>
    %cst = arith.constant 0.000000e+00 : f32
    %11 = vector.broadcast %cst : f32 to vector<40x256xf32>
    %12 = arith.maximumf %10, %11 : vector<40x256xf32>
    %c0_7 = arith.constant 0 : index
    %c128 = arith.constant 128 : index
    %13 = vector.load %arg7[%c0_7, %c128] : memref<40x512xf32, #tpu.memory_space<vmem>>, vector<40x256xf32>
    tpu.vector_store %arg7[%c0_7, %c128], %12 {strides = array<i32>} : memref<40x512xf32, #tpu.memory_space<vmem>>, vector<40x256xf32>,
    %c0_8 = arith.constant 0 : index
    %c112 = arith.constant 112 : index
    %14 = vector.load %arg7[%c0_8, %c112] : memref<40x512xf32, #tpu.memory_space<vmem>>, vector<8x256xf32>
    %c0_9 = arith.constant 0 : index
    %c128_10 = arith.constant 128 : index
    %15 = vector.load %arg7[%c0_9, %c128_10] : memref<40x512xf32, #tpu.memory_space<vmem>>, vector<8x256xf32>
    %c0_11 = arith.constant 0 : index
    %c144 = arith.constant 144 : index
    %16 = vector.load %arg7[%c0_11, %c144] : memref<40x512xf32, #tpu.memory_space<vmem>>, vector<8x256xf32>
    %17 = tpu.concatenate %14, %15, %16 in 0 : vector<8x256xf32>, vector<8x256xf32>, vector<8x256xf32> -> vector<24x256xf32>
    %c0_12 = arith.constant 0 : index
    %c0_13 = arith.constant 0 : index
    %c0_14 = arith.constant 0 : index
    %18 = vector.load %arg4[%c0_12, %c0_13, %c0_14] : memref<4x8x24xf32, #tpu.memory_space<vmem>>, vector<1x8x24xf32>
    %19 = vector.shape_cast %18 : vector<1x8x24xf32> to vector<8x24xf32>
    %cst_15 = arith.constant dense<0.000000e+00> : vector<8x256xf32>
    %20 = tpu.matmul %19, %17, %cst_15 {dimension_numbers = #tpu.dot_dimension_numbers<[1], [0], [0], [1], [0, 0, 1, 1], [], []>} : vector<8x24xf32>, vector<24x256xf32>, vector<8x256xf32> -> vector<8x256xf32>
    %c0_16 = arith.constant 0 : index
    %c0_17 = arith.constant 0 : index
    %c0_18 = arith.constant 0 : index
    %21 = vector.load %arg5[%c0_16, %c0_17, %c0_18] : memref<1x40x256xf32, #tpu.memory_space<vmem>>, vector<1x8x256xf32>
    %22 = vector.shape_cast %21 : vector<1x8x256xf32> to vector<8x256xf32>
    %23 = vector.shape_cast %20 : vector<8x256xf32> to vector<1x8x256xf32>
    tpu.vector_store %arg5[%c0_16, %c0_17, %c0_18], %23 {strides = array<i32>} : memref<1x40x256xf32, #tpu.memory_space<vmem>>, vector<1x8x256xf32>,
    %24 = vector.extract_strided_slice %20 {offsets = [0, 0], sizes = [8, 128], strides = [1, 1]} : vector<8x256xf32> to vector<8x128xf32>
    %25 = vector.extract_strided_slice %20 {offsets = [0, 0], sizes = [8, 128], strides = [1, 1]} : vector<8x256xf32> to vector<8x128xf32>
    %26 = vector.extract_strided_slice %20 {offsets = [0, 0], sizes = [8, 128], strides = [1, 1]} : vector<8x256xf32> to vector<8x128xf32>
    %27 = arith.mulf %25, %26 : vector<8x128xf32>
    %28 = vector.extract_strided_slice %20 {offsets = [0, 128], sizes = [8, 128], strides = [1, 1]} : vector<8x256xf32> to vector<8x128xf32>
    %29 = arith.addf %24, %28 : vector<8x128xf32>
    %30 = arith.mulf %28, %28 : vector<8x128xf32>
    %31 = arith.addf %27, %30 : vector<8x128xf32>
    %c0_19 = arith.constant 0 : index
    %c0_20 = arith.constant 0 : index
    %32 = vector.load %arg6[%c0_19, %c0_20] : memref<40x256xf32, #tpu.memory_space<vmem>>, vector<8x128xf32>
    %33 = arith.addf %32, %29 : vector<8x128xf32>
    %c0_21 = arith.constant 0 : index
    %c0_22 = arith.constant 0 : index
    %34 = vector.load %arg6[%c0_21, %c0_22] : memref<40x256xf32, #tpu.memory_space<vmem>>, vector<8x128xf32>
    tpu.vector_store %arg6[%c0_21, %c0_22], %33 {strides = array<i32>} : memref<40x256xf32, #tpu.memory_space<vmem>>, vector<8x128xf32>,
    %c0_23 = arith.constant 0 : index
    %c128_24 = arith.constant 128 : index
    %35 = vector.load %arg6[%c0_23, %c128_24] : memref<40x256xf32, #tpu.memory_space<vmem>>, vector<8x128xf32>
    %36 = arith.addf %35, %31 : vector<8x128xf32>
    %c0_25 = arith.constant 0 : index
    %c128_26 = arith.constant 128 : index
    %37 = vector.load %arg6[%c0_25, %c128_26] : memref<40x256xf32, #tpu.memory_space<vmem>>, vector<8x128xf32>
    tpu.vector_store %arg6[%c0_25, %c128_26], %36 {strides = array<i32>} : memref<40x256xf32, #tpu.memory_space<vmem>>, vector<8x128xf32>,
    %c8 = arith.constant 8 : index
    %c96 = arith.constant 96 : index
    %38 = vector.load %arg7[%c8, %c96] : memref<40x512xf32, #tpu.memory_space<vmem>>, vector<8x256xf32>
    %c8_27 = arith.constant 8 : index
    %c128_28 = arith.constant 128 : index
    %39 = vector.load %arg7[%c8_27, %c128_28] : memref<40x512xf32, #tpu.memory_space<vmem>>, vector<8x256xf32>
    %c8_29 = arith.constant 8 : index
    %c160 = arith.constant 160 : index
    %40 = vector.load %arg7[%c8_29, %c160] : memref<40x512xf32, #tpu.memory_space<vmem>>, vector<8x256xf32>
    %41 = tpu.concatenate %38, %39, %40 in 0 : vector<8x256xf32>, vector<8x256xf32>, vector<8x256xf32> -> vector<24x256xf32>
    %c1 = arith.constant 1 : index
    %c0_30 = arith.constant 0 : index
    %c0_31 = arith.constant 0 : index
    %42 = vector.load %arg4[%c1, %c0_30, %c0_31] : memref<4x8x24xf32, #tpu.memory_space<vmem>>, vector<1x8x24xf32>
    %43 = vector.shape_cast %42 : vector<1x8x24xf32> to vector<8x24xf32>
    %cst_32 = arith.constant dense<0.000000e+00> : vector<8x256xf32>
    %44 = tpu.matmul %43, %41, %cst_32 {dimension_numbers = #tpu.dot_dimension_numbers<[1], [0], [0], [1], [0, 0, 1, 1], [], []>} : vector<8x24xf32>, vector<24x256xf32>, vector<8x256xf32> -> vector<8x256xf32>
    %c0_33 = arith.constant 0 : index
    %c8_34 = arith.constant 8 : index
    %c0_35 = arith.constant 0 : index
    %45 = vector.load %arg5[%c0_33, %c8_34, %c0_35] : memref<1x40x256xf32, #tpu.memory_space<vmem>>, vector<1x8x256xf32>
    %46 = vector.shape_cast %45 : vector<1x8x256xf32> to vector<8x256xf32>
    %47 = vector.shape_cast %44 : vector<8x256xf32> to vector<1x8x256xf32>
    tpu.vector_store %arg5[%c0_33, %c8_34, %c0_35], %47 {strides = array<i32>} : memref<1x40x256xf32, #tpu.memory_space<vmem>>, vector<1x8x256xf32>,
    %48 = vector.extract_strided_slice %44 {offsets = [0, 0], sizes = [8, 128], strides = [1, 1]} : vector<8x256xf32> to vector<8x128xf32>
    %49 = vector.extract_strided_slice %44 {offsets = [0, 0], sizes = [8, 128], strides = [1, 1]} : vector<8x256xf32> to vector<8x128xf32>
    %50 = vector.extract_strided_slice %44 {offsets = [0, 0], sizes = [8, 128], strides = [1, 1]} : vector<8x256xf32> to vector<8x128xf32>
    %51 = arith.mulf %49, %50 : vector<8x128xf32>
    %52 = vector.extract_strided_slice %44 {offsets = [0, 128], sizes = [8, 128], strides = [1, 1]} : vector<8x256xf32> to vector<8x128xf32>
    %53 = arith.addf %48, %52 : vector<8x128xf32>
    %54 = arith.mulf %52, %52 : vector<8x128xf32>
    %55 = arith.addf %51, %54 : vector<8x128xf32>
    %c8_36 = arith.constant 8 : index
    %c0_37 = arith.constant 0 : index
    %56 = vector.load %arg6[%c8_36, %c0_37] : memref<40x256xf32, #tpu.memory_space<vmem>>, vector<8x128xf32>
    %57 = arith.addf %56, %53 : vector<8x128xf32>
    %c8_38 = arith.constant 8 : index
    %c0_39 = arith.constant 0 : index
    %58 = vector.load %arg6[%c8_38, %c0_39] : memref<40x256xf32, #tpu.memory_space<vmem>>, vector<8x128xf32>
    tpu.vector_store %arg6[%c8_38, %c0_39], %57 {strides = array<i32>} : memref<40x256xf32, #tpu.memory_space<vmem>>, vector<8x128xf32>,
    %c8_40 = arith.constant 8 : index
    %c128_41 = arith.constant 128 : index
    %59 = vector.load %arg6[%c8_40, %c128_41] : memref<40x256xf32, #tpu.memory_space<vmem>>, vector<8x128xf32>
    %60 = arith.addf %59, %55 : vector<8x128xf32>
    %c8_42 = arith.constant 8 : index
    %c128_43 = arith.constant 128 : index
    %61 = vector.load %arg6[%c8_42, %c128_43] : memref<40x256xf32, #tpu.memory_space<vmem>>, vector<8x128xf32>
    tpu.vector_store %arg6[%c8_42, %c128_43], %60 {strides = array<i32>} : memref<40x256xf32, #tpu.memory_space<vmem>>, vector<8x128xf32>,
    %c16 = arith.constant 16 : index
    %c80 = arith.constant 80 : index
    %62 = vector.load %arg7[%c16, %c80] : memref<40x512xf32, #tpu.memory_space<vmem>>, vector<8x256xf32>
    %c16_44 = arith.constant 16 : index
    %c128_45 = arith.constant 128 : index
    %63 = vector.load %arg7[%c16_44, %c128_45] : memref<40x512xf32, #tpu.memory_space<vmem>>, vector<8x256xf32>
    %c16_46 = arith.constant 16 : index
    %c176 = arith.constant 176 : index
    %64 = vector.load %arg7[%c16_46, %c176] : memref<40x512xf32, #tpu.memory_space<vmem>>, vector<8x256xf32>
    %65 = tpu.concatenate %62, %63, %64 in 0 : vector<8x256xf32>, vector<8x256xf32>, vector<8x256xf32> -> vector<24x256xf32>
    %c2 = arith.constant 2 : index
    %c0_47 = arith.constant 0 : index
    %c0_48 = arith.constant 0 : index
    %66 = vector.load %arg4[%c2, %c0_47, %c0_48] : memref<4x8x24xf32, #tpu.memory_space<vmem>>, vector<1x8x24xf32>
    %67 = vector.shape_cast %66 : vector<1x8x24xf32> to vector<8x24xf32>
    %cst_49 = arith.constant dense<0.000000e+00> : vector<8x256xf32>
    %68 = tpu.matmul %67, %65, %cst_49 {dimension_numbers = #tpu.dot_dimension_numbers<[1], [0], [0], [1], [0, 0, 1, 1], [], []>} : vector<8x24xf32>, vector<24x256xf32>, vector<8x256xf32> -> vector<8x256xf32>
    %c0_50 = arith.constant 0 : index
    %c16_51 = arith.constant 16 : index
    %c0_52 = arith.constant 0 : index
    %69 = vector.load %arg5[%c0_50, %c16_51, %c0_52] : memref<1x40x256xf32, #tpu.memory_space<vmem>>, vector<1x8x256xf32>
    %70 = vector.shape_cast %69 : vector<1x8x256xf32> to vector<8x256xf32>
    %71 = vector.shape_cast %68 : vector<8x256xf32> to vector<1x8x256xf32>
    tpu.vector_store %arg5[%c0_50, %c16_51, %c0_52], %71 {strides = array<i32>} : memref<1x40x256xf32, #tpu.memory_space<vmem>>, vector<1x8x256xf32>,
    %72 = vector.extract_strided_slice %68 {offsets = [0, 0], sizes = [8, 128], strides = [1, 1]} : vector<8x256xf32> to vector<8x128xf32>
    %73 = vector.extract_strided_slice %68 {offsets = [0, 0], sizes = [8, 128], strides = [1, 1]} : vector<8x256xf32> to vector<8x128xf32>
    %74 = vector.extract_strided_slice %68 {offsets = [0, 0], sizes = [8, 128], strides = [1, 1]} : vector<8x256xf32> to vector<8x128xf32>
    %75 = arith.mulf %73, %74 : vector<8x128xf32>
    %76 = vector.extract_strided_slice %68 {offsets = [0, 128], sizes = [8, 128], strides = [1, 1]} : vector<8x256xf32> to vector<8x128xf32>
    %77 = arith.addf %72, %76 : vector<8x128xf32>
    %78 = arith.mulf %76, %76 : vector<8x128xf32>
    %79 = arith.addf %75, %78 : vector<8x128xf32>
    %c16_53 = arith.constant 16 : index
    %c0_54 = arith.constant 0 : index
    %80 = vector.load %arg6[%c16_53, %c0_54] : memref<40x256xf32, #tpu.memory_space<vmem>>, vector<8x128xf32>
    %81 = arith.addf %80, %77 : vector<8x128xf32>
    %c16_55 = arith.constant 16 : index
    %c0_56 = arith.constant 0 : index
    %82 = vector.load %arg6[%c16_55, %c0_56] : memref<40x256xf32, #tpu.memory_space<vmem>>, vector<8x128xf32>
    tpu.vector_store %arg6[%c16_55, %c0_56], %81 {strides = array<i32>} : memref<40x256xf32, #tpu.memory_space<vmem>>, vector<8x128xf32>,
    %c16_57 = arith.constant 16 : index
    %c128_58 = arith.constant 128 : index
    %83 = vector.load %arg6[%c16_57, %c128_58] : memref<40x256xf32, #tpu.memory_space<vmem>>, vector<8x128xf32>
    %84 = arith.addf %83, %79 : vector<8x128xf32>
    %c16_59 = arith.constant 16 : index
    %c128_60 = arith.constant 128 : index
    %85 = vector.load %arg6[%c16_59, %c128_60] : memref<40x256xf32, #tpu.memory_space<vmem>>, vector<8x128xf32>
    tpu.vector_store %arg6[%c16_59, %c128_60], %84 {strides = array<i32>} : memref<40x256xf32, #tpu.memory_space<vmem>>, vector<8x128xf32>,
    %c24 = arith.constant 24 : index
    %c64 = arith.constant 64 : index
    %86 = vector.load %arg7[%c24, %c64] : memref<40x512xf32, #tpu.memory_space<vmem>>, vector<8x256xf32>
    %c24_61 = arith.constant 24 : index
    %c128_62 = arith.constant 128 : index
    %87 = vector.load %arg7[%c24_61, %c128_62] : memref<40x512xf32, #tpu.memory_space<vmem>>, vector<8x256xf32>
    %c24_63 = arith.constant 24 : index
    %c192 = arith.constant 192 : index
    %88 = vector.load %arg7[%c24_63, %c192] : memref<40x512xf32, #tpu.memory_space<vmem>>, vector<8x256xf32>
    %89 = tpu.concatenate %86, %87, %88 in 0 : vector<8x256xf32>, vector<8x256xf32>, vector<8x256xf32> -> vector<24x256xf32>
    %c3 = arith.constant 3 : index
    %c0_64 = arith.constant 0 : index
    %c0_65 = arith.constant 0 : index
    %90 = vector.load %arg4[%c3, %c0_64, %c0_65] : memref<4x8x24xf32, #tpu.memory_space<vmem>>, vector<1x8x24xf32>
    %91 = vector.shape_cast %90 : vector<1x8x24xf32> to vector<8x24xf32>
    %cst_66 = arith.constant dense<0.000000e+00> : vector<8x256xf32>
    %92 = tpu.matmul %91, %89, %cst_66 {dimension_numbers = #tpu.dot_dimension_numbers<[1], [0], [0], [1], [0, 0, 1, 1], [], []>} : vector<8x24xf32>, vector<24x256xf32>, vector<8x256xf32> -> vector<8x256xf32>
    %c0_67 = arith.constant 0 : index
    %c24_68 = arith.constant 24 : index
    %c0_69 = arith.constant 0 : index
    %93 = vector.load %arg5[%c0_67, %c24_68, %c0_69] : memref<1x40x256xf32, #tpu.memory_space<vmem>>, vector<1x8x256xf32>
    %94 = vector.shape_cast %93 : vector<1x8x256xf32> to vector<8x256xf32>
    %95 = vector.shape_cast %92 : vector<8x256xf32> to vector<1x8x256xf32>
    tpu.vector_store %arg5[%c0_67, %c24_68, %c0_69], %95 {strides = array<i32>} : memref<1x40x256xf32, #tpu.memory_space<vmem>>, vector<1x8x256xf32>,
    %96 = vector.extract_strided_slice %92 {offsets = [0, 0], sizes = [8, 128], strides = [1, 1]} : vector<8x256xf32> to vector<8x128xf32>
    %97 = vector.extract_strided_slice %92 {offsets = [0, 0], sizes = [8, 128], strides = [1, 1]} : vector<8x256xf32> to vector<8x128xf32>
    %98 = vector.extract_strided_slice %92 {offsets = [0, 0], sizes = [8, 128], strides = [1, 1]} : vector<8x256xf32> to vector<8x128xf32>
    %99 = arith.mulf %97, %98 : vector<8x128xf32>
    %100 = vector.extract_strided_slice %92 {offsets = [0, 128], sizes = [8, 128], strides = [1, 1]} : vector<8x256xf32> to vector<8x128xf32>
    %101 = arith.addf %96, %100 : vector<8x128xf32>
    %102 = arith.mulf %100, %100 : vector<8x128xf32>
    %103 = arith.addf %99, %102 : vector<8x128xf32>
    %c24_70 = arith.constant 24 : index
    %c0_71 = arith.constant 0 : index
    %104 = vector.load %arg6[%c24_70, %c0_71] : memref<40x256xf32, #tpu.memory_space<vmem>>, vector<8x128xf32>
    %105 = arith.addf %104, %101 : vector<8x128xf32>
    %c24_72 = arith.constant 24 : index
    %c0_73 = arith.constant 0 : index
    %106 = vector.load %arg6[%c24_72, %c0_73] : memref<40x256xf32, #tpu.memory_space<vmem>>, vector<8x128xf32>
    tpu.vector_store %arg6[%c24_72, %c0_73], %105 {strides = array<i32>} : memref<40x256xf32, #tpu.memory_space<vmem>>, vector<8x128xf32>,
    %c24_74 = arith.constant 24 : index
    %c128_75 = arith.constant 128 : index
    %107 = vector.load %arg6[%c24_74, %c128_75] : memref<40x256xf32, #tpu.memory_space<vmem>>, vector<8x128xf32>
    %108 = arith.addf %107, %103 : vector<8x128xf32>
    %c24_76 = arith.constant 24 : index
    %c128_77 = arith.constant 128 : index
    %109 = vector.load %arg6[%c24_76, %c128_77] : memref<40x256xf32, #tpu.memory_space<vmem>>, vector<8x128xf32>
    tpu.vector_store %arg6[%c24_76, %c128_77], %108 {strides = array<i32>} : memref<40x256xf32, #tpu.memory_space<vmem>>, vector<8x128xf32>,
    %c32 = arith.constant 32 : index
    %c112_78 = arith.constant 112 : index
    %110 = vector.load %arg7[%c32, %c112_78] : memref<40x512xf32, #tpu.memory_space<vmem>>, vector<8x256xf32>
    %c32_79 = arith.constant 32 : index
    %c128_80 = arith.constant 128 : index
    %111 = vector.load %arg7[%c32_79, %c128_80] : memref<40x512xf32, #tpu.memory_space<vmem>>, vector<8x256xf32>
    %112 = arith.maximumf %110, %111 : vector<8x256xf32>
    %c32_81 = arith.constant 32 : index
    %c144_82 = arith.constant 144 : index
    %113 = vector.load %arg7[%c32_81, %c144_82] : memref<40x512xf32, #tpu.memory_space<vmem>>, vector<8x256xf32>
    %114 = arith.maximumf %112, %113 : vector<8x256xf32>
    %c0_83 = arith.constant 0 : index
    %c32_84 = arith.constant 32 : index
    %c0_85 = arith.constant 0 : index
    %115 = vector.load %arg5[%c0_83, %c32_84, %c0_85] : memref<1x40x256xf32, #tpu.memory_space<vmem>>, vector<1x8x256xf32>
    %116 = vector.shape_cast %115 : vector<1x8x256xf32> to vector<8x256xf32>
    %117 = vector.shape_cast %114 : vector<8x256xf32> to vector<1x8x256xf32>
    tpu.vector_store %arg5[%c0_83, %c32_84, %c0_85], %117 {strides = array<i32>} : memref<1x40x256xf32, #tpu.memory_space<vmem>>, vector<1x8x256xf32>,
    %118 = vector.extract_strided_slice %114 {offsets = [0, 0], sizes = [8, 128], strides = [1, 1]} : vector<8x256xf32> to vector<8x128xf32>
    %119 = vector.extract_strided_slice %114 {offsets = [0, 0], sizes = [8, 128], strides = [1, 1]} : vector<8x256xf32> to vector<8x128xf32>
    %120 = vector.extract_strided_slice %114 {offsets = [0, 0], sizes = [8, 128], strides = [1, 1]} : vector<8x256xf32> to vector<8x128xf32>
    %121 = arith.mulf %119, %120 : vector<8x128xf32>
    %122 = vector.extract_strided_slice %114 {offsets = [0, 128], sizes = [8, 128], strides = [1, 1]} : vector<8x256xf32> to vector<8x128xf32>
    %123 = arith.addf %118, %122 : vector<8x128xf32>
    %124 = arith.mulf %122, %122 : vector<8x128xf32>
    %125 = arith.addf %121, %124 : vector<8x128xf32>
    %c32_86 = arith.constant 32 : index
    %c0_87 = arith.constant 0 : index
    %126 = vector.load %arg6[%c32_86, %c0_87] : memref<40x256xf32, #tpu.memory_space<vmem>>, vector<8x128xf32>
    %127 = arith.addf %126, %123 : vector<8x128xf32>
    %c32_88 = arith.constant 32 : index
    %c0_89 = arith.constant 0 : index
    %128 = vector.load %arg6[%c32_88, %c0_89] : memref<40x256xf32, #tpu.memory_space<vmem>>, vector<8x128xf32>
    tpu.vector_store %arg6[%c32_88, %c0_89], %127 {strides = array<i32>} : memref<40x256xf32, #tpu.memory_space<vmem>>, vector<8x128xf32>,
    %c32_90 = arith.constant 32 : index
    %c128_91 = arith.constant 128 : index
    %129 = vector.load %arg6[%c32_90, %c128_91] : memref<40x256xf32, #tpu.memory_space<vmem>>, vector<8x128xf32>
    %130 = arith.addf %129, %125 : vector<8x128xf32>
    %c32_92 = arith.constant 32 : index
    %c128_93 = arith.constant 128 : index
    %131 = vector.load %arg6[%c32_92, %c128_93] : memref<40x256xf32, #tpu.memory_space<vmem>>, vector<8x128xf32>
    tpu.vector_store %arg6[%c32_92, %c128_93], %130 {strides = array<i32>} : memref<40x256xf32, #tpu.memory_space<vmem>>, vector<8x128xf32>,
    return
  }
  func.func @transform_0(%arg0: i32) -> (i32, i32, i32) {
    %c0_i32 = arith.constant 0 : i32
    %c0_i32_0 = arith.constant 0 : i32
    %c0_i32_1 = arith.constant 0 : i32
    return %arg0, %c0_i32, %c0_i32_0 : i32, i32, i32
  }
  func.func @transform_1(%arg0: i32) -> (i32, i32) {
    %c0_i32 = arith.constant 0 : i32
    %c0_i32_0 = arith.constant 0 : i32
    %c0_i32_1 = arith.constant 0 : i32
    return %c0_i32, %c0_i32_0 : i32, i32
  }
  func.func @transform_2(%arg0: i32) -> (i32, i32) {
    %c0_i32 = arith.constant 0 : i32
    %c0_i32_0 = arith.constant 0 : i32
    %c0_i32_1 = arith.constant 0 : i32
    return %c0_i32, %c0_i32_0 : i32, i32
  }
  func.func @transform_3(%arg0: i32) -> (i32, i32, i32) {
    %c0_i32 = arith.constant 0 : i32
    %c0_i32_0 = arith.constant 0 : i32
    %c0_i32_1 = arith.constant 0 : i32
    %c0_i32_2 = arith.constant 0 : i32
    return %c0_i32, %c0_i32_0, %c0_i32_1 : i32, i32, i32
  }
  func.func @transform_4(%arg0: i32) -> (i32, i32, i32) {
    %c0_i32 = arith.constant 0 : i32
    %c0_i32_0 = arith.constant 0 : i32
    %c0_i32_1 = arith.constant 0 : i32
    return %arg0, %c0_i32, %c0_i32_0 : i32, i32, i32
  }
  func.func @transform_5(%arg0: i32) -> (i32, i32) {
    %c0_i32 = arith.constant 0 : i32
    %c0_i32_0 = arith.constant 0 : i32
    %c0_i32_1 = arith.constant 0 : i32
    return %c0_i32, %c0_i32_0 : i32, i32
  }
}

module attributes {stable_mosaic.version = 11 : i64} {
  func.func @_output_kernel(%arg0: i32, %arg1: memref<1x40x256xf32, #tpu.memory_space<vmem>>, %arg2: memref<40x1xf32, #tpu.memory_space<vmem>>, %arg3: memref<40x1xf32, #tpu.memory_space<vmem>>, %arg4: memref<1x8x256xf32, #tpu.memory_space<vmem>>, %arg5: memref<8x1xf32, #tpu.memory_space<vmem>>, %arg6: memref<8x1xf32, #tpu.memory_space<vmem>>, %arg7: memref<1x48x256xf32, #tpu.memory_space<vmem>>, %arg8: memref<48x1xf32, #tpu.memory_space<vmem>>, %arg9: memref<48x1xf32, #tpu.memory_space<vmem>>, %arg10: memref<1x48x256xf32, #tpu.memory_space<vmem>>) attributes {dimension_semantics = [#tpu.dimension_semantics<parallel>], iteration_bounds = array<i64: 2>, scalar_prefetch = 0 : i64, scratch_operands = 0 : i64, tpu.core_type = #tpu.core_type<tc>, window_params = [{transform_indices = @transform_0, window_bounds = array<i64: 1, 40, 256>}, {pipeline_mode = #tpu.pipeline_mode<synchronous>, transform_indices = @transform_1, window_bounds = array<i64: 40, 1>}, {pipeline_mode = #tpu.pipeline_mode<synchronous>, transform_indices = @transform_2, window_bounds = array<i64: 40, 1>}, {transform_indices = @transform_3, window_bounds = array<i64: 1, 8, 256>}, {pipeline_mode = #tpu.pipeline_mode<synchronous>, transform_indices = @transform_4, window_bounds = array<i64: 8, 1>}, {pipeline_mode = #tpu.pipeline_mode<synchronous>, transform_indices = @transform_5, window_bounds = array<i64: 8, 1>}, {transform_indices = @transform_6, window_bounds = array<i64: 1, 48, 256>}, {pipeline_mode = #tpu.pipeline_mode<synchronous>, transform_indices = @transform_7, window_bounds = array<i64: 48, 1>}, {pipeline_mode = #tpu.pipeline_mode<synchronous>, transform_indices = @transform_8, window_bounds = array<i64: 48, 1>}, {transform_indices = @transform_9, window_bounds = array<i64: 1, 48, 256>}]} {
    %c0 = arith.constant 0 : index
    %c0_0 = arith.constant 0 : index
    %c0_1 = arith.constant 0 : index
    %0 = vector.load %arg1[%c0, %c0_0, %c0_1] : memref<1x40x256xf32, #tpu.memory_space<vmem>>, vector<1x40x256xf32>
    %1 = vector.shape_cast %0 : vector<1x40x256xf32> to vector<40x256xf32>
    %c0_2 = arith.constant 0 : index
    %c0_3 = arith.constant 0 : index
    %2 = vector.load %arg2[%c0_2, %c0_3] : memref<40x1xf32, #tpu.memory_space<vmem>>, vector<40x1xf32>
    %3 = vector.broadcast %2 : vector<40x1xf32> to vector<40x256xf32>
    %4 = arith.mulf %1, %3 : vector<40x256xf32>
    %c0_4 = arith.constant 0 : index
    %c0_5 = arith.constant 0 : index
    %5 = vector.load %arg3[%c0_4, %c0_5] : memref<40x1xf32, #tpu.memory_space<vmem>>, vector<40x1xf32>
    %6 = vector.broadcast %5 : vector<40x1xf32> to vector<40x256xf32>
    %7 = arith.addf %4, %6 : vector<40x256xf32>
    %c0_6 = arith.constant 0 : index
    %c0_7 = arith.constant 0 : index
    %c0_8 = arith.constant 0 : index
    %8 = vector.load %arg4[%c0_6, %c0_7, %c0_8] : memref<1x8x256xf32, #tpu.memory_space<vmem>>, vector<1x8x256xf32>
    %9 = vector.shape_cast %8 : vector<1x8x256xf32> to vector<8x256xf32>
    %c0_9 = arith.constant 0 : index
    %c0_10 = arith.constant 0 : index
    %10 = vector.load %arg5[%c0_9, %c0_10] : memref<8x1xf32, #tpu.memory_space<vmem>>, vector<8x1xf32>
    %11 = vector.broadcast %10 : vector<8x1xf32> to vector<8x256xf32>
    %12 = arith.mulf %9, %11 : vector<8x256xf32>
    %c0_11 = arith.constant 0 : index
    %c0_12 = arith.constant 0 : index
    %13 = vector.load %arg6[%c0_11, %c0_12] : memref<8x1xf32, #tpu.memory_space<vmem>>, vector<8x1xf32>
    %14 = vector.broadcast %13 : vector<8x1xf32> to vector<8x256xf32>
    %15 = arith.addf %12, %14 : vector<8x256xf32>
    %c0_13 = arith.constant 0 : index
    %c0_14 = arith.constant 0 : index
    %c0_15 = arith.constant 0 : index
    %16 = vector.load %arg7[%c0_13, %c0_14, %c0_15] : memref<1x48x256xf32, #tpu.memory_space<vmem>>, vector<1x48x256xf32>
    %17 = vector.shape_cast %16 : vector<1x48x256xf32> to vector<48x256xf32>
    %c0_16 = arith.constant 0 : index
    %c0_17 = arith.constant 0 : index
    %18 = vector.load %arg8[%c0_16, %c0_17] : memref<48x1xf32, #tpu.memory_space<vmem>>, vector<48x1xf32>
    %19 = vector.broadcast %18 : vector<48x1xf32> to vector<48x256xf32>
    %20 = arith.mulf %17, %19 : vector<48x256xf32>
    %c0_18 = arith.constant 0 : index
    %c0_19 = arith.constant 0 : index
    %21 = vector.load %arg9[%c0_18, %c0_19] : memref<48x1xf32, #tpu.memory_space<vmem>>, vector<48x1xf32>
    %22 = vector.broadcast %21 : vector<48x1xf32> to vector<48x256xf32>
    %23 = arith.addf %20, %22 : vector<48x256xf32>
    %24 = vector.extract_strided_slice %23 {offsets = [0, 0], sizes = [40, 256], strides = [1, 1]} : vector<48x256xf32> to vector<40x256xf32>
    %25 = arith.addf %7, %24 : vector<40x256xf32>
    %26 = vector.extract_strided_slice %23 {offsets = [40, 0], sizes = [8, 256], strides = [1, 1]} : vector<48x256xf32> to vector<8x256xf32>
    %27 = arith.addf %15, %26 : vector<8x256xf32>
    %c0_20 = arith.constant 0 : index
    %c0_21 = arith.constant 0 : index
    %c0_22 = arith.constant 0 : index
    %28 = vector.load %arg10[%c0_20, %c0_21, %c0_22] : memref<1x48x256xf32, #tpu.memory_space<vmem>>, vector<1x40x256xf32>
    %29 = vector.shape_cast %28 : vector<1x40x256xf32> to vector<40x256xf32>
    %30 = vector.shape_cast %25 : vector<40x256xf32> to vector<1x40x256xf32>
    tpu.vector_store %arg10[%c0_20, %c0_21, %c0_22], %30 {strides = array<i32>} : memref<1x48x256xf32, #tpu.memory_space<vmem>>, vector<1x40x256xf32>,
    %c0_23 = arith.constant 0 : index
    %c40 = arith.constant 40 : index
    %c0_24 = arith.constant 0 : index
    %31 = vector.load %arg10[%c0_23, %c40, %c0_24] : memref<1x48x256xf32, #tpu.memory_space<vmem>>, vector<1x8x256xf32>
    %32 = vector.shape_cast %31 : vector<1x8x256xf32> to vector<8x256xf32>
    %33 = vector.shape_cast %27 : vector<8x256xf32> to vector<1x8x256xf32>
    tpu.vector_store %arg10[%c0_23, %c40, %c0_24], %33 {strides = array<i32>} : memref<1x48x256xf32, #tpu.memory_space<vmem>>, vector<1x8x256xf32>,
    return
  }
  func.func @transform_0(%arg0: i32) -> (i32, i32, i32) {
    %c0_i32 = arith.constant 0 : i32
    %c0_i32_0 = arith.constant 0 : i32
    %c0_i32_1 = arith.constant 0 : i32
    return %arg0, %c0_i32, %c0_i32_0 : i32, i32, i32
  }
  func.func @transform_1(%arg0: i32) -> (i32, i32) {
    %c0_i32 = arith.constant 0 : i32
    %c0_i32_0 = arith.constant 0 : i32
    %c0_i32_1 = arith.constant 0 : i32
    return %c0_i32, %c0_i32_0 : i32, i32
  }
  func.func @transform_2(%arg0: i32) -> (i32, i32) {
    %c0_i32 = arith.constant 0 : i32
    %c0_i32_0 = arith.constant 0 : i32
    %c0_i32_1 = arith.constant 0 : i32
    return %c0_i32, %c0_i32_0 : i32, i32
  }
  func.func @transform_3(%arg0: i32) -> (i32, i32, i32) {
    %c0_i32 = arith.constant 0 : i32
    %c0_i32_0 = arith.constant 0 : i32
    %c0_i32_1 = arith.constant 0 : i32
    return %arg0, %c0_i32, %c0_i32_0 : i32, i32, i32
  }
  func.func @transform_4(%arg0: i32) -> (i32, i32) {
    %c0_i32 = arith.constant 0 : i32
    %c0_i32_0 = arith.constant 0 : i32
    %c0_i32_1 = arith.constant 0 : i32
    return %c0_i32, %c0_i32_0 : i32, i32
  }
  func.func @transform_5(%arg0: i32) -> (i32, i32) {
    %c0_i32 = arith.constant 0 : i32
    %c0_i32_0 = arith.constant 0 : i32
    %c0_i32_1 = arith.constant 0 : i32
    return %c0_i32, %c0_i32_0 : i32, i32
  }
  func.func @transform_6(%arg0: i32) -> (i32, i32, i32) {
    %c0_i32 = arith.constant 0 : i32
    %c0_i32_0 = arith.constant 0 : i32
    %c0_i32_1 = arith.constant 0 : i32
    return %arg0, %c0_i32, %c0_i32_0 : i32, i32, i32
  }
  func.func @transform_7(%arg0: i32) -> (i32, i32) {
    %c0_i32 = arith.constant 0 : i32
    %c0_i32_0 = arith.constant 0 : i32
    %c0_i32_1 = arith.constant 0 : i32
    return %c0_i32, %c0_i32_0 : i32, i32
  }
  func.func @transform_8(%arg0: i32) -> (i32, i32) {
    %c0_i32 = arith.constant 0 : i32
    %c0_i32_0 = arith.constant 0 : i32
    %c0_i32_1 = arith.constant 0 : i32
    return %c0_i32, %c0_i32_0 : i32, i32
  }
  func.func @transform_9(%arg0: i32) -> (i32, i32, i32) {
    %c0_i32 = arith.constant 0 : i32
    %c0_i32_0 = arith.constant 0 : i32
    %c0_i32_1 = arith.constant 0 : i32
    return %arg0, %c0_i32, %c0_i32_0 : i32, i32, i32
  }
}

</mosaic_0001>

<llo_original>
// kernel: multiscale_tcn_forward.5
$region0: #{multiscale_tcn_forward.5}
  #allocation0 [shape = 'u32[]', space=smem, size = 0x4, offset = 0x4, fixed_abs, tag = 'smem constant byte address 0x4 - core index']
  #allocation1 [shape = 'u32[144,128]{1,0:T(1,128)}', space=vmem, size = 0x12000, scoped, tag = 'internal scratch']
  %s0 = inlined_call_operand.hbm [shape: f32[2,40,256], index: 0, kind: input, shape index: {}]
  %s1 = inlined_call_operand.hbm [shape: f32[40,1], index: 1, kind: input, shape index: {}]
  %s2 = inlined_call_operand.hbm [shape: f32[40,1], index: 2, kind: input, shape index: {}]
  %s3 = inlined_call_operand.hbm [shape: f32[2,8,256], index: 3, kind: input, shape index: {}]
  %s4 = inlined_call_operand.hbm [shape: f32[8,1], index: 4, kind: input, shape index: {}]
  %s5 = inlined_call_operand.hbm [shape: f32[8,1], index: 5, kind: input, shape index: {}]
  %s6 = inlined_call_operand.hbm [shape: f32[2,48,256], index: 6, kind: input, shape index: {}]
  %s7 = inlined_call_operand.hbm [shape: f32[48,1], index: 7, kind: input, shape index: {}]
  %s8 = inlined_call_operand.hbm [shape: f32[48,1], index: 8, kind: input, shape index: {}]
  %s9 = inlined_call_operand.hbm [shape: f32[2,48,256], index: 9, kind: output, shape index: {}]
  %s10 = sld [smem:[#allocation0]]
  $region105: #{multiscale_tcn_forward.5} parent=0
    _
  %s12 = ssub.s32 1, %s10
  %s13 = scalar_select 0, %s12, %s10
  $region1: #{multiscale_tcn_forward.5} parent=0
    #allocation2 [shape = 'u8[81920]{0}', space=vmem, size = 0x14000, scoped, tag = 'input window, operand 0']
    #allocation3 [shape = 's32[2]{0}', space=sflag, size = 0x8, scoped, tag = 'scoped memory for multiscale_tcn_forward.5']
    #allocation4 [shape = 's32[2]{0}', space=sflag, size = 0x8, scoped, tag = 'scoped memory for multiscale_tcn_forward.5']
    #allocation5 [shape = 'u8[20480]{0}', space=vmem, size = 0x5000, scoped, tag = 'input window, operand 1, single buffered']
    #allocation6 [shape = 's32[1]{0}', space=sflag, size = 0x4, scoped, tag = 'scoped memory for multiscale_tcn_forward.5']
    #allocation7 [shape = 'u8[20480]{0}', space=vmem, size = 0x5000, scoped, tag = 'input window, operand 2, single buffered']
    #allocation8 [shape = 'u8[16384]{0}', space=vmem, size = 0x4000, scoped, tag = 'input window, operand 3']
    #allocation9 [shape = 's32[2]{0}', space=sflag, size = 0x8, scoped, tag = 'scoped memory for multiscale_tcn_forward.5']
    #allocation10 [shape = 'u8[4096]{0}', space=vmem, size = 0x1000, scoped, tag = 'input window, operand 4, single buffered']
    #allocation11 [shape = 'u8[4096]{0}', space=vmem, size = 0x1000, scoped, tag = 'input window, operand 5, single buffered']
    #allocation12 [shape = 's32[1]{0}', space=sflag, size = 0x4, scoped, tag = 'scoped memory for multiscale_tcn_forward.5']
    #allocation13 [shape = 'u8[98304]{0}', space=vmem, size = 0x18000, scoped, tag = 'input window, operand 6']
    #allocation14 [shape = 'u8[24576]{0}', space=vmem, size = 0x6000, scoped, tag = 'input window, operand 7, single buffered']
    #allocation15 [shape = 'u8[24576]{0}', space=vmem, size = 0x6000, scoped, tag = 'input window, operand 8, single buffered']
    #allocation16 [shape = 'u8[98304]{0}', space=vmem, size = 0x18000, scoped, tag = 'output window, operand 0']
    %14 = vsyncpa [#allocation3], 0
    %s15 = scalar_lea.sflag [#allocation3], 1
    %16 = vsyncpa %s15, 0
    %17 = vsyncpa [#allocation6], 0
    %18 = vsyncpa [#allocation9], 0
    %s19 = scalar_lea.sflag [#allocation9], 1
    %20 = vsyncpa %s19, 0
    %21 = vsyncpa [#allocation12], 0
    %22 = vsyncpa [#allocation4], 0
    %s23 = scalar_lea.sflag [#allocation4], 1
    %24 = vsyncpa %s23, 0
    loop: start=0, step=1, limit=4
    $region2: #{multiscale_tcn_forward.5} parent=1 // loop_pre_header
      _
    $region3: #{multiscale_tcn_forward.5} parent=1 // loop_header
      %s26 = sphi 0, %s30
      %p27 = scmp.ge.s32.totalorder %s26, 4
      %s36 = sphi 0, %s38
      %s39 = sphi 0, %s36
      %s40 = sphi 0, %s39
      %s56 = sphi 0, %s40
      %s60 = sphi 0, %s60
      %s62 = sphi 0, %s60
      %s63 = sphi 0, %s62
      %s77 = sphi 0, %s63
      %s81 = sphi 0, %s81
      %s83 = sphi 0, %s81
      %s84 = sphi 0, %s83
      %s98 = sphi 0, %s84
      %s104 = sphi 0, %s106
      %s107 = sphi 0, %s104
      %s108 = sphi 0, %s107
      %s124 = sphi 0, %s108
      %s128 = sphi 0, %s128
      %s130 = sphi 0, %s128
      %s131 = sphi 0, %s130
      %s145 = sphi 0, %s131
      %s149 = sphi 0, %s149
      %s151 = sphi 0, %s149
      %s152 = sphi 0, %s151
      %s166 = sphi 0, %s152
      %s172 = sphi 0, %s174
      %s175 = sphi 0, %s172
      %s176 = sphi 0, %s175
      %s192 = sphi 0, %s176
      %s196 = sphi 0, %s196
      %s198 = sphi 0, %s196
      %s199 = sphi 0, %s198
      %s213 = sphi 0, %s199
      %s217 = sphi 0, %s217
      %s219 = sphi 0, %s217
      %s220 = sphi 0, %s219
      %s234 = sphi 0, %s220
      %s240 = sphi 0, %s242
      %s243 = sphi 0, %s240
      %s244 = sphi 0, %s243
      %s260 = sphi 0, %s244
    $region4: #{multiscale_tcn_forward.5} parent=1 // loop_header_branch
      %29 = sbr.rel (%p27) target = $region8
    $region5: #{multiscale_tcn_forward.5} parent=1 // loop_body
      %s31 = ssub.s32 %s26, 1
      %s32 = ssub.s32 %s26, 2
      %s33 = sadd.s32 %s26, 1
      %s34 = ssub.s32 %s26, %s33
      %p35 = scmp.eq.s32.totalorder %s34, 0
      %s37 = sadd.s32 %s36, 1
      %s38 = scalar_select %p35, %s36, %s37
      %p41 = pneg %p35
      %p42 = scmp.eq.s32.totalorder %s26, 1
      %p43 = por %p41, %p42
      %p44 = scmp.ne.s32.totalorder %s36, %s39
      %p45 = scmp.eq.s32.totalorder %s26, 0
      %p46 = por %p44, %p45
      %p47 = scmp.ne.s32.totalorder %s36, %s39
      %p48 = scmp.eq.s32.totalorder %s31, 1
      %p49 = por %p47, %p48
      %p50 = scmp.ne.s32.totalorder %s39, %s40
      %p51 = scmp.eq.s32.totalorder %s31, 0
      %p52 = por %p50, %p51
      %p53 = scmp.ne.s32.totalorder %s39, %s40
      %p54 = scmp.eq.s32.totalorder %s32, 1
      %p55 = por %p53, %p54
      %p57 = scmp.ne.s32.totalorder %s40, %s56
      %p58 = scmp.eq.s32.totalorder %s32, 0
      %p59 = por %p57, %p58
      %s61 = sadd.s32 %s60, 1
      %p64 = scmp.eq.s32.totalorder %s26, 1
      %p65 = scmp.ne.s32.totalorder %s60, %s62
      %p66 = scmp.eq.s32.totalorder %s26, 0
      %p67 = por %p65, %p66
      %p68 = scmp.ne.s32.totalorder %s60, %s62
      %p69 = scmp.eq.s32.totalorder %s31, 1
      %p70 = por %p68, %p69
      %p71 = scmp.ne.s32.totalorder %s62, %s63
      %p72 = scmp.eq.s32.totalorder %s31, 0
      %p73 = por %p71, %p72
      %p74 = scmp.ne.s32.totalorder %s62, %s63
      %p75 = scmp.eq.s32.totalorder %s32, 1
      %p76 = por %p74, %p75
      %p78 = scmp.ne.s32.totalorder %s63, %s77
      %p79 = scmp.eq.s32.totalorder %s32, 0
      %p80 = por %p78, %p79
      %s82 = sadd.s32 %s81, 1
      %p85 = scmp.eq.s32.totalorder %s26, 1
      %p86 = scmp.ne.s32.totalorder %s81, %s83
      %p87 = scmp.eq.s32.totalorder %s26, 0
      %p88 = por %p86, %p87
      %p89 = scmp.ne.s32.totalorder %s81, %s83
      %p90 = scmp.eq.s32.totalorder %s31, 1
      %p91 = por %p89, %p90
      %p92 = scmp.ne.s32.totalorder %s83, %s84
      %p93 = scmp.eq.s32.totalorder %s31, 0
      %p94 = por %p92, %p93
      %p95 = scmp.ne.s32.totalorder %s83, %s84
      %p96 = scmp.eq.s32.totalorder %s32, 1
      %p97 = por %p95, %p96
      %p99 = scmp.ne.s32.totalorder %s84, %s98
      %p100 = scmp.eq.s32.totalorder %s32, 0
      %p101 = por %p99, %p100
      %s102 = ssub.s32 %s26, %s33
      %p103 = scmp.eq.s32.totalorder %s102, 0
      %s105 = sadd.s32 %s104, 1
      %s106 = scalar_select %p103, %s104, %s105
      %p109 = pneg %p103
      %p110 = scmp.eq.s32.totalorder %s26, 1
      %p111 = por %p109, %p110
      %p112 = scmp.ne.s32.totalorder %s104, %s107
      %p113 = scmp.eq.s32.totalorder %s26, 0
      %p114 = por %p112, %p113
      %p115 = scmp.ne.s32.totalorder %s104, %s107
      %p116 = scmp.eq.s32.totalorder %s31, 1
      %p117 = por %p115, %p116
      %p118 = scmp.ne.s32.totalorder %s107, %s108
      %p119 = scmp.eq.s32.totalorder %s31, 0
      %p120 = por %p118, %p119
      %p121 = scmp.ne.s32.totalorder %s107, %s108
      %p122 = scmp.eq.s32.totalorder %s32, 1
      %p123 = por %p121, %p122
      %p125 = scmp.ne.s32.totalorder %s108, %s124
      %p126 = scmp.eq.s32.totalorder %s32, 0
      %p127 = por %p125, %p126
      %s129 = sadd.s32 %s128, 1
      %p132 = scmp.eq.s32.totalorder %s26, 1
      %p133 = scmp.ne.s32.totalorder %s128, %s130
      %p134 = scmp.eq.s32.totalorder %s26, 0
      %p135 = por %p133, %p134
      %p136 = scmp.ne.s32.totalorder %s128, %s130
      %p137 = scmp.eq.s32.totalorder %s31, 1
      %p138 = por %p136, %p137
      %p139 = scmp.ne.s32.totalorder %s130, %s131
      %p140 = scmp.eq.s32.totalorder %s31, 0
      %p141 = por %p139, %p140
      %p142 = scmp.ne.s32.totalorder %s130, %s131
      %p143 = scmp.eq.s32.totalorder %s32, 1
      %p144 = por %p142, %p143
      %p146 = scmp.ne.s32.totalorder %s131, %s145
      %p147 = scmp.eq.s32.totalorder %s32, 0
      %p148 = por %p146, %p147
      %s150 = sadd.s32 %s149, 1
      %p153 = scmp.eq.s32.totalorder %s26, 1
      %p154 = scmp.ne.s32.totalorder %s149, %s151
      %p155 = scmp.eq.s32.totalorder %s26, 0
      %p156 = por %p154, %p155
      %p157 = scmp.ne.s32.totalorder %s149, %s151
      %p158 = scmp.eq.s32.totalorder %s31, 1
      %p159 = por %p157, %p158
      %p160 = scmp.ne.s32.totalorder %s151, %s152
      %p161 = scmp.eq.s32.totalorder %s31, 0
      %p162 = por %p160, %p161
      %p163 = scmp.ne.s32.totalorder %s151, %s152
      %p164 = scmp.eq.s32.totalorder %s32, 1
      %p165 = por %p163, %p164
      %p167 = scmp.ne.s32.totalorder %s152, %s166
      %p168 = scmp.eq.s32.totalorder %s32, 0
      %p169 = por %p167, %p168
      %s170 = ssub.s32 %s26, %s33
      %p171 = scmp.eq.s32.totalorder %s170, 0
      %s173 = sadd.s32 %s172, 1
      %s174 = scalar_select %p171, %s172, %s173
      %p177 = pneg %p171
      %p178 = scmp.eq.s32.totalorder %s26, 1
      %p179 = por %p177, %p178
      %p180 = scmp.ne.s32.totalorder %s172, %s175
      %p181 = scmp.eq.s32.totalorder %s26, 0
      %p182 = por %p180, %p181
      %p183 = scmp.ne.s32.totalorder %s172, %s175
      %p184 = scmp.eq.s32.totalorder %s31, 1
      %p185 = por %p183, %p184
      %p186 = scmp.ne.s32.totalorder %s175, %s176
      %p187 = scmp.eq.s32.totalorder %s31, 0
      %p188 = por %p186, %p187
      %p189 = scmp.ne.s32.totalorder %s175, %s176
      %p190 = scmp.eq.s32.totalorder %s32, 1
      %p191 = por %p189, %p190
      %p193 = scmp.ne.s32.totalorder %s176, %s192
      %p194 = scmp.eq.s32.totalorder %s32, 0
      %p195 = por %p193, %p194
      %s197 = sadd.s32 %s196, 1
      %p200 = scmp.eq.s32.totalorder %s26, 1
      %p201 = scmp.ne.s32.totalorder %s196, %s198
      %p202 = scmp.eq.s32.totalorder %s26, 0
      %p203 = por %p201, %p202
      %p204 = scmp.ne.s32.totalorder %s196, %s198
      %p205 = scmp.eq.s32.totalorder %s31, 1
      %p206 = por %p204, %p205
      %p207 = scmp.ne.s32.totalorder %s198, %s199
      %p208 = scmp.eq.s32.totalorder %s31, 0
      %p209 = por %p207, %p208
      %p210 = scmp.ne.s32.totalorder %s198, %s199
      %p211 = scmp.eq.s32.totalorder %s32, 1
      %p212 = por %p210, %p211
      %p214 = scmp.ne.s32.totalorder %s199, %s213
      %p215 = scmp.eq.s32.totalorder %s32, 0
      %p216 = por %p214, %p215
      %s218 = sadd.s32 %s217, 1
      %p221 = scmp.eq.s32.totalorder %s26, 1
      %p222 = scmp.ne.s32.totalorder %s217, %s219
      %p223 = scmp.eq.s32.totalorder %s26, 0
      %p224 = por %p222, %p223
      %p225 = scmp.ne.s32.totalorder %s217, %s219
      %p226 = scmp.eq.s32.totalorder %s31, 1
      %p227 = por %p225, %p226
      %p228 = scmp.ne.s32.totalorder %s219, %s220
      %p229 = scmp.eq.s32.totalorder %s31, 0
      %p230 = por %p228, %p229
      %p231 = scmp.ne.s32.totalorder %s219, %s220
      %p232 = scmp.eq.s32.totalorder %s32, 1
      %p233 = por %p231, %p232
      %p235 = scmp.ne.s32.totalorder %s220, %s234
      %p236 = scmp.eq.s32.totalorder %s32, 0
      %p237 = por %p235, %p236
      %s238 = ssub.s32 %s26, %s33
      %p239 = scmp.eq.s32.totalorder %s238, 0
      %s241 = sadd.s32 %s240, 1
      %s242 = scalar_select %p239, %s240, %s241
      %p245 = pneg %p239
      %p246 = scmp.eq.s32.totalorder %s26, 1
      %p247 = por %p245, %p246
      %p248 = scmp.ne.s32.totalorder %s240, %s243
      %p249 = scmp.eq.s32.totalorder %s26, 0
      %p250 = por %p248, %p249
      %p251 = scmp.ne.s32.totalorder %s240, %s243
      %p252 = scmp.eq.s32.totalorder %s31, 1
      %p253 = por %p251, %p252
      %p254 = scmp.ne.s32.totalorder %s243, %s244
      %p255 = scmp.eq.s32.totalorder %s31, 0
      %p256 = por %p254, %p255
      %p257 = scmp.ne.s32.totalorder %s243, %s244
      %p258 = scmp.eq.s32.totalorder %s32, 1
      %p259 = por %p257, %p258
      %p261 = scmp.ne.s32.totalorder %s244, %s260
      %p262 = scmp.eq.s32.totalorder %s32, 0
      %p263 = por %p261, %p262
      %p264 = scmp.le.s32.totalorder 1, %s26
      %p265 = scmp.lt.s32.totalorder %s26, 3
      %p266 = pnand %p264, %p265
      %p267 = pneg %p266
      // Predicated region
      $region9: #{multiscale_tcn_forward.5} parent=5 // pred_check
        _
      $region10: #{multiscale_tcn_forward.5} parent=5 // pred_check_branch
        %269 = sbr.rel (%p266) target = $region12
      $region11: #{multiscale_tcn_forward.5} parent=5 // pred_region
        %s270 = ssub.s32 %s26, 1
        // Predicated region
        $region13: #{multiscale_tcn_forward.5} parent=11 // pred_check
          %p271 = pneg %p73
        $region14: #{multiscale_tcn_forward.5} parent=11 // pred_check_branch
          %273 = sbr.rel (%p271) target = $region16
        $region15: #{multiscale_tcn_forward.5} parent=11 // pred_region
          %s275 = ssub.s32 640, 640
          %276 = vsyncadd [#allocation6], %s275
          %s277 = sshll.u32 [#allocation5], 4
          %s278 = int_to_ptr.vmem [resolvable:$true] %s277
          %283 = dma.hbm_to_vmem [thread:$0]  %s1, 640, %s278, [#allocation6], 128, 128, 8
        $region16: #{multiscale_tcn_forward.5} parent=11 // pred_fallthru
          _
        // Predicated region
        $region17: #{multiscale_tcn_forward.5} parent=11 // pred_check
          %p284 = pneg %p94
        $region18: #{multiscale_tcn_forward.5} parent=11 // pred_check_branch
          %286 = sbr.rel (%p284) target = $region20
        $region19: #{multiscale_tcn_forward.5} parent=11 // pred_region
          %s288 = ssub.s32 640, 640
          %289 = vsyncadd [#allocation6], %s288
          %s290 = sshll.u32 [#allocation7], 4
          %s291 = int_to_ptr.vmem [resolvable:$true] %s290
          %296 = dma.hbm_to_vmem [thread:$0]  %s2, 640, %s291, [#allocation6], 128, 128, 8
        $region20: #{multiscale_tcn_forward.5} parent=11 // pred_fallthru
          _
        // Predicated region
        $region21: #{multiscale_tcn_forward.5} parent=11 // pred_check
          %p297 = pneg %p141
        $region22: #{multiscale_tcn_forward.5} parent=11 // pred_check_branch
          %299 = sbr.rel (%p297) target = $region24
        $region23: #{multiscale_tcn_forward.5} parent=11 // pred_region
          %s301 = ssub.s32 128, 128
          %302 = vsyncadd [#allocation9], %s301
          %s304 = sshll.u32 [#allocation10], 4
          %s305 = int_to_ptr.vmem [resolvable:$true] %s304
          %307 = dma.hbm_to_vmem [thread:$0]  %s4, 128, %s305, [#allocation9]
        $region24: #{multiscale_tcn_forward.5} parent=11 // pred_fallthru
          _
        // Predicated region
        $region25: #{multiscale_tcn_forward.5} parent=11 // pred_check
          %p308 = pneg %p162
        $region26: #{multiscale_tcn_forward.5} parent=11 // pred_check_branch
          %310 = sbr.rel (%p308) target = $region28
        $region27: #{multiscale_tcn_forward.5} parent=11 // pred_region
          %s312 = ssub.s32 128, 128
          %313 = vsyncadd [#allocation12], %s312
          %s315 = sshll.u32 [#allocation11], 4
          %s316 = int_to_ptr.vmem [resolvable:$true] %s315
          %318 = dma.hbm_to_vmem [thread:$0]  %s5, 128, %s316, [#allocation12]
        $region28: #{multiscale_tcn_forward.5} parent=11 // pred_fallthru
          _
        // Predicated region
        $region29: #{multiscale_tcn_forward.5} parent=11 // pred_check
          %p319 = pneg %p209
        $region30: #{multiscale_tcn_forward.5} parent=11 // pred_check_branch
          %321 = sbr.rel (%p319) target = $region32
        $region31: #{multiscale_tcn_forward.5} parent=11 // pred_region
          %s323 = ssub.s32 768, 768
          %324 = vsyncadd [#allocation6], %s323
          %s325 = sshll.u32 [#allocation14], 4
          %s326 = int_to_ptr.vmem [resolvable:$true] %s325
          %331 = dma.hbm_to_vmem [thread:$0]  %s7, 768, %s326, [#allocation6], 128, 128, 8
        $region32: #{multiscale_tcn_forward.5} parent=11 // pred_fallthru
          _
        // Predicated region
        $region33: #{multiscale_tcn_forward.5} parent=11 // pred_check
          %p332 = pneg %p230
        $region34: #{multiscale_tcn_forward.5} parent=11 // pred_check_branch
          %334 = sbr.rel (%p332) target = $region36
        $region35: #{multiscale_tcn_forward.5} parent=11 // pred_region
          %s336 = ssub.s32 768, 768
          %337 = vsyncadd [#allocation9], %s336
          %s338 = sshll.u32 [#allocation15], 4
          %s339 = int_to_ptr.vmem [resolvable:$true] %s338
          %344 = dma.hbm_to_vmem [thread:$0]  %s8, 768, %s339, [#allocation9], 128, 128, 8
        $region36: #{multiscale_tcn_forward.5} parent=11 // pred_fallthru
          _
      $region12: #{multiscale_tcn_forward.5} parent=5 // pred_fallthru
        _
      %p345 = scmp.lt.s32.totalorder %s26, 2
      // Predicated region
      $region37: #{multiscale_tcn_forward.5} parent=5 // pred_check
        %p346 = pneg %p345
      $region38: #{multiscale_tcn_forward.5} parent=5 // pred_check_branch
        %348 = sbr.rel (%p346) target = $region40
      $region39: #{multiscale_tcn_forward.5} parent=5 // pred_region
        // Predicated region
        $region41: #{multiscale_tcn_forward.5} parent=39 // pred_check
          %p349 = pneg %p46
        $region42: #{multiscale_tcn_forward.5} parent=39 // pred_check_branch
          %351 = sbr.rel (%p349) target = $region44
        $region43: #{multiscale_tcn_forward.5} parent=39 // pred_region
          %s352 = sand.u32 %s26, 1
          %s353 = scalar_lea.sflag [#allocation3], %s352
          %s354 = sand.u32 %s36, 1
          %s355 = smul.addr %s354, 80
          %s356 = scalar_lea.vmem [#allocation2], %s355
          %s358 = ssub.s32 1280, 1280
          %359 = vsyncadd %s353, %s358
          %s360 = smul.addr %s26, 10
          %s361 = smul.addr %s360, 128
          %s362 = scalar_lea.hbm %s0, %s361
          %s363 = sshll.u32 %s356, 4
          %s364 = int_to_ptr.vmem [resolvable:$true] %s363
          %369 = dma.hbm_to_vmem [thread:$0]  %s362, 1280, %s364, %s353, 256, 256, 16
        $region44: #{multiscale_tcn_forward.5} parent=39 // pred_fallthru
          _
        // Predicated region
        $region45: #{multiscale_tcn_forward.5} parent=39 // pred_check
          %p370 = pneg %p114
        $region46: #{multiscale_tcn_forward.5} parent=39 // pred_check_branch
          %372 = sbr.rel (%p370) target = $region48
        $region47: #{multiscale_tcn_forward.5} parent=39 // pred_region
          %s373 = sand.u32 %s26, 1
          %s374 = scalar_lea.sflag [#allocation9], %s373
          %s375 = sand.u32 %s104, 1
          %s376 = smul.addr %s375, 16
          %s377 = scalar_lea.vmem [#allocation8], %s376
          %s379 = ssub.s32 256, 256
          %380 = vsyncadd %s374, %s379
          %s381 = smul.addr %s26, 2
          %s382 = smul.addr %s381, 128
          %s383 = scalar_lea.hbm %s3, %s382
          %s385 = sshll.u32 %s377, 4
          %s386 = int_to_ptr.vmem [resolvable:$true] %s385
          %388 = dma.hbm_to_vmem [thread:$0]  %s383, 256, %s386, %s374
        $region48: #{multiscale_tcn_forward.5} parent=39 // pred_fallthru
          _
        // Predicated region
        $region49: #{multiscale_tcn_forward.5} parent=39 // pred_check
          %p389 = pneg %p182
        $region50: #{multiscale_tcn_forward.5} parent=39 // pred_check_branch
          %391 = sbr.rel (%p389) target = $region52
        $region51: #{multiscale_tcn_forward.5} parent=39 // pred_region
          %s392 = sand.u32 %s26, 1
          %s393 = scalar_lea.sflag [#allocation3], %s392
          %s394 = sand.u32 %s172, 1
          %s395 = smul.addr %s394, 96
          %s396 = scalar_lea.vmem [#allocation13], %s395
          %s398 = ssub.s32 1536, 1536
          %399 = vsyncadd %s393, %s398
          %s400 = smul.addr %s26, 12
          %s401 = smul.addr %s400, 128
          %s402 = scalar_lea.hbm %s6, %s401
          %s403 = sshll.u32 %s396, 4
          %s404 = int_to_ptr.vmem [resolvable:$true] %s403
          %409 = dma.hbm_to_vmem [thread:$0]  %s402, 1536, %s404, %s393, 256, 256, 16
        $region52: #{multiscale_tcn_forward.5} parent=39 // pred_fallthru
          _
      $region40: #{multiscale_tcn_forward.5} parent=5 // pred_fallthru
        _
      %p410 = scmp.le.s32.totalorder 1, %s26
      %p411 = scmp.lt.s32.totalorder %s26, 3
      %p412 = pnand %p410, %p411
      %p413 = pneg %p412
      // Predicated region
      $region53: #{multiscale_tcn_forward.5} parent=5 // pred_check
        _
      $region54: #{multiscale_tcn_forward.5} parent=5 // pred_check_branch
        %415 = sbr.rel (%p412) target = $region56
      $region55: #{multiscale_tcn_forward.5} parent=5 // pred_region
        %s416 = ssub.s32 %s26, 1
        %s417 = sand.u32 %s31, 1
        %s418 = scalar_lea.sflag [#allocation3], %s417
        %s419 = sand.u32 %s39, 1
        %s420 = smul.addr %s419, 80
        %s421 = scalar_lea.vmem [#allocation2], %s420
        // Predicated region
        $region57: #{multiscale_tcn_forward.5} parent=55 // pred_check
          %p422 = pneg %p52
        $region58: #{multiscale_tcn_forward.5} parent=55 // pred_check_branch
          %424 = sbr.rel (%p422) target = $region60
        $region59: #{multiscale_tcn_forward.5} parent=55 // pred_region
          %425 = dma.done %s418, 1280
        $region60: #{multiscale_tcn_forward.5} parent=55 // pred_fallthru
          _
        // Predicated region
        $region61: #{multiscale_tcn_forward.5} parent=55 // pred_check
          %p426 = pneg %p73
        $region62: #{multiscale_tcn_forward.5} parent=55 // pred_check_branch
          %428 = sbr.rel (%p426) target = $region64
        $region63: #{multiscale_tcn_forward.5} parent=55 // pred_region
          %429 = dma.done [#allocation6], 640
        $region64: #{multiscale_tcn_forward.5} parent=55 // pred_fallthru
          _
        // Predicated region
        $region65: #{multiscale_tcn_forward.5} parent=55 // pred_check
          %p430 = pneg %p94
        $region66: #{multiscale_tcn_forward.5} parent=55 // pred_check_branch
          %432 = sbr.rel (%p430) target = $region68
        $region67: #{multiscale_tcn_forward.5} parent=55 // pred_region
          %433 = dma.done [#allocation6], 640
        $region68: #{multiscale_tcn_forward.5} parent=55 // pred_fallthru
          _
        %s434 = sand.u32 %s31, 1
        %s435 = scalar_lea.sflag [#allocation9], %s434
        %s436 = sand.u32 %s107, 1
        %s437 = smul.addr %s436, 16
        %s438 = scalar_lea.vmem [#allocation8], %s437
        // Predicated region
        $region69: #{multiscale_tcn_forward.5} parent=55 // pred_check
          %p439 = pneg %p120
        $region70: #{multiscale_tcn_forward.5} parent=55 // pred_check_branch
          %441 = sbr.rel (%p439) target = $region72
        $region71: #{multiscale_tcn_forward.5} parent=55 // pred_region
          %442 = dma.done %s435, 256
        $region72: #{multiscale_tcn_forward.5} parent=55 // pred_fallthru
          _
        // Predicated region
        $region73: #{multiscale_tcn_forward.5} parent=55 // pred_check
          %p443 = pneg %p141
        $region74: #{multiscale_tcn_forward.5} parent=55 // pred_check_branch
          %445 = sbr.rel (%p443) target = $region76
        $region75: #{multiscale_tcn_forward.5} parent=55 // pred_region
          %446 = dma.done [#allocation9], 128
        $region76: #{multiscale_tcn_forward.5} parent=55 // pred_fallthru
          _
        // Predicated region
        $region77: #{multiscale_tcn_forward.5} parent=55 // pred_check
          %p447 = pneg %p162
        $region78: #{multiscale_tcn_forward.5} parent=55 // pred_check_branch
          %449 = sbr.rel (%p447) target = $region80
        $region79: #{multiscale_tcn_forward.5} parent=55 // pred_region
          %450 = dma.done [#allocation12], 128
        $region80: #{multiscale_tcn_forward.5} parent=55 // pred_fallthru
          _
        %s451 = sand.u32 %s31, 1
        %s452 = scalar_lea.sflag [#allocation3], %s451
        %s453 = sand.u32 %s175, 1
        %s454 = smul.addr %s453, 96
        %s455 = scalar_lea.vmem [#allocation13], %s454
        // Predicated region
        $region81: #{multiscale_tcn_forward.5} parent=55 // pred_check
          %p456 = pneg %p188
        $region82: #{multiscale_tcn_forward.5} parent=55 // pred_check_branch
          %458 = sbr.rel (%p456) target = $region84
        $region83: #{multiscale_tcn_forward.5} parent=55 // pred_region
          %459 = dma.done %s452, 1536
        $region84: #{multiscale_tcn_forward.5} parent=55 // pred_fallthru
          _
        // Predicated region
        $region85: #{multiscale_tcn_forward.5} parent=55 // pred_check
          %p460 = pneg %p209
        $region86: #{multiscale_tcn_forward.5} parent=55 // pred_check_branch
          %462 = sbr.rel (%p460) target = $region88
        $region87: #{multiscale_tcn_forward.5} parent=55 // pred_region
          %463 = dma.done [#allocation6], 768
        $region88: #{multiscale_tcn_forward.5} parent=55 // pred_fallthru
          _
        // Predicated region
        $region89: #{multiscale_tcn_forward.5} parent=55 // pred_check
          %p464 = pneg %p230
        $region90: #{multiscale_tcn_forward.5} parent=55 // pred_check_branch
          %466 = sbr.rel (%p464) target = $region92
        $region91: #{multiscale_tcn_forward.5} parent=55 // pred_region
          %467 = dma.done [#allocation9], 768
        $region92: #{multiscale_tcn_forward.5} parent=55 // pred_fallthru
          _
        %s468 = sand.u32 %s31, 1
        %s469 = scalar_lea.sflag [#allocation3], %s468
        %s470 = sand.u32 %s39, 1
        %s471 = smul.addr %s470, 80
        %s472 = scalar_lea.vmem [#allocation2], %s471
        %p473 = pneg %p52
        %p474 = pneg %p49
        %p475 = pneg %p73
        %p476 = pneg %p70
        %p477 = pneg %p94
        %p478 = pneg %p91
        %s479 = sand.u32 %s31, 1
        %s480 = scalar_lea.sflag [#allocation9], %s479
        %s481 = sand.u32 %s107, 1
        %s482 = smul.addr %s481, 16
        %s483 = scalar_lea.vmem [#allocation8], %s482
        %p484 = pneg %p120
        %p485 = pneg %p117
        %p486 = pneg %p141
        %p487 = pneg %p138
        %p488 = pneg %p162
        %p489 = pneg %p159
        %s490 = sand.u32 %s31, 1
        %s491 = scalar_lea.sflag [#allocation3], %s490
        %s492 = sand.u32 %s175, 1
        %s493 = smul.addr %s492, 96
        %s494 = scalar_lea.vmem [#allocation13], %s493
        %p495 = pneg %p188
        %p496 = pneg %p185
        %p497 = pneg %p209
        %p498 = pneg %p206
        %p499 = pneg %p230
        %p500 = pneg %p227
        %p501 = pneg %p256
        %p502 = pneg %p253
        %s503 = sand.u32 %s243, 1
        %s504 = scalar_lea.sflag [#allocation4], %s503
        %s505 = sand.u32 %s243, 1
        %s506 = smul.addr %s505, 96
        %s507 = scalar_lea.vmem [#allocation16], %s506
        %v508 = vld [vmem:[%s421] sm:$0xff]
        %v509 = vld [vmem:[%s421 + $0x8] sm:$0xff]
        %v510 = vld [vmem:[%s421 + $0x10] sm:$0xff]
        %v511 = vld [vmem:[%s421 + $0x18] sm:$0xff]
        %v512 = vld [vmem:[%s421 + $0x20] sm:$0xff]
        %v513 = vld [vmem:[%s421 + $0x28] sm:$0xff]
        %v514 = vld [vmem:[%s421 + $0x30] sm:$0xff]
        %v515 = vld [vmem:[%s421 + $0x38] sm:$0xff]
        %v516 = vld [vmem:[%s421 + $0x40] sm:$0xff]
        %v517 = vld [vmem:[%s421 + $0x48] sm:$0xff]
        %v518 = vld [vmem:[#allocation5] sm:$0xff]
        %v519 = vld [vmem:[#allocation5 + $0x8] sm:$0xff]
        %v520 = vld [vmem:[#allocation5 + $0x10] sm:$0xff]
        %v521 = vld [vmem:[#allocation5 + $0x18] sm:$0xff]
        %v522 = vld [vmem:[#allocation5 + $0x20] sm:$0xff]
        %524 = vset.pattern.permute.xlu0 0
        %525 = vperm.xlu0 %524, %v518
        %v526 = vpop.permute.xlu0 %525
        %529 = vset.pattern.permute.xlu0 0
        %530 = vperm.xlu0 %529, %v519
        %v531 = vpop.permute.xlu0 %530
        %534 = vset.pattern.permute.xlu0 0
        %535 = vperm.xlu0 %534, %v520
        %v536 = vpop.permute.xlu0 %535
        %539 = vset.pattern.permute.xlu0 0
        %540 = vperm.xlu0 %539, %v521
        %v541 = vpop.permute.xlu0 %540
        %544 = vset.pattern.permute.xlu0 0
        %545 = vperm.xlu0 %544, %v522
        %v546 = vpop.permute.xlu0 %545
        %v548 = vmul.f32 %v508, %v526
        %v549 = vmul.f32 %v509, %v526
        %v550 = vmul.f32 %v510, %v531
        %v551 = vmul.f32 %v511, %v531
        %v552 = vmul.f32 %v512, %v536
        %v553 = vmul.f32 %v513, %v536
        %v554 = vmul.f32 %v514, %v541
        %v555 = vmul.f32 %v515, %v541
        %v556 = vmul.f32 %v516, %v546
        %v557 = vmul.f32 %v517, %v546
        %v558 = vld [vmem:[#allocation7] sm:$0xff]
        %v559 = vld [vmem:[#allocation7 + $0x8] sm:$0xff]
        %v560 = vld [vmem:[#allocation7 + $0x10] sm:$0xff]
        %v561 = vld [vmem:[#allocation7 + $0x18] sm:$0xff]
        %v562 = vld [vmem:[#allocation7 + $0x20] sm:$0xff]
        %564 = vset.pattern.permute.xlu0 0
        %565 = vperm.xlu0 %564, %v558
        %v566 = vpop.permute.xlu0 %565
        %569 = vset.pattern.permute.xlu0 0
        %570 = vperm.xlu0 %569, %v559
        %v571 = vpop.permute.xlu0 %570
        %574 = vset.pattern.permute.xlu0 0
        %575 = vperm.xlu0 %574, %v560
        %v576 = vpop.permute.xlu0 %575
        %579 = vset.pattern.permute.xlu0 0
        %580 = vperm.xlu0 %579, %v561
        %v581 = vpop.permute.xlu0 %580
        %584 = vset.pattern.permute.xlu0 0
        %585 = vperm.xlu0 %584, %v562
        %v586 = vpop.permute.xlu0 %585
        %v588 = vadd.f32 %v548, %v566
        %v589 = vadd.f32 %v549, %v566
        %v590 = vadd.f32 %v550, %v571
        %v591 = vadd.f32 %v551, %v571
        %v592 = vadd.f32 %v552, %v576
        %v593 = vadd.f32 %v553, %v576
        %v594 = vadd.f32 %v554, %v581
        %v595 = vadd.f32 %v555, %v581
        %v596 = vadd.f32 %v556, %v586
        %v597 = vadd.f32 %v557, %v586
        %v598 = vld [vmem:[%s438] sm:$0xff]
        %v599 = vld [vmem:[%s438 + $0x8] sm:$0xff]
        %v600 = vld [vmem:[#allocation10] sm:$0xff]
        %602 = vset.pattern.permute.xlu0 0
        %603 = vperm.xlu0 %602, %v600
        %v604 = vpop.permute.xlu0 %603
        %v606 = vmul.f32 %v598, %v604
        %v607 = vmul.f32 %v599, %v604
        %v608 = vld [vmem:[#allocation11] sm:$0xff]
        %610 = vset.pattern.permute.xlu0 0
        %611 = vperm.xlu0 %610, %v608
        %v612 = vpop.permute.xlu0 %611
        %v614 = vadd.f32 %v606, %v612
        %v615 = vadd.f32 %v607, %v612
        %v616 = vld [vmem:[%s455] sm:$0xff]
        %v617 = vld [vmem:[%s455 + $0x8] sm:$0xff]
        %v618 = vld [vmem:[%s455 + $0x10] sm:$0xff]
        %v619 = vld [vmem:[%s455 + $0x18] sm:$0xff]
        %v620 = vld [vmem:[%s455 + $0x20] sm:$0xff]
        %v621 = vld [vmem:[%s455 + $0x28] sm:$0xff]
        %v622 = vld [vmem:[%s455 + $0x30] sm:$0xff]
        %v623 = vld [vmem:[%s455 + $0x38] sm:$0xff]
        %v624 = vld [vmem:[%s455 + $0x40] sm:$0xff]
        %v625 = vld [vmem:[%s455 + $0x48] sm:$0xff]
        %v626 = vld [vmem:[%s455 + $0x50] sm:$0xff]
        %v627 = vld [vmem:[%s455 + $0x58] sm:$0xff]
        %v628 = vld [vmem:[#allocation14] sm:$0xff]
        %v629 = vld [vmem:[#allocation14 + $0x8] sm:$0xff]
        %v630 = vld [vmem:[#allocation14 + $0x10] sm:$0xff]
        %v631 = vld [vmem:[#allocation14 + $0x18] sm:$0xff]
        %v632 = vld [vmem:[#allocation14 + $0x20] sm:$0xff]
        %v633 = vld [vmem:[#allocation14 + $0x28] sm:$0xff]
        %635 = vset.pattern.permute.xlu0 0
        %636 = vperm.xlu0 %635, %v628
        %v637 = vpop.permute.xlu0 %636
        %640 = vset.pattern.permute.xlu0 0
        %641 = vperm.xlu0 %640, %v629
        %v642 = vpop.permute.xlu0 %641
        %645 = vset.pattern.permute.xlu0 0
        %646 = vperm.xlu0 %645, %v630
        %v647 = vpop.permute.xlu0 %646
        %650 = vset.pattern.permute.xlu0 0
        %651 = vperm.xlu0 %650, %v631
        %v652 = vpop.permute.xlu0 %651
        %655 = vset.pattern.permute.xlu0 0
        %656 = vperm.xlu0 %655, %v632
        %v657 = vpop.permute.xlu0 %656
        %660 = vset.pattern.permute.xlu0 0
        %661 = vperm.xlu0 %660, %v633
        %v662 = vpop.permute.xlu0 %661
        %v664 = vmul.f32 %v616, %v637
        %v665 = vmul.f32 %v617, %v637
        %v666 = vmul.f32 %v618, %v642
        %v667 = vmul.f32 %v619, %v642
        %v668 = vmul.f32 %v620, %v647
        %v669 = vmul.f32 %v621, %v647
        %v670 = vmul.f32 %v622, %v652
        %v671 = vmul.f32 %v623, %v652
        %v672 = vmul.f32 %v624, %v657
        %v673 = vmul.f32 %v625, %v657
        %v674 = vmul.f32 %v626, %v662
        %v675 = vmul.f32 %v627, %v662
        %v676 = vld [vmem:[#allocation15] sm:$0xff]
        %v677 = vld [vmem:[#allocation15 + $0x8] sm:$0xff]
        %v678 = vld [vmem:[#allocation15 + $0x10] sm:$0xff]
        %v679 = vld [vmem:[#allocation15 + $0x18] sm:$0xff]
        %v680 = vld [vmem:[#allocation15 + $0x20] sm:$0xff]
        %v681 = vld [vmem:[#allocation15 + $0x28] sm:$0xff]
        %683 = vset.pattern.permute.xlu0 0
        %684 = vperm.xlu0 %683, %v676
        %v685 = vpop.permute.xlu0 %684
        %688 = vset.pattern.permute.xlu0 0
        %689 = vperm.xlu0 %688, %v677
        %v690 = vpop.permute.xlu0 %689
        %693 = vset.pattern.permute.xlu0 0
        %694 = vperm.xlu0 %693, %v678
        %v695 = vpop.permute.xlu0 %694
        %698 = vset.pattern.permute.xlu0 0
        %699 = vperm.xlu0 %698, %v679
        %v700 = vpop.permute.xlu0 %699
        %703 = vset.pattern.permute.xlu0 0
        %704 = vperm.xlu0 %703, %v680
        %v705 = vpop.permute.xlu0 %704
        %708 = vset.pattern.permute.xlu0 0
        %709 = vperm.xlu0 %708, %v681
        %v710 = vpop.permute.xlu0 %709
        %v712 = vadd.f32 %v664, %v685
        %v713 = vadd.f32 %v665, %v685
        %v714 = vadd.f32 %v666, %v690
        %v715 = vadd.f32 %v667, %v690
        %v716 = vadd.f32 %v668, %v695
        %v717 = vadd.f32 %v669, %v695
        %v718 = vadd.f32 %v670, %v700
        %v719 = vadd.f32 %v671, %v700
        %v720 = vadd.f32 %v672, %v705
        %v721 = vadd.f32 %v673, %v705
        %v722 = vadd.f32 %v674, %v710
        %v723 = vadd.f32 %v675, %v710
        %v724 = vadd.f32 %v588, %v712
        %v725 = vadd.f32 %v589, %v713
        %v726 = vadd.f32 %v590, %v714
        %v727 = vadd.f32 %v591, %v715
        %v728 = vadd.f32 %v592, %v716
        %v729 = vadd.f32 %v593, %v717
        %v730 = vadd.f32 %v594, %v718
        %v731 = vadd.f32 %v595, %v719
        %v732 = vadd.f32 %v596, %v720
        %v733 = vadd.f32 %v597, %v721
        %v734 = vadd.f32 %v614, %v722
        %v735 = vadd.f32 %v615, %v723
        %736 = vst [vmem:[%s507] sm:$0xff] %v724
        %737 = vst [vmem:[%s507 + $0x8] sm:$0xff] %v725
        %738 = vst [vmem:[%s507 + $0x10] sm:$0xff] %v726
        %739 = vst [vmem:[%s507 + $0x18] sm:$0xff] %v727
        %740 = vst [vmem:[%s507 + $0x20] sm:$0xff] %v728
        %741 = vst [vmem:[%s507 + $0x28] sm:$0xff] %v729
        %742 = vst [vmem:[%s507 + $0x30] sm:$0xff] %v730
        %743 = vst [vmem:[%s507 + $0x38] sm:$0xff] %v731
        %744 = vst [vmem:[%s507 + $0x40] sm:$0xff] %v732
        %745 = vst [vmem:[%s507 + $0x48] sm:$0xff] %v733
        %746 = vst [vmem:[%s507 + $0x50] sm:$0xff] %v734
        %747 = vst [vmem:[%s507 + $0x58] sm:$0xff] %v735
        %s748 = sand.u32 %s243, 1
        %s749 = scalar_lea.sflag [#allocation4], %s748
        %s750 = sand.u32 %s243, 1
        %s751 = smul.addr %s750, 96
        %s752 = scalar_lea.vmem [#allocation16], %s751
        // Predicated region
        $region93: #{multiscale_tcn_forward.5} parent=55 // pred_check
          %p753 = pneg %p253
        $region94: #{multiscale_tcn_forward.5} parent=55 // pred_check_branch
          %755 = sbr.rel (%p753) target = $region96
        $region95: #{multiscale_tcn_forward.5} parent=55 // pred_region
          %s757 = ssub.s32 1536, 1536
          %758 = vsyncadd %s749, %s757
          %s759 = smul.addr %s31, 12
          %s760 = smul.addr %s759, 128
          %s761 = scalar_lea.hbm %s9, %s760
          %s762 = sshll.u32 %s752, 4
          %s763 = int_to_ptr.vmem [resolvable:$true] %s762
          %768 = dma.vmem_to_hbm [thread:$0]  %s763, 1536, %s761, %s749, 256, 256, 16
        $region96: #{multiscale_tcn_forward.5} parent=55 // pred_fallthru
          _
      $region56: #{multiscale_tcn_forward.5} parent=5 // pred_fallthru
        _
      %p769 = scmp.le.s32.totalorder 2, %s26
      // Predicated region
      $region97: #{multiscale_tcn_forward.5} parent=5 // pred_check
        %p770 = pneg %p769
      $region98: #{multiscale_tcn_forward.5} parent=5 // pred_check_branch
        %772 = sbr.rel (%p770) target = $region100
      $region99: #{multiscale_tcn_forward.5} parent=5 // pred_region
        %s773 = ssub.s32 %s26, 2
        // Predicated region
        $region101: #{multiscale_tcn_forward.5} parent=99 // pred_check
          %p774 = pneg %p259
        $region102: #{multiscale_tcn_forward.5} parent=99 // pred_check_branch
          %776 = sbr.rel (%p774) target = $region104
        $region103: #{multiscale_tcn_forward.5} parent=99 // pred_region
          %s777 = sand.u32 %s244, 1
          %s778 = scalar_lea.sflag [#allocation4], %s777
          %s779 = sand.u32 %s244, 1
          %s780 = smul.addr %s779, 96
          %s781 = scalar_lea.vmem [#allocation16], %s780
          %782 = dma.done %s778, 1536
        $region104: #{multiscale_tcn_forward.5} parent=99 // pred_fallthru
          _
      $region100: #{multiscale_tcn_forward.5} parent=5 // pred_fallthru
        _
    $region6: #{multiscale_tcn_forward.5} parent=1 // loop_footer
      %s30 = sadd.s32 1, %s26
    $region7: #{multiscale_tcn_forward.5} parent=1 // loop_footer_branch
      %25 = sbr.rel target = $region3
    $region8: #{multiscale_tcn_forward.5} parent=1 // loop_exit
      _
    %783 = vsyncpa [#allocation3], 1
    %s784 = scalar_lea.sflag [#allocation3], 1
    %785 = vsyncpa %s784, 1
    %786 = vsyncpa [#allocation6], 1
    %787 = vsyncpa [#allocation9], 1
    %s788 = scalar_lea.sflag [#allocation9], 1
    %789 = vsyncpa %s788, 1
    %790 = vsyncpa [#allocation12], 1
    %791 = vsyncpa [#allocation4], 1
    %s792 = scalar_lea.sflag [#allocation4], 1
    %793 = vsyncpa %s792, 1

// kernel: multiscale_tcn_forward.3
$region0: #{multiscale_tcn_forward.3}
  #allocation0 [shape = 'u32[]', space=smem, size = 0x4, offset = 0x4, fixed_abs, tag = 'smem constant byte address 0x4 - core index']
  #allocation1 [shape = 'u32[144,128]{1,0:T(1,128)}', space=vmem, size = 0x12000, scoped, tag = 'internal scratch']
  %s0 = inlined_call_operand.hbm [shape: f32[2,4,256], index: 0, kind: input, shape index: {}]
  %s1 = inlined_call_operand.hbm [shape: f32[96,4], index: 1, kind: input, shape index: {}]
  %s2 = inlined_call_operand.hbm [shape: f32[2,40,256], index: 2, kind: output, shape index: {0}]
  %s3 = inlined_call_operand.hbm [shape: f32[2,8,256], index: 3, kind: output, shape index: {1}]
  %s4 = inlined_call_operand.hbm [shape: f32[2,48,256], index: 4, kind: output, shape index: {2}]
  %s5 = inlined_call_operand.hbm [shape: f32[40,256], index: 5, kind: output, shape index: {3}]
  %s6 = inlined_call_operand.hbm [shape: f32[8,256], index: 6, kind: output, shape index: {4}]
  %s7 = inlined_call_operand.hbm [shape: f32[48,256], index: 7, kind: output, shape index: {5}]
  %8 = xla_tuple %s2, %s3, %s4, %s5, %s6, %s7
  %s9 = sld [smem:[#allocation0]]
  $region93: #{multiscale_tcn_forward.3} parent=0
    _
  %s11 = ssub.s32 1, %s9
  %s12 = scalar_select 0, %s11, %s9
  $region1: #{multiscale_tcn_forward.3} parent=0
    #allocation2 [shape = 'u8[8192]{0}', space=vmem, size = 0x2000, scoped, tag = 'input window, operand 0']
    #allocation3 [shape = 's32[2]{0}', space=sflag, size = 0x8, scoped, tag = 'scoped memory for multiscale_tcn_forward.3']
    #allocation4 [shape = 's32[2]{0}', space=sflag, size = 0x8, scoped, tag = 'scoped memory for multiscale_tcn_forward.3']
    #allocation5 [shape = 'u8[49152]{0}', space=vmem, size = 0xc000, scoped, tag = 'input window, operand 1, single buffered']
    #allocation6 [shape = 's32[1]{0}', space=sflag, size = 0x4, scoped, tag = 'scoped memory for multiscale_tcn_forward.3']
    #allocation7 [shape = 'u8[81920]{0}', space=vmem, size = 0x14000, scoped, tag = 'output window, operand 0']
    #allocation8 [shape = 'u8[16384]{0}', space=vmem, size = 0x4000, scoped, tag = 'output window, operand 1']
    #allocation9 [shape = 's32[2]{0}', space=sflag, size = 0x8, scoped, tag = 'scoped memory for multiscale_tcn_forward.3']
    #allocation10 [shape = 'u8[98304]{0}', space=vmem, size = 0x18000, scoped, tag = 'output window, operand 2']
    #allocation11 [shape = 'u8[40960]{0}', space=vmem, size = 0xa000, scoped, tag = 'output window, operand 3, single buffered']
    #allocation12 [shape = 's32[1]{0}', space=sflag, size = 0x4, scoped, tag = 'scoped memory for multiscale_tcn_forward.3']
    #allocation13 [shape = 'u8[8192]{0}', space=vmem, size = 0x2000, scoped, tag = 'output window, operand 4, single buffered']
    #allocation14 [shape = 'u8[49152]{0}', space=vmem, size = 0xc000, scoped, tag = 'output window, operand 5, single buffered']
    #allocation15 [shape = 's32[1]{0}', space=sflag, size = 0x4, scoped, tag = 'scoped memory for multiscale_tcn_forward.3']
    %13 = vsyncpa [#allocation3], 0
    %s14 = scalar_lea.sflag [#allocation3], 1
    %15 = vsyncpa %s14, 0
    %16 = vsyncpa [#allocation6], 0
    %17 = vsyncpa [#allocation4], 0
    %s18 = scalar_lea.sflag [#allocation4], 1
    %19 = vsyncpa %s18, 0
    %20 = vsyncpa [#allocation9], 0
    %s21 = scalar_lea.sflag [#allocation9], 1
    %22 = vsyncpa %s21, 0
    %23 = vsyncpa [#allocation12], 0
    %24 = vsyncpa [#allocation15], 0
    loop: start=0, step=1, limit=4
    $region2: #{multiscale_tcn_forward.3} parent=1 // loop_pre_header
      _
    $region3: #{multiscale_tcn_forward.3} parent=1 // loop_header
      %s26 = sphi 0, %s30
      %p27 = scmp.ge.s32.totalorder %s26, 4
      %s36 = sphi 0, %s38
      %s39 = sphi 0, %s36
      %s40 = sphi 0, %s39
      %s56 = sphi 0, %s40
      %s60 = sphi 0, %s60
      %s62 = sphi 0, %s60
      %s63 = sphi 0, %s62
      %s77 = sphi 0, %s63
      %s83 = sphi 0, %s85
      %s86 = sphi 0, %s83
      %s87 = sphi 0, %s86
      %s103 = sphi 0, %s87
      %s109 = sphi 0, %s111
      %s112 = sphi 0, %s109
      %s113 = sphi 0, %s112
      %s129 = sphi 0, %s113
      %s135 = sphi 0, %s137
      %s138 = sphi 0, %s135
      %s139 = sphi 0, %s138
      %s155 = sphi 0, %s139
      %s159 = sphi 0, %s159
      %s161 = sphi 0, %s159
      %s162 = sphi 0, %s161
      %s176 = sphi 0, %s162
      %s180 = sphi 0, %s180
      %s182 = sphi 0, %s180
      %s183 = sphi 0, %s182
      %s197 = sphi 0, %s183
      %s201 = sphi 0, %s201
      %s203 = sphi 0, %s201
      %s204 = sphi 0, %s203
      %s218 = sphi 0, %s204
    $region4: #{multiscale_tcn_forward.3} parent=1 // loop_header_branch
      %29 = sbr.rel (%p27) target = $region8
    $region5: #{multiscale_tcn_forward.3} parent=1 // loop_body
      %s31 = ssub.s32 %s26, 1
      %s32 = ssub.s32 %s26, 2
      %s33 = sadd.s32 %s26, 1
      %s34 = ssub.s32 %s26, %s33
      %p35 = scmp.eq.s32.totalorder %s34, 0
      %s37 = sadd.s32 %s36, 1
      %s38 = scalar_select %p35, %s36, %s37
      %p41 = pneg %p35
      %p42 = scmp.eq.s32.totalorder %s26, 1
      %p43 = por %p41, %p42
      %p44 = scmp.ne.s32.totalorder %s36, %s39
      %p45 = scmp.eq.s32.totalorder %s26, 0
      %p46 = por %p44, %p45
      %p47 = scmp.ne.s32.totalorder %s36, %s39
      %p48 = scmp.eq.s32.totalorder %s31, 1
      %p49 = por %p47, %p48
      %p50 = scmp.ne.s32.totalorder %s39, %s40
      %p51 = scmp.eq.s32.totalorder %s31, 0
      %p52 = por %p50, %p51
      %p53 = scmp.ne.s32.totalorder %s39, %s40
      %p54 = scmp.eq.s32.totalorder %s32, 1
      %p55 = por %p53, %p54
      %p57 = scmp.ne.s32.totalorder %s40, %s56
      %p58 = scmp.eq.s32.totalorder %s32, 0
      %p59 = por %p57, %p58
      %s61 = sadd.s32 %s60, 1
      %p64 = scmp.eq.s32.totalorder %s26, 1
      %p65 = scmp.ne.s32.totalorder %s60, %s62
      %p66 = scmp.eq.s32.totalorder %s26, 0
      %p67 = por %p65, %p66
      %p68 = scmp.ne.s32.totalorder %s60, %s62
      %p69 = scmp.eq.s32.totalorder %s31, 1
      %p70 = por %p68, %p69
      %p71 = scmp.ne.s32.totalorder %s62, %s63
      %p72 = scmp.eq.s32.totalorder %s31, 0
      %p73 = por %p71, %p72
      %p74 = scmp.ne.s32.totalorder %s62, %s63
      %p75 = scmp.eq.s32.totalorder %s32, 1
      %p76 = por %p74, %p75
      %p78 = scmp.ne.s32.totalorder %s63, %s77
      %p79 = scmp.eq.s32.totalorder %s32, 0
      %p80 = por %p78, %p79
      %s81 = ssub.s32 %s26, %s33
      %p82 = scmp.eq.s32.totalorder %s81, 0
      %s84 = sadd.s32 %s83, 1
      %s85 = scalar_select %p82, %s83, %s84
      %p88 = pneg %p82
      %p89 = scmp.eq.s32.totalorder %s26, 1
      %p90 = por %p88, %p89
      %p91 = scmp.ne.s32.totalorder %s83, %s86
      %p92 = scmp.eq.s32.totalorder %s26, 0
      %p93 = por %p91, %p92
      %p94 = scmp.ne.s32.totalorder %s83, %s86
      %p95 = scmp.eq.s32.totalorder %s31, 1
      %p96 = por %p94, %p95
      %p97 = scmp.ne.s32.totalorder %s86, %s87
      %p98 = scmp.eq.s32.totalorder %s31, 0
      %p99 = por %p97, %p98
      %p100 = scmp.ne.s32.totalorder %s86, %s87
      %p101 = scmp.eq.s32.totalorder %s32, 1
      %p102 = por %p100, %p101
      %p104 = scmp.ne.s32.totalorder %s87, %s103
      %p105 = scmp.eq.s32.totalorder %s32, 0
      %p106 = por %p104, %p105
      %s107 = ssub.s32 %s26, %s33
      %p108 = scmp.eq.s32.totalorder %s107, 0
      %s110 = sadd.s32 %s109, 1
      %s111 = scalar_select %p108, %s109, %s110
      %p114 = pneg %p108
      %p115 = scmp.eq.s32.totalorder %s26, 1
      %p116 = por %p114, %p115
      %p117 = scmp.ne.s32.totalorder %s109, %s112
      %p118 = scmp.eq.s32.totalorder %s26, 0
      %p119 = por %p117, %p118
      %p120 = scmp.ne.s32.totalorder %s109, %s112
      %p121 = scmp.eq.s32.totalorder %s31, 1
      %p122 = por %p120, %p121
      %p123 = scmp.ne.s32.totalorder %s112, %s113
      %p124 = scmp.eq.s32.totalorder %s31, 0
      %p125 = por %p123, %p124
      %p126 = scmp.ne.s32.totalorder %s112, %s113
      %p127 = scmp.eq.s32.totalorder %s32, 1
      %p128 = por %p126, %p127
      %p130 = scmp.ne.s32.totalorder %s113, %s129
      %p131 = scmp.eq.s32.totalorder %s32, 0
      %p132 = por %p130, %p131
      %s133 = ssub.s32 %s26, %s33
      %p134 = scmp.eq.s32.totalorder %s133, 0
      %s136 = sadd.s32 %s135, 1
      %s137 = scalar_select %p134, %s135, %s136
      %p140 = pneg %p134
      %p141 = scmp.eq.s32.totalorder %s26, 1
      %p142 = por %p140, %p141
      %p143 = scmp.ne.s32.totalorder %s135, %s138
      %p144 = scmp.eq.s32.totalorder %s26, 0
      %p145 = por %p143, %p144
      %p146 = scmp.ne.s32.totalorder %s135, %s138
      %p147 = scmp.eq.s32.totalorder %s31, 1
      %p148 = por %p146, %p147
      %p149 = scmp.ne.s32.totalorder %s138, %s139
      %p150 = scmp.eq.s32.totalorder %s31, 0
      %p151 = por %p149, %p150
      %p152 = scmp.ne.s32.totalorder %s138, %s139
      %p153 = scmp.eq.s32.totalorder %s32, 1
      %p154 = por %p152, %p153
      %p156 = scmp.ne.s32.totalorder %s139, %s155
      %p157 = scmp.eq.s32.totalorder %s32, 0
      %p158 = por %p156, %p157
      %s160 = sadd.s32 %s159, 1
      %p163 = scmp.eq.s32.totalorder %s26, 1
      %p164 = scmp.ne.s32.totalorder %s159, %s161
      %p165 = scmp.eq.s32.totalorder %s26, 0
      %p166 = por %p164, %p165
      %p167 = scmp.ne.s32.totalorder %s159, %s161
      %p168 = scmp.eq.s32.totalorder %s31, 1
      %p169 = por %p167, %p168
      %p170 = scmp.ne.s32.totalorder %s161, %s162
      %p171 = scmp.eq.s32.totalorder %s31, 0
      %p172 = por %p170, %p171
      %p173 = scmp.ne.s32.totalorder %s161, %s162
      %p174 = scmp.eq.s32.totalorder %s32, 1
      %p175 = por %p173, %p174
      %p177 = scmp.ne.s32.totalorder %s162, %s176
      %p178 = scmp.eq.s32.totalorder %s32, 0
      %p179 = por %p177, %p178
      %s181 = sadd.s32 %s180, 1
      %p184 = scmp.eq.s32.totalorder %s26, 1
      %p185 = scmp.ne.s32.totalorder %s180, %s182
      %p186 = scmp.eq.s32.totalorder %s26, 0
      %p187 = por %p185, %p186
      %p188 = scmp.ne.s32.totalorder %s180, %s182
      %p189 = scmp.eq.s32.totalorder %s31, 1
      %p190 = por %p188, %p189
      %p191 = scmp.ne.s32.totalorder %s182, %s183
      %p192 = scmp.eq.s32.totalorder %s31, 0
      %p193 = por %p191, %p192
      %p194 = scmp.ne.s32.totalorder %s182, %s183
      %p195 = scmp.eq.s32.totalorder %s32, 1
      %p196 = por %p194, %p195
      %p198 = scmp.ne.s32.totalorder %s183, %s197
      %p199 = scmp.eq.s32.totalorder %s32, 0
      %p200 = por %p198, %p199
      %s202 = sadd.s32 %s201, 1
      %p205 = scmp.eq.s32.totalorder %s26, 1
      %p206 = scmp.ne.s32.totalorder %s201, %s203
      %p207 = scmp.eq.s32.totalorder %s26, 0
      %p208 = por %p206, %p207
      %p209 = scmp.ne.s32.totalorder %s201, %s203
      %p210 = scmp.eq.s32.totalorder %s31, 1
      %p211 = por %p209, %p210
      %p212 = scmp.ne.s32.totalorder %s203, %s204
      %p213 = scmp.eq.s32.totalorder %s31, 0
      %p214 = por %p212, %p213
      %p215 = scmp.ne.s32.totalorder %s203, %s204
      %p216 = scmp.eq.s32.totalorder %s32, 1
      %p217 = por %p215, %p216
      %p219 = scmp.ne.s32.totalorder %s204, %s218
      %p220 = scmp.eq.s32.totalorder %s32, 0
      %p221 = por %p219, %p220
      %p222 = scmp.le.s32.totalorder 1, %s26
      %p223 = scmp.lt.s32.totalorder %s26, 3
      %p224 = pnand %p222, %p223
      %p225 = pneg %p224
      // Predicated region
      $region9: #{multiscale_tcn_forward.3} parent=5 // pred_check
        _
      $region10: #{multiscale_tcn_forward.3} parent=5 // pred_check_branch
        %227 = sbr.rel (%p224) target = $region12
      $region11: #{multiscale_tcn_forward.3} parent=5 // pred_region
        %s228 = ssub.s32 %s26, 1
        // Predicated region
        $region13: #{multiscale_tcn_forward.3} parent=11 // pred_check
          %p229 = pneg %p73
        $region14: #{multiscale_tcn_forward.3} parent=11 // pred_check_branch
          %231 = sbr.rel (%p229) target = $region16
        $region15: #{multiscale_tcn_forward.3} parent=11 // pred_region
          %s233 = ssub.s32 1536, 1536
          %234 = vsyncadd [#allocation6], %s233
          %s235 = sshll.u32 [#allocation5], 4
          %s236 = int_to_ptr.vmem [resolvable:$true] %s235
          %241 = dma.hbm_to_vmem [thread:$0]  %s1, 1536, %s236, [#allocation6], 128, 128, 8
        $region16: #{multiscale_tcn_forward.3} parent=11 // pred_fallthru
          _
      $region12: #{multiscale_tcn_forward.3} parent=5 // pred_fallthru
        _
      %p242 = scmp.lt.s32.totalorder %s26, 2
      // Predicated region
      $region17: #{multiscale_tcn_forward.3} parent=5 // pred_check
        %p243 = pneg %p242
      $region18: #{multiscale_tcn_forward.3} parent=5 // pred_check_branch
        %245 = sbr.rel (%p243) target = $region20
      $region19: #{multiscale_tcn_forward.3} parent=5 // pred_region
        // Predicated region
        $region21: #{multiscale_tcn_forward.3} parent=19 // pred_check
          %p246 = pneg %p46
        $region22: #{multiscale_tcn_forward.3} parent=19 // pred_check_branch
          %248 = sbr.rel (%p246) target = $region24
        $region23: #{multiscale_tcn_forward.3} parent=19 // pred_region
          %s249 = sand.u32 %s36, 1
          %s250 = scalar_lea.sflag [#allocation3], %s249
          %s251 = sand.u32 %s36, 1
          %s252 = smul.addr %s251, 8
          %s253 = scalar_lea.vmem [#allocation2], %s252
          %s255 = ssub.s32 128, 128
          %256 = vsyncadd %s250, %s255
          %s257 = smul.addr %s26, 2
          %s258 = smul.addr %s257, 64
          %s259 = scalar_lea.hbm %s0, %s258
          %s261 = sshll.u32 %s253, 4
          %s262 = int_to_ptr.vmem [resolvable:$true] %s261
          %264 = dma.hbm_to_vmem [thread:$0]  %s259, 128, %s262, %s250
        $region24: #{multiscale_tcn_forward.3} parent=19 // pred_fallthru
          _
      $region20: #{multiscale_tcn_forward.3} parent=5 // pred_fallthru
        _
      %p265 = scmp.le.s32.totalorder 1, %s26
      %p266 = scmp.lt.s32.totalorder %s26, 3
      %p267 = pnand %p265, %p266
      %p268 = pneg %p267
      // Predicated region
      $region25: #{multiscale_tcn_forward.3} parent=5 // pred_check
        _
      $region26: #{multiscale_tcn_forward.3} parent=5 // pred_check_branch
        %270 = sbr.rel (%p267) target = $region28
      $region27: #{multiscale_tcn_forward.3} parent=5 // pred_region
        %s271 = ssub.s32 %s26, 1
        %s272 = sand.u32 %s39, 1
        %s273 = scalar_lea.sflag [#allocation3], %s272
        %s274 = sand.u32 %s39, 1
        %s275 = smul.addr %s274, 8
        %s276 = scalar_lea.vmem [#allocation2], %s275
        // Predicated region
        $region29: #{multiscale_tcn_forward.3} parent=27 // pred_check
          %p277 = pneg %p52
        $region30: #{multiscale_tcn_forward.3} parent=27 // pred_check_branch
          %279 = sbr.rel (%p277) target = $region32
        $region31: #{multiscale_tcn_forward.3} parent=27 // pred_region
          %280 = dma.done %s273, 128
        $region32: #{multiscale_tcn_forward.3} parent=27 // pred_fallthru
          _
        // Predicated region
        $region33: #{multiscale_tcn_forward.3} parent=27 // pred_check
          %p281 = pneg %p73
        $region34: #{multiscale_tcn_forward.3} parent=27 // pred_check_branch
          %283 = sbr.rel (%p281) target = $region36
        $region35: #{multiscale_tcn_forward.3} parent=27 // pred_region
          %284 = dma.done [#allocation6], 1536
        $region36: #{multiscale_tcn_forward.3} parent=27 // pred_fallthru
          _
        %s285 = sand.u32 %s39, 1
        %s286 = scalar_lea.sflag [#allocation3], %s285
        %s287 = sand.u32 %s39, 1
        %s288 = smul.addr %s287, 8
        %s289 = scalar_lea.vmem [#allocation2], %s288
        %p290 = pneg %p52
        %p291 = pneg %p49
        %p292 = pneg %p73
        %p293 = pneg %p70
        %p294 = pneg %p99
        %p295 = pneg %p96
        %s296 = sand.u32 %s86, 1
        %s297 = scalar_lea.sflag [#allocation4], %s296
        %s298 = sand.u32 %s86, 1
        %s299 = smul.addr %s298, 80
        %s300 = scalar_lea.vmem [#allocation7], %s299
        %p301 = pneg %p125
        %p302 = pneg %p122
        %s303 = sand.u32 %s31, 1
        %s304 = scalar_lea.sflag [#allocation9], %s303
        %s305 = sand.u32 %s112, 1
        %s306 = smul.addr %s305, 16
        %s307 = scalar_lea.vmem [#allocation8], %s306
        %p308 = pneg %p151
        %p309 = pneg %p148
        %s310 = sand.u32 %s31, 1
        %s311 = scalar_lea.sflag [#allocation9], %s310
        %s312 = sand.u32 %s138, 1
        %s313 = smul.addr %s312, 96
        %s314 = scalar_lea.vmem [#allocation10], %s313
        %p315 = pneg %p172
        %p316 = pneg %p169
        %p317 = pneg %p193
        %p318 = pneg %p190
        %p319 = pneg %p214
        %p320 = pneg %p211
        %p321 = scmp.eq.s32.totalorder %s31, 0
        // Predicated region
        $region37: #{multiscale_tcn_forward.3} parent=27 // pred_check
          %p322 = pneg %p321
        $region38: #{multiscale_tcn_forward.3} parent=27 // pred_check_branch
          %324 = sbr.rel (%p322) target = $region40
        $region39: #{multiscale_tcn_forward.3} parent=27 // pred_region
          %325 = vst [vmem:[#allocation11] sm:$0xff] 0.0
          %326 = vst [vmem:[#allocation11 + $0x8] sm:$0xff] 0.0
          %327 = vst [vmem:[#allocation11 + $0x10] sm:$0xff] 0.0
          %328 = vst [vmem:[#allocation11 + $0x18] sm:$0xff] 0.0
          %329 = vst [vmem:[#allocation11 + $0x20] sm:$0xff] 0.0
          %330 = vst [vmem:[#allocation11 + $0x28] sm:$0xff] 0.0
          %331 = vst [vmem:[#allocation11 + $0x30] sm:$0xff] 0.0
          %332 = vst [vmem:[#allocation11 + $0x38] sm:$0xff] 0.0
          %333 = vst [vmem:[#allocation11 + $0x40] sm:$0xff] 0.0
          %334 = vst [vmem:[#allocation11 + $0x48] sm:$0xff] 0.0
          %335 = vst [vmem:[#allocation13] sm:$0xff] 0.0
          %336 = vst [vmem:[#allocation13 + $0x8] sm:$0xff] 0.0
          %337 = vst [vmem:[#allocation14] sm:$0xff] 0.0
          %338 = vst [vmem:[#allocation14 + $0x8] sm:$0xff] 0.0
          %339 = vst [vmem:[#allocation14 + $0x10] sm:$0xff] 0.0
          %340 = vst [vmem:[#allocation14 + $0x18] sm:$0xff] 0.0
          %341 = vst [vmem:[#allocation14 + $0x20] sm:$0xff] 0.0
          %342 = vst [vmem:[#allocation14 + $0x28] sm:$0xff] 0.0
          %343 = vst [vmem:[#allocation14 + $0x30] sm:$0xff] 0.0
          %344 = vst [vmem:[#allocation14 + $0x38] sm:$0xff] 0.0
          %345 = vst [vmem:[#allocation14 + $0x40] sm:$0xff] 0.0
          %346 = vst [vmem:[#allocation14 + $0x48] sm:$0xff] 0.0
          %347 = vst [vmem:[#allocation14 + $0x50] sm:$0xff] 0.0
          %348 = vst [vmem:[#allocation14 + $0x58] sm:$0xff] 0.0
        $region40: #{multiscale_tcn_forward.3} parent=27 // pred_fallthru
          _
        %v349 = vld [vmem:[#allocation5] sm:$0xff]
        %v350 = vld [vmem:[#allocation5 + $0x8] sm:$0xff]
        %v351 = vld [vmem:[#allocation5 + $0x10] sm:$0xff]
        %v352 = vld [vmem:[#allocation5 + $0x18] sm:$0xff]
        %v353 = vld [vmem:[#allocation5 + $0x20] sm:$0xff]
        %v354 = vld [vmem:[#allocation5 + $0x28] sm:$0xff]
        %v355 = vld [vmem:[#allocation5 + $0x30] sm:$0xff]
        %v356 = vld [vmem:[#allocation5 + $0x38] sm:$0xff]
        %v357 = vld [vmem:[#allocation5 + $0x40] sm:$0xff]
        %v358 = vld [vmem:[#allocation5 + $0x48] sm:$0xff]
        %v359 = vld [vmem:[#allocation5 + $0x50] sm:$0xff]
        %v360 = vld [vmem:[#allocation5 + $0x58] sm:$0xff]
        %v361 = vld [vmem:[%s276] sm:$0xff]
        %v363 = vcombine.high %v361, %v361
        %vm364 = vcmask 31744
        %v366 = vsel %vm364, %v349, 0
        %v369 = vsel %vm364, %v350, 0
        %v372 = vsel %vm364, %v351, 0
        %v375 = vsel %vm364, %v352, 0
        %v378 = vsel %vm364, %v353, 0
        %v381 = vsel %vm364, %v354, 0
        %v384 = vsel %vm364, %v355, 0
        %v387 = vsel %vm364, %v356, 0
        %v390 = vsel %vm364, %v357, 0
        %v393 = vsel %vm364, %v358, 0
        %v396 = vsel %vm364, %v359, 0
        %v399 = vsel %vm364, %v360, 0
        %vm401 = vcmask 1043456
        %v402 = vsel %vm401, %v361, 0
        %v404 = vsel %vm401, %v363, 0
        %406 = vmatprep.subr.mxu0 %v404
        %407 = vmatpush1.msra.mxu0 %v402
        %408 = vmatprep.subr.mxu0 0.0
        %409 = vmatpush1.msra.mxu0 0.0
        %410 = vmatprep.subr.mxu0 0.0
        %411 = vmatpush1.msra.mxu0 0.0
        %412 = vmatprep.subr.mxu0 0.0
        %413 = vmatpush1.msra.mxu0 0.0
        %414 = vmatprep.subr.mxu0 0.0
        %415 = vmatpush1.msra.mxu0 0.0
        %416 = vmatprep.subr.mxu0 0.0
        %417 = vmatpush1.msra.mxu0 0.0
        %418 = vmatprep.subr.mxu0 0.0
        %419 = vmatpush1.msra.mxu0 0.0
        %420 = vmatprep.subr.mxu0 0.0
        %421 = vmatpush1.msra.mxu0 0.0
        %422 = vmatprep.subr.mxu0 0.0
        %423 = vmatpush1.msra.mxu0 0.0
        %424 = vmatprep.subr.mxu0 0.0
        %425 = vmatpush1.msra.mxu0 0.0
        %426 = vmatprep.subr.mxu0 0.0
        %427 = vmatpush1.msra.mxu0 0.0
        %428 = vmatprep.subr.mxu0 0.0
        %429 = vmatpush1.msra.mxu0 0.0
        %430 = vmatprep.subr.mxu0 0.0
        %431 = vmatpush1.msra.mxu0 0.0
        %432 = vmatprep.subr.mxu0 0.0
        %433 = vmatpush1.msra.mxu0 0.0
        %434 = vmatprep.subr.mxu0 0.0
        %435 = vmatpush1.msra.mxu0 0.0
        %436 = vmatprep.subr.mxu0 0.0
        %437 = vmatpush1.msra.mxu0 0.0
        %438 = vmatprep.subr.mxu0 0.0
        %439 = vmatpush1.msra.mxu0 0.0
        %440 = vmatprep.subr.mxu0 0.0
        %441 = vmatpush1.msra.mxu0 0.0
        %442 = vmatprep.subr.mxu0 0.0
        %443 = vmatpush1.msra.mxu0 0.0
        %444 = vmatprep.subr.mxu0 0.0
        %445 = vmatpush1.msra.mxu0 0.0
        %446 = vmatprep.subr.mxu0 0.0
        %447 = vmatpush1.msra.mxu0 0.0
        %448 = vmatprep.subr.mxu0 0.0
        %449 = vmatpush1.msra.mxu0 0.0
        %450 = vmatprep.subr.mxu0 0.0
        %451 = vmatpush1.msra.mxu0 0.0
        %452 = vmatprep.subr.mxu0 0.0
        %453 = vmatpush1.msra.mxu0 0.0
        %454 = vmatprep.subr.mxu0 0.0
        %455 = vmatpush1.msra.mxu0 0.0
        %456 = vmatprep.subr.mxu0 0.0
        %457 = vmatpush1.msra.mxu0 0.0
        %458 = vmatprep.subr.mxu0 0.0
        %459 = vmatpush1.msra.mxu0 0.0
        %460 = vmatprep.subr.mxu0 0.0
        %461 = vmatpush1.msra.mxu0 0.0
        %462 = vmatprep.subr.mxu0 0.0
        %463 = vmatpush1.msra.mxu0 0.0
        %464 = vmatprep.subr.mxu0 0.0
        %465 = vmatpush1.msra.mxu0 0.0
        %466 = vmatprep.subr.mxu0 0.0
        %467 = vmatpush1.msra.mxu0 0.0
        %468 = vmatprep.subr.mxu0 0.0
        %469 = vmatpush1.msra.mxu0 0.0
        %470 = vmatprep.mubr.f32.mxu0 0.0
        %471 = vmatmul.mubr.f32.gmra.mrb[0].mxu0 %v366
        %v472 = vpop.f32.mrb[0].mxu0
        %v473 = vadd.f32 0.0, %v472
        %v474 = vpop.f32.mrb[0].mxu0
        %v475 = vadd.f32 0.0, %v474
        %476 = vmatprep.mubr.f32.mxu0 0.0
        %477 = vmatmul.mubr.f32.gmra.mrb[0].mxu0 %v369
        %v478 = vpop.f32.mrb[0].mxu0
        %v479 = vadd.f32 0.0, %v478
        %v480 = vpop.f32.mrb[0].mxu0
        %v481 = vadd.f32 0.0, %v480
        %482 = vmatprep.mubr.f32.mxu0 0.0
        %483 = vmatmul.mubr.f32.gmra.mrb[0].mxu0 %v372
        %v484 = vpop.f32.mrb[0].mxu0
        %v485 = vadd.f32 0.0, %v484
        %v486 = vpop.f32.mrb[0].mxu0
        %v487 = vadd.f32 0.0, %v486
        %488 = vmatprep.mubr.f32.mxu0 0.0
        %489 = vmatmul.mubr.f32.gmra.mrb[0].mxu0 %v375
        %v490 = vpop.f32.mrb[0].mxu0
        %v491 = vadd.f32 0.0, %v490
        %v492 = vpop.f32.mrb[0].mxu0
        %v493 = vadd.f32 0.0, %v492
        %494 = vmatprep.mubr.f32.mxu0 0.0
        %495 = vmatmul.mubr.f32.gmra.mrb[0].mxu0 %v378
        %v496 = vpop.f32.mrb[0].mxu0
        %v497 = vadd.f32 0.0, %v496
        %v498 = vpop.f32.mrb[0].mxu0
        %v499 = vadd.f32 0.0, %v498
        %500 = vmatprep.mubr.f32.mxu0 0.0
        %501 = vmatmul.mubr.f32.gmra.mrb[0].mxu0 %v381
        %v502 = vpop.f32.mrb[0].mxu0
        %v503 = vadd.f32 0.0, %v502
        %v504 = vpop.f32.mrb[0].mxu0
        %v505 = vadd.f32 0.0, %v504
        %506 = vmatprep.mubr.f32.mxu0 0.0
        %507 = vmatmul.mubr.f32.gmra.mrb[0].mxu0 %v384
        %v508 = vpop.f32.mrb[0].mxu0
        %v509 = vadd.f32 0.0, %v508
        %v510 = vpop.f32.mrb[0].mxu0
        %v511 = vadd.f32 0.0, %v510
        %512 = vmatprep.mubr.f32.mxu0 0.0
        %513 = vmatmul.mubr.f32.gmra.mrb[0].mxu0 %v387
        %v514 = vpop.f32.mrb[0].mxu0
        %v515 = vadd.f32 0.0, %v514
        %v516 = vpop.f32.mrb[0].mxu0
        %v517 = vadd.f32 0.0, %v516
        %518 = vmatprep.mubr.f32.mxu0 0.0
        %519 = vmatmul.mubr.f32.gmra.mrb[0].mxu0 %v390
        %v520 = vpop.f32.mrb[0].mxu0
        %v521 = vadd.f32 0.0, %v520
        %v522 = vpop.f32.mrb[0].mxu0
        %v523 = vadd.f32 0.0, %v522
        %524 = vmatprep.mubr.f32.mxu0 0.0
        %525 = vmatmul.mubr.f32.gmra.mrb[0].mxu0 %v393
        %v526 = vpop.f32.mrb[0].mxu0
        %v527 = vadd.f32 0.0, %v526
        %v528 = vpop.f32.mrb[0].mxu0
        %v529 = vadd.f32 0.0, %v528
        %530 = vmatprep.mubr.f32.mxu0 0.0
        %531 = vmatmul.mubr.f32.gmra.mrb[0].mxu0 %v396
        %v532 = vpop.f32.mrb[0].mxu0
        %v533 = vadd.f32 0.0, %v532
        %v534 = vpop.f32.mrb[0].mxu0
        %v535 = vadd.f32 0.0, %v534
        %536 = vmatprep.mubr.f32.mxu0 0.0
        %537 = vmatmul.mubr.f32.gmra.mrb[0].mxu0 %v399
        %v538 = vpop.f32.mrb[0].mxu0
        %v539 = vadd.f32 0.0, %v538
        %v540 = vpop.f32.mrb[0].mxu0
        %v541 = vadd.f32 0.0, %v540
        %542 = vdwg.mxu0
        %543 = vst [vmem:[%s300] sm:$0xff] %v473
        %544 = vst [vmem:[%s300 + $0x8] sm:$0xff] %v475
        %545 = vst [vmem:[%s300 + $0x10] sm:$0xff] %v479
        %546 = vst [vmem:[%s300 + $0x18] sm:$0xff] %v481
        %547 = vst [vmem:[%s300 + $0x20] sm:$0xff] %v485
        %548 = vst [vmem:[%s300 + $0x28] sm:$0xff] %v487
        %549 = vst [vmem:[%s300 + $0x30] sm:$0xff] %v491
        %550 = vst [vmem:[%s300 + $0x38] sm:$0xff] %v493
        %551 = vst [vmem:[%s300 + $0x40] sm:$0xff] %v497
        %552 = vst [vmem:[%s300 + $0x48] sm:$0xff] %v499
        %v553 = vmul.f32 %v473, %v473
        %v554 = vmul.f32 %v479, %v479
        %v555 = vmul.f32 %v485, %v485
        %v556 = vmul.f32 %v491, %v491
        %v557 = vmul.f32 %v497, %v497
        %v558 = vadd.f32 %v473, %v475
        %v559 = vadd.f32 %v479, %v481
        %v560 = vadd.f32 %v485, %v487
        %v561 = vadd.f32 %v491, %v493
        %v562 = vadd.f32 %v497, %v499
        %v563 = vmul.f32 %v475, %v475
        %v564 = vmul.f32 %v481, %v481
        %v565 = vmul.f32 %v487, %v487
        %v566 = vmul.f32 %v493, %v493
        %v567 = vmul.f32 %v499, %v499
        %v568 = vadd.f32 %v553, %v563
        %v569 = vadd.f32 %v554, %v564
        %v570 = vadd.f32 %v555, %v565
        %v571 = vadd.f32 %v556, %v566
        %v572 = vadd.f32 %v557, %v567
        %v573 = vld [vmem:[#allocation11] sm:$0xff]
        %v574 = vld [vmem:[#allocation11 + $0x10] sm:$0xff]
        %v575 = vld [vmem:[#allocation11 + $0x20] sm:$0xff]
        %v576 = vld [vmem:[#allocation11 + $0x30] sm:$0xff]
        %v577 = vld [vmem:[#allocation11 + $0x40] sm:$0xff]
        %v578 = vadd.f32 %v573, %v558
        %v579 = vadd.f32 %v574, %v559
        %v580 = vadd.f32 %v575, %v560
        %v581 = vadd.f32 %v576, %v561
        %v582 = vadd.f32 %v577, %v562
        %583 = vst [vmem:[#allocation11] sm:$0xff] %v578
        %584 = vst [vmem:[#allocation11 + $0x10] sm:$0xff] %v579
        %585 = vst [vmem:[#allocation11 + $0x20] sm:$0xff] %v580
        %586 = vst [vmem:[#allocation11 + $0x30] sm:$0xff] %v581
        %587 = vst [vmem:[#allocation11 + $0x40] sm:$0xff] %v582
        %v588 = vld [vmem:[#allocation11 + $0x8] sm:$0xff]
        %v589 = vld [vmem:[#allocation11 + $0x18] sm:$0xff]
        %v590 = vld [vmem:[#allocation11 + $0x28] sm:$0xff]
        %v591 = vld [vmem:[#allocation11 + $0x38] sm:$0xff]
        %v592 = vld [vmem:[#allocation11 + $0x48] sm:$0xff]
        %v593 = vadd.f32 %v588, %v568
        %v594 = vadd.f32 %v589, %v569
        %v595 = vadd.f32 %v590, %v570
        %v596 = vadd.f32 %v591, %v571
        %v597 = vadd.f32 %v592, %v572
        %598 = vst [vmem:[#allocation11 + $0x8] sm:$0xff] %v593
        %599 = vst [vmem:[#allocation11 + $0x18] sm:$0xff] %v594
        %600 = vst [vmem:[#allocation11 + $0x28] sm:$0xff] %v595
        %601 = vst [vmem:[#allocation11 + $0x38] sm:$0xff] %v596
        %602 = vst [vmem:[#allocation11 + $0x48] sm:$0xff] %v597
        %603 = vst [vmem:[%s307] sm:$0xff] %v503
        %604 = vst [vmem:[%s307 + $0x8] sm:$0xff] %v505
        %v605 = vmul.f32 %v503, %v503
        %v606 = vadd.f32 %v503, %v505
        %v607 = vmul.f32 %v505, %v505
        %v608 = vadd.f32 %v605, %v607
        %v609 = vld [vmem:[#allocation13] sm:$0xff]
        %v610 = vadd.f32 %v609, %v606
        %611 = vst [vmem:[#allocation13] sm:$0xff] %v610
        %v612 = vld [vmem:[#allocation13 + $0x8] sm:$0xff]
        %v613 = vadd.f32 %v612, %v608
        %614 = vst [vmem:[#allocation13 + $0x8] sm:$0xff] %v613
        %615 = vst [vmem:[%s314] sm:$0xff] %v509
        %616 = vst [vmem:[%s314 + $0x8] sm:$0xff] %v511
        %617 = vst [vmem:[%s314 + $0x10] sm:$0xff] %v515
        %618 = vst [vmem:[%s314 + $0x18] sm:$0xff] %v517
        %619 = vst [vmem:[%s314 + $0x20] sm:$0xff] %v521
        %620 = vst [vmem:[%s314 + $0x28] sm:$0xff] %v523
        %621 = vst [vmem:[%s314 + $0x30] sm:$0xff] %v527
        %622 = vst [vmem:[%s314 + $0x38] sm:$0xff] %v529
        %623 = vst [vmem:[%s314 + $0x40] sm:$0xff] %v533
        %624 = vst [vmem:[%s314 + $0x48] sm:$0xff] %v535
        %625 = vst [vmem:[%s314 + $0x50] sm:$0xff] %v539
        %626 = vst [vmem:[%s314 + $0x58] sm:$0xff] %v541
        %v627 = vmul.f32 %v509, %v509
        %v628 = vmul.f32 %v515, %v515
        %v629 = vmul.f32 %v521, %v521
        %v630 = vmul.f32 %v527, %v527
        %v631 = vmul.f32 %v533, %v533
        %v632 = vmul.f32 %v539, %v539
        %v633 = vadd.f32 %v509, %v511
        %v634 = vadd.f32 %v515, %v517
        %v635 = vadd.f32 %v521, %v523
        %v636 = vadd.f32 %v527, %v529
        %v637 = vadd.f32 %v533, %v535
        %v638 = vadd.f32 %v539, %v541
        %v639 = vmul.f32 %v511, %v511
        %v640 = vmul.f32 %v517, %v517
        %v641 = vmul.f32 %v523, %v523
        %v642 = vmul.f32 %v529, %v529
        %v643 = vmul.f32 %v535, %v535
        %v644 = vmul.f32 %v541, %v541
        %v645 = vadd.f32 %v627, %v639
        %v646 = vadd.f32 %v628, %v640
        %v647 = vadd.f32 %v629, %v641
        %v648 = vadd.f32 %v630, %v642
        %v649 = vadd.f32 %v631, %v643
        %v650 = vadd.f32 %v632, %v644
        %v651 = vld [vmem:[#allocation14] sm:$0xff]
        %v652 = vld [vmem:[#allocation14 + $0x10] sm:$0xff]
        %v653 = vld [vmem:[#allocation14 + $0x20] sm:$0xff]
        %v654 = vld [vmem:[#allocation14 + $0x30] sm:$0xff]
        %v655 = vld [vmem:[#allocation14 + $0x40] sm:$0xff]
        %v656 = vld [vmem:[#allocation14 + $0x50] sm:$0xff]
        %v657 = vadd.f32 %v651, %v633
        %v658 = vadd.f32 %v652, %v634
        %v659 = vadd.f32 %v653, %v635
        %v660 = vadd.f32 %v654, %v636
        %v661 = vadd.f32 %v655, %v637
        %v662 = vadd.f32 %v656, %v638
        %663 = vst [vmem:[#allocation14] sm:$0xff] %v657
        %664 = vst [vmem:[#allocation14 + $0x10] sm:$0xff] %v658
        %665 = vst [vmem:[#allocation14 + $0x20] sm:$0xff] %v659
        %666 = vst [vmem:[#allocation14 + $0x30] sm:$0xff] %v660
        %667 = vst [vmem:[#allocation14 + $0x40] sm:$0xff] %v661
        %668 = vst [vmem:[#allocation14 + $0x50] sm:$0xff] %v662
        %v669 = vld [vmem:[#allocation14 + $0x8] sm:$0xff]
        %v670 = vld [vmem:[#allocation14 + $0x18] sm:$0xff]
        %v671 = vld [vmem:[#allocation14 + $0x28] sm:$0xff]
        %v672 = vld [vmem:[#allocation14 + $0x38] sm:$0xff]
        %v673 = vld [vmem:[#allocation14 + $0x48] sm:$0xff]
        %v674 = vld [vmem:[#allocation14 + $0x58] sm:$0xff]
        %v675 = vadd.f32 %v669, %v645
        %v676 = vadd.f32 %v670, %v646
        %v677 = vadd.f32 %v671, %v647
        %v678 = vadd.f32 %v672, %v648
        %v679 = vadd.f32 %v673, %v649
        %v680 = vadd.f32 %v674, %v650
        %681 = vst [vmem:[#allocation14 + $0x8] sm:$0xff] %v675
        %682 = vst [vmem:[#allocation14 + $0x18] sm:$0xff] %v676
        %683 = vst [vmem:[#allocation14 + $0x28] sm:$0xff] %v677
        %684 = vst [vmem:[#allocation14 + $0x38] sm:$0xff] %v678
        %685 = vst [vmem:[#allocation14 + $0x48] sm:$0xff] %v679
        %686 = vst [vmem:[#allocation14 + $0x58] sm:$0xff] %v680
        %s687 = sand.u32 %s86, 1
        %s688 = scalar_lea.sflag [#allocation4], %s687
        %s689 = sand.u32 %s86, 1
        %s690 = smul.addr %s689, 80
        %s691 = scalar_lea.vmem [#allocation7], %s690
        %s692 = sand.u32 %s31, 1
        %s693 = scalar_lea.sflag [#allocation9], %s692
        %s694 = sand.u32 %s112, 1
        %s695 = smul.addr %s694, 16
        %s696 = scalar_lea.vmem [#allocation8], %s695
        %s697 = sand.u32 %s31, 1
        %s698 = scalar_lea.sflag [#allocation9], %s697
        %s699 = sand.u32 %s138, 1
        %s700 = smul.addr %s699, 96
        %s701 = scalar_lea.vmem [#allocation10], %s700
        // Predicated region
        $region41: #{multiscale_tcn_forward.3} parent=27 // pred_check
          %p702 = pneg %p96
        $region42: #{multiscale_tcn_forward.3} parent=27 // pred_check_branch
          %704 = sbr.rel (%p702) target = $region44
        $region43: #{multiscale_tcn_forward.3} parent=27 // pred_region
          %s706 = ssub.s32 1280, 1280
          %707 = vsyncadd %s688, %s706
          %s708 = smul.addr %s31, 10
          %s709 = smul.addr %s708, 128
          %s710 = scalar_lea.hbm %s2, %s709
          %s711 = sshll.u32 %s691, 4
          %s712 = int_to_ptr.vmem [resolvable:$true] %s711
          %717 = dma.vmem_to_hbm [thread:$0]  %s712, 1280, %s710, %s688, 256, 256, 16
        $region44: #{multiscale_tcn_forward.3} parent=27 // pred_fallthru
          _
        // Predicated region
        $region45: #{multiscale_tcn_forward.3} parent=27 // pred_check
          %p718 = pneg %p122
        $region46: #{multiscale_tcn_forward.3} parent=27 // pred_check_branch
          %720 = sbr.rel (%p718) target = $region48
        $region47: #{multiscale_tcn_forward.3} parent=27 // pred_region
          %s722 = ssub.s32 256, 256
          %723 = vsyncadd %s693, %s722
          %s724 = smul.addr %s31, 2
          %s725 = smul.addr %s724, 128
          %s726 = scalar_lea.hbm %s3, %s725
          %s728 = sshll.u32 %s696, 4
          %s729 = int_to_ptr.vmem [resolvable:$true] %s728
          %731 = dma.vmem_to_hbm [thread:$0]  %s729, 256, %s726, %s693
        $region48: #{multiscale_tcn_forward.3} parent=27 // pred_fallthru
          _
        // Predicated region
        $region49: #{multiscale_tcn_forward.3} parent=27 // pred_check
          %p732 = pneg %p148
        $region50: #{multiscale_tcn_forward.3} parent=27 // pred_check_branch
          %734 = sbr.rel (%p732) target = $region52
        $region51: #{multiscale_tcn_forward.3} parent=27 // pred_region
          %s736 = ssub.s32 1536, 1536
          %737 = vsyncadd %s698, %s736
          %s738 = smul.addr %s31, 12
          %s739 = smul.addr %s738, 128
          %s740 = scalar_lea.hbm %s4, %s739
          %s741 = sshll.u32 %s701, 4
          %s742 = int_to_ptr.vmem [resolvable:$true] %s741
          %747 = dma.vmem_to_hbm [thread:$0]  %s742, 1536, %s740, %s698, 256, 256, 16
        $region52: #{multiscale_tcn_forward.3} parent=27 // pred_fallthru
          _
        // Predicated region
        $region53: #{multiscale_tcn_forward.3} parent=27 // pred_check
          %p748 = pneg %p169
        $region54: #{multiscale_tcn_forward.3} parent=27 // pred_check_branch
          %750 = sbr.rel (%p748) target = $region56
        $region55: #{multiscale_tcn_forward.3} parent=27 // pred_region
          %s752 = ssub.s32 1280, 1280
          %753 = vsyncadd [#allocation12], %s752
          %s754 = sshll.u32 [#allocation11], 4
          %s755 = int_to_ptr.vmem [resolvable:$true] %s754
          %760 = dma.vmem_to_hbm [thread:$0]  %s755, 1280, %s5, [#allocation12], 256, 256, 16
        $region56: #{multiscale_tcn_forward.3} parent=27 // pred_fallthru
          _
        // Predicated region
        $region57: #{multiscale_tcn_forward.3} parent=27 // pred_check
          %p761 = pneg %p190
        $region58: #{multiscale_tcn_forward.3} parent=27 // pred_check_branch
          %763 = sbr.rel (%p761) target = $region60
        $region59: #{multiscale_tcn_forward.3} parent=27 // pred_region
          %s765 = ssub.s32 256, 256
          %766 = vsyncadd [#allocation12], %s765
          %s768 = sshll.u32 [#allocation13], 4
          %s769 = int_to_ptr.vmem [resolvable:$true] %s768
          %771 = dma.vmem_to_hbm [thread:$0]  %s769, 256, %s6, [#allocation12]
        $region60: #{multiscale_tcn_forward.3} parent=27 // pred_fallthru
          _
        // Predicated region
        $region61: #{multiscale_tcn_forward.3} parent=27 // pred_check
          %p772 = pneg %p211
        $region62: #{multiscale_tcn_forward.3} parent=27 // pred_check_branch
          %774 = sbr.rel (%p772) target = $region64
        $region63: #{multiscale_tcn_forward.3} parent=27 // pred_region
          %s776 = ssub.s32 1536, 1536
          %777 = vsyncadd [#allocation15], %s776
          %s778 = sshll.u32 [#allocation14], 4
          %s779 = int_to_ptr.vmem [resolvable:$true] %s778
          %784 = dma.vmem_to_hbm [thread:$0]  %s779, 1536, %s7, [#allocation15], 256, 256, 16
        $region64: #{multiscale_tcn_forward.3} parent=27 // pred_fallthru
          _
        // Predicated region
        $region65: #{multiscale_tcn_forward.3} parent=27 // pred_check
          %p785 = pneg %p169
        $region66: #{multiscale_tcn_forward.3} parent=27 // pred_check_branch
          %787 = sbr.rel (%p785) target = $region68
        $region67: #{multiscale_tcn_forward.3} parent=27 // pred_region
          %788 = dma.done [#allocation12], 1280
        $region68: #{multiscale_tcn_forward.3} parent=27 // pred_fallthru
          _
        // Predicated region
        $region69: #{multiscale_tcn_forward.3} parent=27 // pred_check
          %p789 = pneg %p190
        $region70: #{multiscale_tcn_forward.3} parent=27 // pred_check_branch
          %791 = sbr.rel (%p789) target = $region72
        $region71: #{multiscale_tcn_forward.3} parent=27 // pred_region
          %792 = dma.done [#allocation12], 256
        $region72: #{multiscale_tcn_forward.3} parent=27 // pred_fallthru
          _
        // Predicated region
        $region73: #{multiscale_tcn_forward.3} parent=27 // pred_check
          %p793 = pneg %p211
        $region74: #{multiscale_tcn_forward.3} parent=27 // pred_check_branch
          %795 = sbr.rel (%p793) target = $region76
        $region75: #{multiscale_tcn_forward.3} parent=27 // pred_region
          %796 = dma.done [#allocation15], 1536
        $region76: #{multiscale_tcn_forward.3} parent=27 // pred_fallthru
          _
      $region28: #{multiscale_tcn_forward.3} parent=5 // pred_fallthru
        _
      %p797 = scmp.le.s32.totalorder 2, %s26
      // Predicated region
      $region77: #{multiscale_tcn_forward.3} parent=5 // pred_check
        %p798 = pneg %p797
      $region78: #{multiscale_tcn_forward.3} parent=5 // pred_check_branch
        %800 = sbr.rel (%p798) target = $region80
      $region79: #{multiscale_tcn_forward.3} parent=5 // pred_region
        %s801 = ssub.s32 %s26, 2
        // Predicated region
        $region81: #{multiscale_tcn_forward.3} parent=79 // pred_check
          %p802 = pneg %p102
        $region82: #{multiscale_tcn_forward.3} parent=79 // pred_check_branch
          %804 = sbr.rel (%p802) target = $region84
        $region83: #{multiscale_tcn_forward.3} parent=79 // pred_region
          %s805 = sand.u32 %s87, 1
          %s806 = scalar_lea.sflag [#allocation4], %s805
          %s807 = sand.u32 %s87, 1
          %s808 = smul.addr %s807, 80
          %s809 = scalar_lea.vmem [#allocation7], %s808
          %810 = dma.done %s806, 1280
        $region84: #{multiscale_tcn_forward.3} parent=79 // pred_fallthru
          _
        // Predicated region
        $region85: #{multiscale_tcn_forward.3} parent=79 // pred_check
          %p811 = pneg %p128
        $region86: #{multiscale_tcn_forward.3} parent=79 // pred_check_branch
          %813 = sbr.rel (%p811) target = $region88
        $region87: #{multiscale_tcn_forward.3} parent=79 // pred_region
          %s814 = sand.u32 %s32, 1
          %s815 = scalar_lea.sflag [#allocation9], %s814
          %s816 = sand.u32 %s113, 1
          %s817 = smul.addr %s816, 16
          %s818 = scalar_lea.vmem [#allocation8], %s817
          %819 = dma.done %s815, 256
        $region88: #{multiscale_tcn_forward.3} parent=79 // pred_fallthru
          _
        // Predicated region
        $region89: #{multiscale_tcn_forward.3} parent=79 // pred_check
          %p820 = pneg %p154
        $region90: #{multiscale_tcn_forward.3} parent=79 // pred_check_branch
          %822 = sbr.rel (%p820) target = $region92
        $region91: #{multiscale_tcn_forward.3} parent=79 // pred_region
          %s823 = sand.u32 %s32, 1
          %s824 = scalar_lea.sflag [#allocation9], %s823
          %s825 = sand.u32 %s139, 1
          %s826 = smul.addr %s825, 96
          %s827 = scalar_lea.vmem [#allocation10], %s826
          %828 = dma.done %s824, 1536
        $region92: #{multiscale_tcn_forward.3} parent=79 // pred_fallthru
          _
      $region80: #{multiscale_tcn_forward.3} parent=5 // pred_fallthru
        _
    $region6: #{multiscale_tcn_forward.3} parent=1 // loop_footer
      %s30 = sadd.s32 1, %s26
    $region7: #{multiscale_tcn_forward.3} parent=1 // loop_footer_branch
      %25 = sbr.rel target = $region3
    $region8: #{multiscale_tcn_forward.3} parent=1 // loop_exit
      _
    %829 = vsyncpa [#allocation3], 1
    %s830 = scalar_lea.sflag [#allocation3], 1
    %831 = vsyncpa %s830, 1
    %832 = vsyncpa [#allocation6], 1
    %833 = vsyncpa [#allocation4], 1
    %s834 = scalar_lea.sflag [#allocation4], 1
    %835 = vsyncpa %s834, 1
    %836 = vsyncpa [#allocation9], 1
    %s837 = scalar_lea.sflag [#allocation9], 1
    %838 = vsyncpa %s837, 1
    %839 = vsyncpa [#allocation12], 1
    %840 = vsyncpa [#allocation15], 1

// kernel: multiscale_tcn_forward.4
$region0: #{multiscale_tcn_forward.4}
  #allocation0 [shape = 'u32[]', space=smem, size = 0x4, offset = 0x4, fixed_abs, tag = 'smem constant byte address 0x4 - core index']
  #allocation1 [shape = 'u32[144,128]{1,0:T(1,128)}', space=vmem, size = 0x12000, scoped, tag = 'internal scratch']
  #allocation2 [shape = 'f32[40,512]{1,0:T(8,128)}', space=vmem, size = 0x14000, scoped, tag = 'scratch operand']
  %s0 = inlined_call_operand.hbm [shape: f32[2,40,256], index: 0, kind: input, shape index: {}]
  %s1 = inlined_call_operand.hbm [shape: f32[40,1], index: 1, kind: input, shape index: {}]
  %s2 = inlined_call_operand.hbm [shape: f32[40,1], index: 2, kind: input, shape index: {}]
  %s3 = inlined_call_operand.hbm [shape: f32[4,8,24], index: 3, kind: input, shape index: {}]
  %s4 = inlined_call_operand.hbm [shape: f32[2,40,256], index: 4, kind: output, shape index: {0}]
  %s5 = inlined_call_operand.hbm [shape: f32[40,256], index: 5, kind: output, shape index: {1}]
  %6 = xla_tuple %s4, %s5
  %s7 = sld [smem:[#allocation0]]
  $region77: #{multiscale_tcn_forward.4} parent=0
    _
  %s9 = ssub.s32 1, %s7
  %s10 = scalar_select 0, %s9, %s7
  $region1: #{multiscale_tcn_forward.4} parent=0
    #allocation3 [shape = 'u8[81920]{0}', space=vmem, size = 0x14000, scoped, tag = 'input window, operand 0']
    #allocation4 [shape = 's32[2]{0}', space=sflag, size = 0x8, scoped, tag = 'scoped memory for multiscale_tcn_forward.4']
    #allocation5 [shape = 's32[2]{0}', space=sflag, size = 0x8, scoped, tag = 'scoped memory for multiscale_tcn_forward.4']
    #allocation6 [shape = 'u8[20480]{0}', space=vmem, size = 0x5000, scoped, tag = 'input window, operand 1, single buffered']
    #allocation7 [shape = 's32[1]{0}', space=sflag, size = 0x4, scoped, tag = 'scoped memory for multiscale_tcn_forward.4']
    #allocation8 [shape = 'u8[20480]{0}', space=vmem, size = 0x5000, scoped, tag = 'input window, operand 2, single buffered']
    #allocation9 [shape = 'u8[16384]{0}', space=vmem, size = 0x4000, scoped, tag = 'input window, operand 3, single buffered']
    #allocation10 [shape = 's32[1]{0}', space=sflag, size = 0x4, scoped, tag = 'scoped memory for multiscale_tcn_forward.4']
    #allocation11 [shape = 'u8[81920]{0}', space=vmem, size = 0x14000, scoped, tag = 'output window, operand 0']
    #allocation12 [shape = 'u8[40960]{0}', space=vmem, size = 0xa000, scoped, tag = 'output window, operand 1, single buffered']
    #allocation13 [shape = 's32[1]{0}', space=sflag, size = 0x4, scoped, tag = 'scoped memory for multiscale_tcn_forward.4']
    %11 = vsyncpa [#allocation4], 0
    %s12 = scalar_lea.sflag [#allocation4], 1
    %13 = vsyncpa %s12, 0
    %14 = vsyncpa [#allocation7], 0
    %15 = vsyncpa [#allocation10], 0
    %16 = vsyncpa [#allocation5], 0
    %s17 = scalar_lea.sflag [#allocation5], 1
    %18 = vsyncpa %s17, 0
    %19 = vsyncpa [#allocation13], 0
    loop: start=0, step=1, limit=4
    $region2: #{multiscale_tcn_forward.4} parent=1 // loop_pre_header
      _
    $region3: #{multiscale_tcn_forward.4} parent=1 // loop_header
      %s21 = sphi 0, %s25
      %p22 = scmp.ge.s32.totalorder %s21, 4
      %s31 = sphi 0, %s33
      %s34 = sphi 0, %s31
      %s35 = sphi 0, %s34
      %s51 = sphi 0, %s35
      %s55 = sphi 0, %s55
      %s57 = sphi 0, %s55
      %s58 = sphi 0, %s57
      %s72 = sphi 0, %s58
      %s76 = sphi 0, %s76
      %s78 = sphi 0, %s76
      %s79 = sphi 0, %s78
      %s93 = sphi 0, %s79
      %s97 = sphi 0, %s97
      %s99 = sphi 0, %s97
      %s100 = sphi 0, %s99
      %s114 = sphi 0, %s100
      %s120 = sphi 0, %s122
      %s123 = sphi 0, %s120
      %s124 = sphi 0, %s123
      %s140 = sphi 0, %s124
      %s144 = sphi 0, %s144
      %s146 = sphi 0, %s144
      %s147 = sphi 0, %s146
      %s161 = sphi 0, %s147
    $region4: #{multiscale_tcn_forward.4} parent=1 // loop_header_branch
      %24 = sbr.rel (%p22) target = $region8
    $region5: #{multiscale_tcn_forward.4} parent=1 // loop_body
      %s26 = ssub.s32 %s21, 1
      %s27 = ssub.s32 %s21, 2
      %s28 = sadd.s32 %s21, 1
      %s29 = ssub.s32 %s21, %s28
      %p30 = scmp.eq.s32.totalorder %s29, 0
      %s32 = sadd.s32 %s31, 1
      %s33 = scalar_select %p30, %s31, %s32
      %p36 = pneg %p30
      %p37 = scmp.eq.s32.totalorder %s21, 1
      %p38 = por %p36, %p37
      %p39 = scmp.ne.s32.totalorder %s31, %s34
      %p40 = scmp.eq.s32.totalorder %s21, 0
      %p41 = por %p39, %p40
      %p42 = scmp.ne.s32.totalorder %s31, %s34
      %p43 = scmp.eq.s32.totalorder %s26, 1
      %p44 = por %p42, %p43
      %p45 = scmp.ne.s32.totalorder %s34, %s35
      %p46 = scmp.eq.s32.totalorder %s26, 0
      %p47 = por %p45, %p46
      %p48 = scmp.ne.s32.totalorder %s34, %s35
      %p49 = scmp.eq.s32.totalorder %s27, 1
      %p50 = por %p48, %p49
      %p52 = scmp.ne.s32.totalorder %s35, %s51
      %p53 = scmp.eq.s32.totalorder %s27, 0
      %p54 = por %p52, %p53
      %s56 = sadd.s32 %s55, 1
      %p59 = scmp.eq.s32.totalorder %s21, 1
      %p60 = scmp.ne.s32.totalorder %s55, %s57
      %p61 = scmp.eq.s32.totalorder %s21, 0
      %p62 = por %p60, %p61
      %p63 = scmp.ne.s32.totalorder %s55, %s57
      %p64 = scmp.eq.s32.totalorder %s26, 1
      %p65 = por %p63, %p64
      %p66 = scmp.ne.s32.totalorder %s57, %s58
      %p67 = scmp.eq.s32.totalorder %s26, 0
      %p68 = por %p66, %p67
      %p69 = scmp.ne.s32.totalorder %s57, %s58
      %p70 = scmp.eq.s32.totalorder %s27, 1
      %p71 = por %p69, %p70
      %p73 = scmp.ne.s32.totalorder %s58, %s72
      %p74 = scmp.eq.s32.totalorder %s27, 0
      %p75 = por %p73, %p74
      %s77 = sadd.s32 %s76, 1
      %p80 = scmp.eq.s32.totalorder %s21, 1
      %p81 = scmp.ne.s32.totalorder %s76, %s78
      %p82 = scmp.eq.s32.totalorder %s21, 0
      %p83 = por %p81, %p82
      %p84 = scmp.ne.s32.totalorder %s76, %s78
      %p85 = scmp.eq.s32.totalorder %s26, 1
      %p86 = por %p84, %p85
      %p87 = scmp.ne.s32.totalorder %s78, %s79
      %p88 = scmp.eq.s32.totalorder %s26, 0
      %p89 = por %p87, %p88
      %p90 = scmp.ne.s32.totalorder %s78, %s79
      %p91 = scmp.eq.s32.totalorder %s27, 1
      %p92 = por %p90, %p91
      %p94 = scmp.ne.s32.totalorder %s79, %s93
      %p95 = scmp.eq.s32.totalorder %s27, 0
      %p96 = por %p94, %p95
      %s98 = sadd.s32 %s97, 1
      %p101 = scmp.eq.s32.totalorder %s21, 1
      %p102 = scmp.ne.s32.totalorder %s97, %s99
      %p103 = scmp.eq.s32.totalorder %s21, 0
      %p104 = por %p102, %p103
      %p105 = scmp.ne.s32.totalorder %s97, %s99
      %p106 = scmp.eq.s32.totalorder %s26, 1
      %p107 = por %p105, %p106
      %p108 = scmp.ne.s32.totalorder %s99, %s100
      %p109 = scmp.eq.s32.totalorder %s26, 0
      %p110 = por %p108, %p109
      %p111 = scmp.ne.s32.totalorder %s99, %s100
      %p112 = scmp.eq.s32.totalorder %s27, 1
      %p113 = por %p111, %p112
      %p115 = scmp.ne.s32.totalorder %s100, %s114
      %p116 = scmp.eq.s32.totalorder %s27, 0
      %p117 = por %p115, %p116
      %s118 = ssub.s32 %s21, %s28
      %p119 = scmp.eq.s32.totalorder %s118, 0
      %s121 = sadd.s32 %s120, 1
      %s122 = scalar_select %p119, %s120, %s121
      %p125 = pneg %p119
      %p126 = scmp.eq.s32.totalorder %s21, 1
      %p127 = por %p125, %p126
      %p128 = scmp.ne.s32.totalorder %s120, %s123
      %p129 = scmp.eq.s32.totalorder %s21, 0
      %p130 = por %p128, %p129
      %p131 = scmp.ne.s32.totalorder %s120, %s123
      %p132 = scmp.eq.s32.totalorder %s26, 1
      %p133 = por %p131, %p132
      %p134 = scmp.ne.s32.totalorder %s123, %s124
      %p135 = scmp.eq.s32.totalorder %s26, 0
      %p136 = por %p134, %p135
      %p137 = scmp.ne.s32.totalorder %s123, %s124
      %p138 = scmp.eq.s32.totalorder %s27, 1
      %p139 = por %p137, %p138
      %p141 = scmp.ne.s32.totalorder %s124, %s140
      %p142 = scmp.eq.s32.totalorder %s27, 0
      %p143 = por %p141, %p142
      %s145 = sadd.s32 %s144, 1
      %p148 = scmp.eq.s32.totalorder %s21, 1
      %p149 = scmp.ne.s32.totalorder %s144, %s146
      %p150 = scmp.eq.s32.totalorder %s21, 0
      %p151 = por %p149, %p150
      %p152 = scmp.ne.s32.totalorder %s144, %s146
      %p153 = scmp.eq.s32.totalorder %s26, 1
      %p154 = por %p152, %p153
      %p155 = scmp.ne.s32.totalorder %s146, %s147
      %p156 = scmp.eq.s32.totalorder %s26, 0
      %p157 = por %p155, %p156
      %p158 = scmp.ne.s32.totalorder %s146, %s147
      %p159 = scmp.eq.s32.totalorder %s27, 1
      %p160 = por %p158, %p159
      %p162 = scmp.ne.s32.totalorder %s147, %s161
      %p163 = scmp.eq.s32.totalorder %s27, 0
      %p164 = por %p162, %p163
      %p165 = scmp.le.s32.totalorder 1, %s21
      %p166 = scmp.lt.s32.totalorder %s21, 3
      %p167 = pnand %p165, %p166
      %p168 = pneg %p167
      // Predicated region
      $region9: #{multiscale_tcn_forward.4} parent=5 // pred_check
        _
      $region10: #{multiscale_tcn_forward.4} parent=5 // pred_check_branch
        %170 = sbr.rel (%p167) target = $region12
      $region11: #{multiscale_tcn_forward.4} parent=5 // pred_region
        %s171 = ssub.s32 %s21, 1
        // Predicated region
        $region13: #{multiscale_tcn_forward.4} parent=11 // pred_check
          %p172 = pneg %p68
        $region14: #{multiscale_tcn_forward.4} parent=11 // pred_check_branch
          %174 = sbr.rel (%p172) target = $region16
        $region15: #{multiscale_tcn_forward.4} parent=11 // pred_region
          %s176 = ssub.s32 640, 640
          %177 = vsyncadd [#allocation7], %s176
          %s178 = sshll.u32 [#allocation6], 4
          %s179 = int_to_ptr.vmem [resolvable:$true] %s178
          %184 = dma.hbm_to_vmem [thread:$0]  %s1, 640, %s179, [#allocation7], 128, 128, 8
        $region16: #{multiscale_tcn_forward.4} parent=11 // pred_fallthru
          _
        // Predicated region
        $region17: #{multiscale_tcn_forward.4} parent=11 // pred_check
          %p185 = pneg %p89
        $region18: #{multiscale_tcn_forward.4} parent=11 // pred_check_branch
          %187 = sbr.rel (%p185) target = $region20
        $region19: #{multiscale_tcn_forward.4} parent=11 // pred_region
          %s189 = ssub.s32 640, 640
          %190 = vsyncadd [#allocation7], %s189
          %s191 = sshll.u32 [#allocation8], 4
          %s192 = int_to_ptr.vmem [resolvable:$true] %s191
          %197 = dma.hbm_to_vmem [thread:$0]  %s2, 640, %s192, [#allocation7], 128, 128, 8
        $region20: #{multiscale_tcn_forward.4} parent=11 // pred_fallthru
          _
        // Predicated region
        $region21: #{multiscale_tcn_forward.4} parent=11 // pred_check
          %p198 = pneg %p110
        $region22: #{multiscale_tcn_forward.4} parent=11 // pred_check_branch
          %200 = sbr.rel (%p198) target = $region24
        $region23: #{multiscale_tcn_forward.4} parent=11 // pred_region
          %s202 = ssub.s32 512, 512
          %203 = vsyncadd [#allocation10], %s202
          %s204 = sshll.u32 [#allocation9], 4
          %s205 = int_to_ptr.vmem [resolvable:$true] %s204
          %210 = dma.hbm_to_vmem [thread:$0]  %s3, 512, %s205, [#allocation10], 128, 128, 8
        $region24: #{multiscale_tcn_forward.4} parent=11 // pred_fallthru
          _
      $region12: #{multiscale_tcn_forward.4} parent=5 // pred_fallthru
        _
      %p211 = scmp.lt.s32.totalorder %s21, 2
      // Predicated region
      $region25: #{multiscale_tcn_forward.4} parent=5 // pred_check
        %p212 = pneg %p211
      $region26: #{multiscale_tcn_forward.4} parent=5 // pred_check_branch
        %214 = sbr.rel (%p212) target = $region28
      $region27: #{multiscale_tcn_forward.4} parent=5 // pred_region
        // Predicated region
        $region29: #{multiscale_tcn_forward.4} parent=27 // pred_check
          %p215 = pneg %p41
        $region30: #{multiscale_tcn_forward.4} parent=27 // pred_check_branch
          %217 = sbr.rel (%p215) target = $region32
        $region31: #{multiscale_tcn_forward.4} parent=27 // pred_region
          %s218 = sand.u32 %s31, 1
          %s219 = scalar_lea.sflag [#allocation4], %s218
          %s220 = sand.u32 %s31, 1
          %s221 = smul.addr %s220, 80
          %s222 = scalar_lea.vmem [#allocation3], %s221
          %s224 = ssub.s32 1280, 1280
          %225 = vsyncadd %s219, %s224
          %s226 = smul.addr %s21, 10
          %s227 = smul.addr %s226, 128
          %s228 = scalar_lea.hbm %s0, %s227
          %s229 = sshll.u32 %s222, 4
          %s230 = int_to_ptr.vmem [resolvable:$true] %s229
          %235 = dma.hbm_to_vmem [thread:$0]  %s228, 1280, %s230, %s219, 256, 256, 16
        $region32: #{multiscale_tcn_forward.4} parent=27 // pred_fallthru
          _
      $region28: #{multiscale_tcn_forward.4} parent=5 // pred_fallthru
        _
      %p236 = scmp.le.s32.totalorder 1, %s21
      %p237 = scmp.lt.s32.totalorder %s21, 3
      %p238 = pnand %p236, %p237
      %p239 = pneg %p238
      // Predicated region
      $region33: #{multiscale_tcn_forward.4} parent=5 // pred_check
        _
      $region34: #{multiscale_tcn_forward.4} parent=5 // pred_check_branch
        %241 = sbr.rel (%p238) target = $region36
      $region35: #{multiscale_tcn_forward.4} parent=5 // pred_region
        %s242 = ssub.s32 %s21, 1
        %s243 = sand.u32 %s34, 1
        %s244 = scalar_lea.sflag [#allocation4], %s243
        %s245 = sand.u32 %s34, 1
        %s246 = smul.addr %s245, 80
        %s247 = scalar_lea.vmem [#allocation3], %s246
        // Predicated region
        $region37: #{multiscale_tcn_forward.4} parent=35 // pred_check
          %p248 = pneg %p47
        $region38: #{multiscale_tcn_forward.4} parent=35 // pred_check_branch
          %250 = sbr.rel (%p248) target = $region40
        $region39: #{multiscale_tcn_forward.4} parent=35 // pred_region
          %251 = dma.done %s244, 1280
        $region40: #{multiscale_tcn_forward.4} parent=35 // pred_fallthru
          _
        // Predicated region
        $region41: #{multiscale_tcn_forward.4} parent=35 // pred_check
          %p252 = pneg %p68
        $region42: #{multiscale_tcn_forward.4} parent=35 // pred_check_branch
          %254 = sbr.rel (%p252) target = $region44
        $region43: #{multiscale_tcn_forward.4} parent=35 // pred_region
          %255 = dma.done [#allocation7], 640
        $region44: #{multiscale_tcn_forward.4} parent=35 // pred_fallthru
          _
        // Predicated region
        $region45: #{multiscale_tcn_forward.4} parent=35 // pred_check
          %p256 = pneg %p89
        $region46: #{multiscale_tcn_forward.4} parent=35 // pred_check_branch
          %258 = sbr.rel (%p256) target = $region48
        $region47: #{multiscale_tcn_forward.4} parent=35 // pred_region
          %259 = dma.done [#allocation7], 640
        $region48: #{multiscale_tcn_forward.4} parent=35 // pred_fallthru
          _
        // Predicated region
        $region49: #{multiscale_tcn_forward.4} parent=35 // pred_check
          %p260 = pneg %p110
        $region50: #{multiscale_tcn_forward.4} parent=35 // pred_check_branch
          %262 = sbr.rel (%p260) target = $region52
        $region51: #{multiscale_tcn_forward.4} parent=35 // pred_region
          %263 = dma.done [#allocation10], 512
        $region52: #{multiscale_tcn_forward.4} parent=35 // pred_fallthru
          _
        %s264 = sand.u32 %s34, 1
        %s265 = scalar_lea.sflag [#allocation4], %s264
        %s266 = sand.u32 %s34, 1
        %s267 = smul.addr %s266, 80
        %s268 = scalar_lea.vmem [#allocation3], %s267
        %p269 = pneg %p47
        %p270 = pneg %p44
        %p271 = pneg %p68
        %p272 = pneg %p65
        %p273 = pneg %p89
        %p274 = pneg %p86
        %p275 = pneg %p110
        %p276 = pneg %p107
        %p277 = pneg %p136
        %p278 = pneg %p133
        %s279 = sand.u32 %s123, 1
        %s280 = scalar_lea.sflag [#allocation5], %s279
        %s281 = sand.u32 %s123, 1
        %s282 = smul.addr %s281, 80
        %s283 = scalar_lea.vmem [#allocation11], %s282
        %p284 = pneg %p157
        %p285 = pneg %p154
        %p286 = scmp.eq.s32.totalorder %s26, 0
        // Predicated region
        $region53: #{multiscale_tcn_forward.4} parent=35 // pred_check
          %p287 = pneg %p286
        $region54: #{multiscale_tcn_forward.4} parent=35 // pred_check_branch
          %289 = sbr.rel (%p287) target = $region56
        $region55: #{multiscale_tcn_forward.4} parent=35 // pred_region
          %290 = vst [vmem:[#allocation12] sm:$0xff] 0.0
          %291 = vst [vmem:[#allocation12 + $0x8] sm:$0xff] 0.0
          %292 = vst [vmem:[#allocation12 + $0x10] sm:$0xff] 0.0
          %293 = vst [vmem:[#allocation12 + $0x18] sm:$0xff] 0.0
          %294 = vst [vmem:[#allocation12 + $0x20] sm:$0xff] 0.0
          %295 = vst [vmem:[#allocation12 + $0x28] sm:$0xff] 0.0
          %296 = vst [vmem:[#allocation12 + $0x30] sm:$0xff] 0.0
          %297 = vst [vmem:[#allocation12 + $0x38] sm:$0xff] 0.0
          %298 = vst [vmem:[#allocation12 + $0x40] sm:$0xff] 0.0
          %299 = vst [vmem:[#allocation12 + $0x48] sm:$0xff] 0.0
          %300 = vst [vmem:[#allocation2] sm:$0xff] 0.0
          %301 = vst [vmem:[#allocation2 + $0x8] sm:$0xff] 0.0
          %302 = vst [vmem:[#allocation2 + $0x10] sm:$0xff] 0.0
          %303 = vst [vmem:[#allocation2 + $0x18] sm:$0xff] 0.0
          %304 = vst [vmem:[#allocation2 + $0x20] sm:$0xff] 0.0
          %305 = vst [vmem:[#allocation2 + $0x28] sm:$0xff] 0.0
          %306 = vst [vmem:[#allocation2 + $0x30] sm:$0xff] 0.0
          %307 = vst [vmem:[#allocation2 + $0x38] sm:$0xff] 0.0
          %308 = vst [vmem:[#allocation2 + $0x40] sm:$0xff] 0.0
          %309 = vst [vmem:[#allocation2 + $0x48] sm:$0xff] 0.0
          %310 = vst [vmem:[#allocation2 + $0x50] sm:$0xff] 0.0
          %311 = vst [vmem:[#allocation2 + $0x58] sm:$0xff] 0.0
          %312 = vst [vmem:[#allocation2 + $0x60] sm:$0xff] 0.0
          %313 = vst [vmem:[#allocation2 + $0x68] sm:$0xff] 0.0
          %314 = vst [vmem:[#allocation2 + $0x70] sm:$0xff] 0.0
          %315 = vst [vmem:[#allocation2 + $0x78] sm:$0xff] 0.0
          %316 = vst [vmem:[#allocation2 + $0x80] sm:$0xff] 0.0
          %317 = vst [vmem:[#allocation2 + $0x88] sm:$0xff] 0.0
          %318 = vst [vmem:[#allocation2 + $0x90] sm:$0xff] 0.0
          %319 = vst [vmem:[#allocation2 + $0x98] sm:$0xff] 0.0
        $region56: #{multiscale_tcn_forward.4} parent=35 // pred_fallthru
          _
        %v320 = vld [vmem:[%s247] sm:$0xff]
        %v321 = vld [vmem:[%s247 + $0x8] sm:$0xff]
        %v322 = vld [vmem:[%s247 + $0x10] sm:$0xff]
        %v323 = vld [vmem:[%s247 + $0x18] sm:$0xff]
        %v324 = vld [vmem:[%s247 + $0x20] sm:$0xff]
        %v325 = vld [vmem:[%s247 + $0x28] sm:$0xff]
        %v326 = vld [vmem:[%s247 + $0x30] sm:$0xff]
        %v327 = vld [vmem:[%s247 + $0x38] sm:$0xff]
        %v328 = vld [vmem:[%s247 + $0x40] sm:$0xff]
        %v329 = vld [vmem:[%s247 + $0x48] sm:$0xff]
        %v330 = vld [vmem:[#allocation6] sm:$0xff]
        %v331 = vld [vmem:[#allocation6 + $0x8] sm:$0xff]
        %v332 = vld [vmem:[#allocation6 + $0x10] sm:$0xff]
        %v333 = vld [vmem:[#allocation6 + $0x18] sm:$0xff]
        %v334 = vld [vmem:[#allocation6 + $0x20] sm:$0xff]
        %336 = vset.pattern.permute.xlu0 0
        %337 = vperm.xlu0 %336, %v330
        %v338 = vpop.permute.xlu0 %337
        %341 = vset.pattern.permute.xlu0 0
        %342 = vperm.xlu0 %341, %v331
        %v343 = vpop.permute.xlu0 %342
        %346 = vset.pattern.permute.xlu0 0
        %347 = vperm.xlu0 %346, %v332
        %v348 = vpop.permute.xlu0 %347
        %351 = vset.pattern.permute.xlu0 0
        %352 = vperm.xlu0 %351, %v333
        %v353 = vpop.permute.xlu0 %352
        %356 = vset.pattern.permute.xlu0 0
        %357 = vperm.xlu0 %356, %v334
        %v358 = vpop.permute.xlu0 %357
        %v360 = vmul.f32 %v320, %v338
        %v361 = vmul.f32 %v321, %v338
        %v362 = vmul.f32 %v322, %v343
        %v363 = vmul.f32 %v323, %v343
        %v364 = vmul.f32 %v324, %v348
        %v365 = vmul.f32 %v325, %v348
        %v366 = vmul.f32 %v326, %v353
        %v367 = vmul.f32 %v327, %v353
        %v368 = vmul.f32 %v328, %v358
        %v369 = vmul.f32 %v329, %v358
        %v370 = vld [vmem:[#allocation8] sm:$0xff]
        %v371 = vld [vmem:[#allocation8 + $0x8] sm:$0xff]
        %v372 = vld [vmem:[#allocation8 + $0x10] sm:$0xff]
        %v373 = vld [vmem:[#allocation8 + $0x18] sm:$0xff]
        %v374 = vld [vmem:[#allocation8 + $0x20] sm:$0xff]
        %376 = vset.pattern.permute.xlu0 0
        %377 = vperm.xlu0 %376, %v370
        %v378 = vpop.permute.xlu0 %377
        %381 = vset.pattern.permute.xlu0 0
        %382 = vperm.xlu0 %381, %v371
        %v383 = vpop.permute.xlu0 %382
        %386 = vset.pattern.permute.xlu0 0
        %387 = vperm.xlu0 %386, %v372
        %v388 = vpop.permute.xlu0 %387
        %391 = vset.pattern.permute.xlu0 0
        %392 = vperm.xlu0 %391, %v373
        %v393 = vpop.permute.xlu0 %392
        %396 = vset.pattern.permute.xlu0 0
        %397 = vperm.xlu0 %396, %v374
        %v398 = vpop.permute.xlu0 %397
        %v400 = vadd.f32 %v360, %v378
        %v401 = vadd.f32 %v361, %v378
        %v402 = vadd.f32 %v362, %v383
        %v403 = vadd.f32 %v363, %v383
        %v404 = vadd.f32 %v364, %v388
        %v405 = vadd.f32 %v365, %v388
        %v406 = vadd.f32 %v366, %v393
        %v407 = vadd.f32 %v367, %v393
        %v408 = vadd.f32 %v368, %v398
        %v409 = vadd.f32 %v369, %v398
        %v410 = vmax.f32 %v400, 0.0
        %v411 = vmax.f32 %v401, 0.0
        %v412 = vmax.f32 %v402, 0.0
        %v413 = vmax.f32 %v403, 0.0
        %v414 = vmax.f32 %v404, 0.0
        %v415 = vmax.f32 %v405, 0.0
        %v416 = vmax.f32 %v406, 0.0
        %v417 = vmax.f32 %v407, 0.0
        %v418 = vmax.f32 %v408, 0.0
        %v419 = vmax.f32 %v409, 0.0
        %420 = vst [vmem:[#allocation2 + $0x8] sm:$0xff] %v410
        %421 = vst [vmem:[#allocation2 + $0x10] sm:$0xff] %v411
        %422 = vst [vmem:[#allocation2 + $0x28] sm:$0xff] %v412
        %423 = vst [vmem:[#allocation2 + $0x30] sm:$0xff] %v413
        %424 = vst [vmem:[#allocation2 + $0x48] sm:$0xff] %v414
        %425 = vst [vmem:[#allocation2 + $0x50] sm:$0xff] %v415
        %426 = vst [vmem:[#allocation2 + $0x68] sm:$0xff] %v416
        %427 = vst [vmem:[#allocation2 + $0x70] sm:$0xff] %v417
        %428 = vst [vmem:[#allocation2 + $0x88] sm:$0xff] %v418
        %429 = vst [vmem:[#allocation2 + $0x90] sm:$0xff] %v419
        %v430 = vld [vmem:[#allocation2] sm:$0xff]
        %v431 = vld [vmem:[#allocation2 + $0x8] sm:$0xff]
        %v432 = vld [vmem:[#allocation2 + $0x10] sm:$0xff]
        %v433 = vld [vmem:[#allocation2 + $0x18] sm:$0xff]
        %436 = vrot.lane.b32.xlu0 %v431, 112
        %v437 = vpop.permute.xlu0 %436
        %438 = vrot.lane.b32.xlu0 %v432, 112
        %v439 = vpop.permute.xlu0 %438
        %vm440 = vcmask 916480
        %v441 = vsel %vm440, %v437, %v439
        %443 = vrot.lane.b32.xlu0 %v431, 96
        %v444 = vpop.permute.xlu0 %443
        %445 = vrot.lane.b32.xlu0 %v432, 96
        %v446 = vpop.permute.xlu0 %445
        %447 = vrot.lane.b32.xlu0 %v433, 96
        %v448 = vpop.permute.xlu0 %447
        %vm449 = vcmask 785408
        %v450 = vsel %vm449, %v444, %v446
        %v451 = vsel %vm449, %v446, %v448
        %v452 = vld [vmem:[#allocation9] sm:$0xff]
        %454 = vrot.lane.b32.xlu0 %v430, 16
        %v455 = vpop.permute.xlu0 %454
        %456 = vrot.lane.b32.xlu0 %v431, 16
        %v457 = vpop.permute.xlu0 %456
        %458 = vrot.lane.b32.xlu0 %v432, 16
        %v459 = vpop.permute.xlu0 %458
        %460 = vrot.lane.b32.xlu0 %v437, 16
        %v461 = vpop.permute.xlu0 %460
        %462 = vrot.lane.b32.xlu0 %v441, 16
        %v463 = vpop.permute.xlu0 %462
        %464 = vrot.lane.b32.xlu0 %v439, 16
        %v465 = vpop.permute.xlu0 %464
        %466 = vrot.lane.b32.xlu0 %v444, 16
        %v467 = vpop.permute.xlu0 %466
        %468 = vrot.lane.b32.xlu0 %v450, 16
        %v469 = vpop.permute.xlu0 %468
        %470 = vrot.lane.b32.xlu0 %v451, 16
        %v471 = vpop.permute.xlu0 %470
        %vm472 = vcmask 130048
        %v473 = vsel %vm472, %v455, %v457
        %v474 = vsel %vm472, %v457, %v459
        %v475 = vsel %vm472, %v461, %v463
        %v476 = vsel %vm472, %v463, %v465
        %v477 = vsel %vm472, %v467, %v469
        %v478 = vsel %vm472, %v469, %v471
        %vm485 = vcmask 195584
        %v487 = vsel %vm485, %v452, 0
        %489 = vmatprep.subr.mxu0 %v474
        %490 = vmatpush1.msra.mxu0 %v473
        %491 = vmatprep.subr.mxu0 %v476
        %492 = vmatpush1.msra.mxu0 %v475
        %493 = vmatprep.subr.mxu0 %v478
        %494 = vmatpush1.msra.mxu0 %v477
        %495 = vmatprep.subr.mxu0 0.0
        %496 = vmatpush1.msra.mxu0 0.0
        %497 = vmatprep.subr.mxu0 0.0
        %498 = vmatpush1.msra.mxu0 0.0
        %499 = vmatprep.subr.mxu0 0.0
        %500 = vmatpush1.msra.mxu0 0.0
        %501 = vmatprep.subr.mxu0 0.0
        %502 = vmatpush1.msra.mxu0 0.0
        %503 = vmatprep.subr.mxu0 0.0
        %504 = vmatpush1.msra.mxu0 0.0
        %505 = vmatprep.subr.mxu0 0.0
        %506 = vmatpush1.msra.mxu0 0.0
        %507 = vmatprep.subr.mxu0 0.0
        %508 = vmatpush1.msra.mxu0 0.0
        %509 = vmatprep.subr.mxu0 0.0
        %510 = vmatpush1.msra.mxu0 0.0
        %511 = vmatprep.subr.mxu0 0.0
        %512 = vmatpush1.msra.mxu0 0.0
        %513 = vmatprep.subr.mxu0 0.0
        %514 = vmatpush1.msra.mxu0 0.0
        %515 = vmatprep.subr.mxu0 0.0
        %516 = vmatpush1.msra.mxu0 0.0
        %517 = vmatprep.subr.mxu0 0.0
        %518 = vmatpush1.msra.mxu0 0.0
        %519 = vmatprep.subr.mxu0 0.0
        %520 = vmatpush1.msra.mxu0 0.0
        %521 = vmatprep.subr.mxu0 0.0
        %522 = vmatpush1.msra.mxu0 0.0
        %523 = vmatprep.subr.mxu0 0.0
        %524 = vmatpush1.msra.mxu0 0.0
        %525 = vmatprep.subr.mxu0 0.0
        %526 = vmatpush1.msra.mxu0 0.0
        %527 = vmatprep.subr.mxu0 0.0
        %528 = vmatpush1.msra.mxu0 0.0
        %529 = vmatprep.subr.mxu0 0.0
        %530 = vmatpush1.msra.mxu0 0.0
        %531 = vmatprep.subr.mxu0 0.0
        %532 = vmatpush1.msra.mxu0 0.0
        %533 = vmatprep.subr.mxu0 0.0
        %534 = vmatpush1.msra.mxu0 0.0
        %535 = vmatprep.subr.mxu0 0.0
        %536 = vmatpush1.msra.mxu0 0.0
        %537 = vmatprep.subr.mxu0 0.0
        %538 = vmatpush1.msra.mxu0 0.0
        %539 = vmatprep.subr.mxu0 0.0
        %540 = vmatpush1.msra.mxu0 0.0
        %541 = vmatprep.subr.mxu0 0.0
        %542 = vmatpush1.msra.mxu0 0.0
        %543 = vmatprep.subr.mxu0 0.0
        %544 = vmatpush1.msra.mxu0 0.0
        %545 = vmatprep.subr.mxu0 0.0
        %546 = vmatpush1.msra.mxu0 0.0
        %547 = vmatprep.subr.mxu0 0.0
        %548 = vmatpush1.msra.mxu0 0.0
        %549 = vmatprep.subr.mxu0 0.0
        %550 = vmatpush1.msra.mxu0 0.0
        %551 = vmatprep.subr.mxu0 0.0
        %552 = vmatpush1.msra.mxu0 0.0
        %553 = vmatprep.mubr.f32.mxu0 0.0
        %554 = vmatmul.mubr.f32.gmra.mrb[0].mxu0 %v487
        %v555 = vpop.f32.mrb[0].mxu0
        %v556 = vadd.f32 0.0, %v555
        %v557 = vpop.f32.mrb[0].mxu0
        %v558 = vadd.f32 0.0, %v557
        %559 = vdwg.mxu0
        %560 = vst [vmem:[%s283] sm:$0xff] %v556
        %561 = vst [vmem:[%s283 + $0x8] sm:$0xff] %v558
        %v562 = vmul.f32 %v556, %v556
        %v563 = vadd.f32 %v556, %v558
        %v564 = vmul.f32 %v558, %v558
        %v565 = vadd.f32 %v562, %v564
        %v566 = vld [vmem:[#allocation12] sm:$0xff]
        %v567 = vadd.f32 %v566, %v563
        %568 = vst [vmem:[#allocation12] sm:$0xff] %v567
        %v569 = vld [vmem:[#allocation12 + $0x8] sm:$0xff]
        %v570 = vadd.f32 %v569, %v565
        %571 = vst [vmem:[#allocation12 + $0x8] sm:$0xff] %v570
        %v572 = vld [vmem:[#allocation2 + $0x20] sm:$0xff]
        %v573 = vld [vmem:[#allocation2 + $0x28] sm:$0xff]
        %v574 = vld [vmem:[#allocation2 + $0x30] sm:$0xff]
        %v575 = vld [vmem:[#allocation2 + $0x38] sm:$0xff]
        %578 = vrot.lane.b32.xlu0 %v573, 96
        %v579 = vpop.permute.xlu0 %578
        %580 = vrot.lane.b32.xlu0 %v574, 96
        %v581 = vpop.permute.xlu0 %580
        %v582 = vsel %vm449, %v579, %v581
        %584 = vrot.lane.b32.xlu0 %v573, 64
        %v585 = vpop.permute.xlu0 %584
        %586 = vrot.lane.b32.xlu0 %v574, 64
        %v587 = vpop.permute.xlu0 %586
        %588 = vrot.lane.b32.xlu0 %v575, 64
        %v589 = vpop.permute.xlu0 %588
        %vm590 = vcmask 523264
        %v591 = vsel %vm590, %v585, %v587
        %v592 = vsel %vm590, %v587, %v589
        %s593 = scalar_lea.vmem [#allocation9], 8
        %v594 = vld [vmem:[%s593] sm:$0xff]
        %596 = vrot.lane.b32.xlu0 %v572, 32
        %v597 = vpop.permute.xlu0 %596
        %598 = vrot.lane.b32.xlu0 %v573, 32
        %v599 = vpop.permute.xlu0 %598
        %600 = vrot.lane.b32.xlu0 %v574, 32
        %v601 = vpop.permute.xlu0 %600
        %602 = vrot.lane.b32.xlu0 %v579, 32
        %v603 = vpop.permute.xlu0 %602
        %604 = vrot.lane.b32.xlu0 %v582, 32
        %v605 = vpop.permute.xlu0 %604
        %606 = vrot.lane.b32.xlu0 %v581, 32
        %v607 = vpop.permute.xlu0 %606
        %608 = vrot.lane.b32.xlu0 %v585, 32
        %v609 = vpop.permute.xlu0 %608
        %610 = vrot.lane.b32.xlu0 %v591, 32
        %v611 = vpop.permute.xlu0 %610
        %612 = vrot.lane.b32.xlu0 %v592, 32
        %v613 = vpop.permute.xlu0 %612
        %vm614 = vcmask 261120
        %v615 = vsel %vm614, %v597, %v599
        %v616 = vsel %vm614, %v599, %v601
        %v617 = vsel %vm614, %v603, %v605
        %v618 = vsel %vm614, %v605, %v607
        %v619 = vsel %vm614, %v609, %v611
        %v620 = vsel %vm614, %v611, %v613
        %v628 = vsel %vm485, %v594, 0
        %630 = vmatprep.subr.mxu0 %v616
        %631 = vmatpush1.msra.mxu0 %v615
        %632 = vmatprep.subr.mxu0 %v618
        %633 = vmatpush1.msra.mxu0 %v617
        %634 = vmatprep.subr.mxu0 %v620
        %635 = vmatpush1.msra.mxu0 %v619
        %636 = vmatprep.subr.mxu0 0.0
        %637 = vmatpush1.msra.mxu0 0.0
        %638 = vmatprep.subr.mxu0 0.0
        %639 = vmatpush1.msra.mxu0 0.0
        %640 = vmatprep.subr.mxu0 0.0
        %641 = vmatpush1.msra.mxu0 0.0
        %642 = vmatprep.subr.mxu0 0.0
        %643 = vmatpush1.msra.mxu0 0.0
        %644 = vmatprep.subr.mxu0 0.0
        %645 = vmatpush1.msra.mxu0 0.0
        %646 = vmatprep.subr.mxu0 0.0
        %647 = vmatpush1.msra.mxu0 0.0
        %648 = vmatprep.subr.mxu0 0.0
        %649 = vmatpush1.msra.mxu0 0.0
        %650 = vmatprep.subr.mxu0 0.0
        %651 = vmatpush1.msra.mxu0 0.0
        %652 = vmatprep.subr.mxu0 0.0
        %653 = vmatpush1.msra.mxu0 0.0
        %654 = vmatprep.subr.mxu0 0.0
        %655 = vmatpush1.msra.mxu0 0.0
        %656 = vmatprep.subr.mxu0 0.0
        %657 = vmatpush1.msra.mxu0 0.0
        %658 = vmatprep.subr.mxu0 0.0
        %659 = vmatpush1.msra.mxu0 0.0
        %660 = vmatprep.subr.mxu0 0.0
        %661 = vmatpush1.msra.mxu0 0.0
        %662 = vmatprep.subr.mxu0 0.0
        %663 = vmatpush1.msra.mxu0 0.0
        %664 = vmatprep.subr.mxu0 0.0
        %665 = vmatpush1.msra.mxu0 0.0
        %666 = vmatprep.subr.mxu0 0.0
        %667 = vmatpush1.msra.mxu0 0.0
        %668 = vmatprep.subr.mxu0 0.0
        %669 = vmatpush1.msra.mxu0 0.0
        %670 = vmatprep.subr.mxu0 0.0
        %671 = vmatpush1.msra.mxu0 0.0
        %672 = vmatprep.subr.mxu0 0.0
        %673 = vmatpush1.msra.mxu0 0.0
        %674 = vmatprep.subr.mxu0 0.0
        %675 = vmatpush1.msra.mxu0 0.0
        %676 = vmatprep.subr.mxu0 0.0
        %677 = vmatpush1.msra.mxu0 0.0
        %678 = vmatprep.subr.mxu0 0.0
        %679 = vmatpush1.msra.mxu0 0.0
        %680 = vmatprep.subr.mxu0 0.0
        %681 = vmatpush1.msra.mxu0 0.0
        %682 = vmatprep.subr.mxu0 0.0
        %683 = vmatpush1.msra.mxu0 0.0
        %684 = vmatprep.subr.mxu0 0.0
        %685 = vmatpush1.msra.mxu0 0.0
        %686 = vmatprep.subr.mxu0 0.0
        %687 = vmatpush1.msra.mxu0 0.0
        %688 = vmatprep.subr.mxu0 0.0
        %689 = vmatpush1.msra.mxu0 0.0
        %690 = vmatprep.subr.mxu0 0.0
        %691 = vmatpush1.msra.mxu0 0.0
        %692 = vmatprep.subr.mxu0 0.0
        %693 = vmatpush1.msra.mxu0 0.0
        %694 = vmatprep.mubr.f32.mxu0 0.0
        %695 = vmatmul.mubr.f32.gmra.mrb[0].mxu0 %v628
        %v696 = vpop.f32.mrb[0].mxu0
        %v697 = vadd.f32 0.0, %v696
        %v698 = vpop.f32.mrb[0].mxu0
        %v699 = vadd.f32 0.0, %v698
        %700 = vdwg.mxu0
        %701 = vst [vmem:[%s283 + $0x10] sm:$0xff] %v697
        %702 = vst [vmem:[%s283 + $0x18] sm:$0xff] %v699
        %v703 = vmul.f32 %v697, %v697
        %v704 = vadd.f32 %v697, %v699
        %v705 = vmul.f32 %v699, %v699
        %v706 = vadd.f32 %v703, %v705
        %v707 = vld [vmem:[#allocation12 + $0x10] sm:$0xff]
        %v708 = vadd.f32 %v707, %v704
        %709 = vst [vmem:[#allocation12 + $0x10] sm:$0xff] %v708
        %v710 = vld [vmem:[#allocation12 + $0x18] sm:$0xff]
        %v711 = vadd.f32 %v710, %v706
        %712 = vst [vmem:[#allocation12 + $0x18] sm:$0xff] %v711
        %v713 = vld [vmem:[#allocation2 + $0x40] sm:$0xff]
        %v714 = vld [vmem:[#allocation2 + $0x48] sm:$0xff]
        %v715 = vld [vmem:[#allocation2 + $0x50] sm:$0xff]
        %v716 = vld [vmem:[#allocation2 + $0x58] sm:$0xff]
        %719 = vrot.lane.b32.xlu0 %v714, 80
        %v720 = vpop.permute.xlu0 %719
        %721 = vrot.lane.b32.xlu0 %v715, 80
        %v722 = vpop.permute.xlu0 %721
        %vm723 = vcmask 654336
        %v724 = vsel %vm723, %v720, %v722
        %726 = vrot.lane.b32.xlu0 %v714, 32
        %v727 = vpop.permute.xlu0 %726
        %728 = vrot.lane.b32.xlu0 %v715, 32
        %v729 = vpop.permute.xlu0 %728
        %730 = vrot.lane.b32.xlu0 %v716, 32
        %v731 = vpop.permute.xlu0 %730
        %v732 = vsel %vm614, %v727, %v729
        %v733 = vsel %vm614, %v729, %v731
        %s734 = scalar_lea.vmem [#allocation9], 16
        %v735 = vld [vmem:[%s734] sm:$0xff]
        %737 = vrot.lane.b32.xlu0 %v713, 48
        %v738 = vpop.permute.xlu0 %737
        %739 = vrot.lane.b32.xlu0 %v714, 48
        %v740 = vpop.permute.xlu0 %739
        %741 = vrot.lane.b32.xlu0 %v715, 48
        %v742 = vpop.permute.xlu0 %741
        %743 = vrot.lane.b32.xlu0 %v720, 48
        %v744 = vpop.permute.xlu0 %743
        %745 = vrot.lane.b32.xlu0 %v724, 48
        %v746 = vpop.permute.xlu0 %745
        %747 = vrot.lane.b32.xlu0 %v722, 48
        %v748 = vpop.permute.xlu0 %747
        %749 = vrot.lane.b32.xlu0 %v727, 48
        %v750 = vpop.permute.xlu0 %749
        %751 = vrot.lane.b32.xlu0 %v732, 48
        %v752 = vpop.permute.xlu0 %751
        %753 = vrot.lane.b32.xlu0 %v733, 48
        %v754 = vpop.permute.xlu0 %753
        %vm755 = vcmask 392192
        %v756 = vsel %vm755, %v738, %v740
        %v757 = vsel %vm755, %v740, %v742
        %v758 = vsel %vm755, %v744, %v746
        %v759 = vsel %vm755, %v746, %v748
        %v760 = vsel %vm755, %v750, %v752
        %v761 = vsel %vm755, %v752, %v754
        %v769 = vsel %vm485, %v735, 0
        %771 = vmatprep.subr.mxu0 %v757
        %772 = vmatpush1.msra.mxu0 %v756
        %773 = vmatprep.subr.mxu0 %v759
        %774 = vmatpush1.msra.mxu0 %v758
        %775 = vmatprep.subr.mxu0 %v761
        %776 = vmatpush1.msra.mxu0 %v760
        %777 = vmatprep.subr.mxu0 0.0
        %778 = vmatpush1.msra.mxu0 0.0
        %779 = vmatprep.subr.mxu0 0.0
        %780 = vmatpush1.msra.mxu0 0.0
        %781 = vmatprep.subr.mxu0 0.0
        %782 = vmatpush1.msra.mxu0 0.0
        %783 = vmatprep.subr.mxu0 0.0
        %784 = vmatpush1.msra.mxu0 0.0
        %785 = vmatprep.subr.mxu0 0.0
        %786 = vmatpush1.msra.mxu0 0.0
        %787 = vmatprep.subr.mxu0 0.0
        %788 = vmatpush1.msra.mxu0 0.0
        %789 = vmatprep.subr.mxu0 0.0
        %790 = vmatpush1.msra.mxu0 0.0
        %791 = vmatprep.subr.mxu0 0.0
        %792 = vmatpush1.msra.mxu0 0.0
        %793 = vmatprep.subr.mxu0 0.0
        %794 = vmatpush1.msra.mxu0 0.0
        %795 = vmatprep.subr.mxu0 0.0
        %796 = vmatpush1.msra.mxu0 0.0
        %797 = vmatprep.subr.mxu0 0.0
        %798 = vmatpush1.msra.mxu0 0.0
        %799 = vmatprep.subr.mxu0 0.0
        %800 = vmatpush1.msra.mxu0 0.0
        %801 = vmatprep.subr.mxu0 0.0
        %802 = vmatpush1.msra.mxu0 0.0
        %803 = vmatprep.subr.mxu0 0.0
        %804 = vmatpush1.msra.mxu0 0.0
        %805 = vmatprep.subr.mxu0 0.0
        %806 = vmatpush1.msra.mxu0 0.0
        %807 = vmatprep.subr.mxu0 0.0
        %808 = vmatpush1.msra.mxu0 0.0
        %809 = vmatprep.subr.mxu0 0.0
        %810 = vmatpush1.msra.mxu0 0.0
        %811 = vmatprep.subr.mxu0 0.0
        %812 = vmatpush1.msra.mxu0 0.0
        %813 = vmatprep.subr.mxu0 0.0
        %814 = vmatpush1.msra.mxu0 0.0
        %815 = vmatprep.subr.mxu0 0.0
        %816 = vmatpush1.msra.mxu0 0.0
        %817 = vmatprep.subr.mxu0 0.0
        %818 = vmatpush1.msra.mxu0 0.0
        %819 = vmatprep.subr.mxu0 0.0
        %820 = vmatpush1.msra.mxu0 0.0
        %821 = vmatprep.subr.mxu0 0.0
        %822 = vmatpush1.msra.mxu0 0.0
        %823 = vmatprep.subr.mxu0 0.0
        %824 = vmatpush1.msra.mxu0 0.0
        %825 = vmatprep.subr.mxu0 0.0
        %826 = vmatpush1.msra.mxu0 0.0
        %827 = vmatprep.subr.mxu0 0.0
        %828 = vmatpush1.msra.mxu0 0.0
        %829 = vmatprep.subr.mxu0 0.0
        %830 = vmatpush1.msra.mxu0 0.0
        %831 = vmatprep.subr.mxu0 0.0
        %832 = vmatpush1.msra.mxu0 0.0
        %833 = vmatprep.subr.mxu0 0.0
        %834 = vmatpush1.msra.mxu0 0.0
        %835 = vmatprep.mubr.f32.mxu0 0.0
        %836 = vmatmul.mubr.f32.gmra.mrb[0].mxu0 %v769
        %v837 = vpop.f32.mrb[0].mxu0
        %v838 = vadd.f32 0.0, %v837
        %v839 = vpop.f32.mrb[0].mxu0
        %v840 = vadd.f32 0.0, %v839
        %841 = vdwg.mxu0
        %842 = vst [vmem:[%s283 + $0x20] sm:$0xff] %v838
        %843 = vst [vmem:[%s283 + $0x28] sm:$0xff] %v840
        %v844 = vmul.f32 %v838, %v838
        %v845 = vadd.f32 %v838, %v840
        %v846 = vmul.f32 %v840, %v840
        %v847 = vadd.f32 %v844, %v846
        %v848 = vld [vmem:[#allocation12 + $0x20] sm:$0xff]
        %v849 = vadd.f32 %v848, %v845
        %850 = vst [vmem:[#allocation12 + $0x20] sm:$0xff] %v849
        %v851 = vld [vmem:[#allocation12 + $0x28] sm:$0xff]
        %v852 = vadd.f32 %v851, %v847
        %853 = vst [vmem:[#allocation12 + $0x28] sm:$0xff] %v852
        %v854 = vld [vmem:[#allocation2 + $0x60] sm:$0xff]
        %v855 = vld [vmem:[#allocation2 + $0x68] sm:$0xff]
        %v856 = vld [vmem:[#allocation2 + $0x70] sm:$0xff]
        %v857 = vld [vmem:[#allocation2 + $0x78] sm:$0xff]
        %860 = vrot.lane.b32.xlu0 %v855, 64
        %v861 = vpop.permute.xlu0 %860
        %862 = vrot.lane.b32.xlu0 %v856, 64
        %v863 = vpop.permute.xlu0 %862
        %v864 = vsel %vm590, %v861, %v863
        %s865 = scalar_lea.vmem [#allocation9], 24
        %v866 = vld [vmem:[%s865] sm:$0xff]
        %869 = vrot.lane.b32.xlu0 %v854, 64
        %v870 = vpop.permute.xlu0 %869
        %871 = vrot.lane.b32.xlu0 %v861, 64
        %v872 = vpop.permute.xlu0 %871
        %873 = vrot.lane.b32.xlu0 %v864, 64
        %v874 = vpop.permute.xlu0 %873
        %875 = vrot.lane.b32.xlu0 %v863, 64
        %v876 = vpop.permute.xlu0 %875
        %877 = vrot.lane.b32.xlu0 %v857, 64
        %v878 = vpop.permute.xlu0 %877
        %v879 = vsel %vm590, %v870, %v861
        %v880 = vsel %vm590, %v872, %v874
        %v881 = vsel %vm590, %v874, %v876
        %v882 = vsel %vm590, %v863, %v878
        %v889 = vsel %vm485, %v866, 0
        %891 = vmatprep.subr.mxu0 %v864
        %892 = vmatpush1.msra.mxu0 %v879
        %893 = vmatprep.subr.mxu0 %v881
        %894 = vmatpush1.msra.mxu0 %v880
        %895 = vmatprep.subr.mxu0 %v882
        %896 = vmatpush1.msra.mxu0 %v864
        %897 = vmatprep.subr.mxu0 0.0
        %898 = vmatpush1.msra.mxu0 0.0
        %899 = vmatprep.subr.mxu0 0.0
        %900 = vmatpush1.msra.mxu0 0.0
        %901 = vmatprep.subr.mxu0 0.0
        %902 = vmatpush1.msra.mxu0 0.0
        %903 = vmatprep.subr.mxu0 0.0
        %904 = vmatpush1.msra.mxu0 0.0
        %905 = vmatprep.subr.mxu0 0.0
        %906 = vmatpush1.msra.mxu0 0.0
        %907 = vmatprep.subr.mxu0 0.0
        %908 = vmatpush1.msra.mxu0 0.0
        %909 = vmatprep.subr.mxu0 0.0
        %910 = vmatpush1.msra.mxu0 0.0
        %911 = vmatprep.subr.mxu0 0.0
        %912 = vmatpush1.msra.mxu0 0.0
        %913 = vmatprep.subr.mxu0 0.0
        %914 = vmatpush1.msra.mxu0 0.0
        %915 = vmatprep.subr.mxu0 0.0
        %916 = vmatpush1.msra.mxu0 0.0
        %917 = vmatprep.subr.mxu0 0.0
        %918 = vmatpush1.msra.mxu0 0.0
        %919 = vmatprep.subr.mxu0 0.0
        %920 = vmatpush1.msra.mxu0 0.0
        %921 = vmatprep.subr.mxu0 0.0
        %922 = vmatpush1.msra.mxu0 0.0
        %923 = vmatprep.subr.mxu0 0.0
        %924 = vmatpush1.msra.mxu0 0.0
        %925 = vmatprep.subr.mxu0 0.0
        %926 = vmatpush1.msra.mxu0 0.0
        %927 = vmatprep.subr.mxu0 0.0
        %928 = vmatpush1.msra.mxu0 0.0
        %929 = vmatprep.subr.mxu0 0.0
        %930 = vmatpush1.msra.mxu0 0.0
        %931 = vmatprep.subr.mxu0 0.0
        %932 = vmatpush1.msra.mxu0 0.0
        %933 = vmatprep.subr.mxu0 0.0
        %934 = vmatpush1.msra.mxu0 0.0
        %935 = vmatprep.subr.mxu0 0.0
        %936 = vmatpush1.msra.mxu0 0.0
        %937 = vmatprep.subr.mxu0 0.0
        %938 = vmatpush1.msra.mxu0 0.0
        %939 = vmatprep.subr.mxu0 0.0
        %940 = vmatpush1.msra.mxu0 0.0
        %941 = vmatprep.subr.mxu0 0.0
        %942 = vmatpush1.msra.mxu0 0.0
        %943 = vmatprep.subr.mxu0 0.0
        %944 = vmatpush1.msra.mxu0 0.0
        %945 = vmatprep.subr.mxu0 0.0
        %946 = vmatpush1.msra.mxu0 0.0
        %947 = vmatprep.subr.mxu0 0.0
        %948 = vmatpush1.msra.mxu0 0.0
        %949 = vmatprep.subr.mxu0 0.0
        %950 = vmatpush1.msra.mxu0 0.0
        %951 = vmatprep.subr.mxu0 0.0
        %952 = vmatpush1.msra.mxu0 0.0
        %953 = vmatprep.subr.mxu0 0.0
        %954 = vmatpush1.msra.mxu0 0.0
        %955 = vmatprep.mubr.f32.mxu0 0.0
        %956 = vmatmul.mubr.f32.gmra.mrb[0].mxu0 %v889
        %v957 = vpop.f32.mrb[0].mxu0
        %v958 = vadd.f32 0.0, %v957
        %v959 = vpop.f32.mrb[0].mxu0
        %v960 = vadd.f32 0.0, %v959
        %961 = vdwg.mxu0
        %962 = vst [vmem:[%s283 + $0x30] sm:$0xff] %v958
        %963 = vst [vmem:[%s283 + $0x38] sm:$0xff] %v960
        %v964 = vmul.f32 %v958, %v958
        %v965 = vadd.f32 %v958, %v960
        %v966 = vmul.f32 %v960, %v960
        %v967 = vadd.f32 %v964, %v966
        %v968 = vld [vmem:[#allocation12 + $0x30] sm:$0xff]
        %v969 = vadd.f32 %v968, %v965
        %970 = vst [vmem:[#allocation12 + $0x30] sm:$0xff] %v969
        %v971 = vld [vmem:[#allocation12 + $0x38] sm:$0xff]
        %v972 = vadd.f32 %v971, %v967
        %973 = vst [vmem:[#allocation12 + $0x38] sm:$0xff] %v972
        %v974 = vld [vmem:[#allocation2 + $0x80] sm:$0xff]
        %v975 = vld [vmem:[#allocation2 + $0x88] sm:$0xff]
        %v976 = vld [vmem:[#allocation2 + $0x90] sm:$0xff]
        %979 = vrot.lane.b32.xlu0 %v975, 112
        %v980 = vpop.permute.xlu0 %979
        %981 = vrot.lane.b32.xlu0 %v976, 112
        %v982 = vpop.permute.xlu0 %981
        %v983 = vsel %vm440, %v980, %v982
        %v987 = vmax.f32 %v974, %v980
        %v988 = vmax.f32 %v975, %v983
        %v989 = vmax.f32 %v976, %v982
        %v990 = vld [vmem:[#allocation2 + $0x88] sm:$0xff]
        %v991 = vld [vmem:[#allocation2 + $0x90] sm:$0xff]
        %v992 = vld [vmem:[#allocation2 + $0x98] sm:$0xff]
        %996 = vrot.lane.b32.xlu0 %v990, 96
        %v997 = vpop.permute.xlu0 %996
        %998 = vrot.lane.b32.xlu0 %v991, 96
        %v999 = vpop.permute.xlu0 %998
        %1000 = vrot.lane.b32.xlu0 %v992, 96
        %v1001 = vpop.permute.xlu0 %1000
        %v1002 = vsel %vm449, %v997, %v999
        %v1003 = vsel %vm449, %v999, %v1001
        %v1007 = vmax.f32 %v987, %v997
        %v1008 = vmax.f32 %v988, %v1002
        %v1009 = vmax.f32 %v989, %v1003
        %1013 = vrot.lane.b32.xlu0 %v1007, 16
        %v1014 = vpop.permute.xlu0 %1013
        %1015 = vrot.lane.b32.xlu0 %v1008, 16
        %v1016 = vpop.permute.xlu0 %1015
        %1017 = vrot.lane.b32.xlu0 %v1009, 16
        %v1018 = vpop.permute.xlu0 %1017
        %v1019 = vsel %vm472, %v1014, %v1016
        %v1020 = vsel %vm472, %v1016, %v1018
        %1023 = vst [vmem:[%s283 + $0x40] sm:$0xff] %v1019
        %1024 = vst [vmem:[%s283 + $0x48] sm:$0xff] %v1020
        %v1025 = vmul.f32 %v1007, %v1007
        %v1026 = vmul.f32 %v1008, %v1008
        %v1027 = vadd.f32 %v1007, %v1008
        %v1028 = vadd.f32 %v1008, %v1009
        %v1029 = vmul.f32 %v1009, %v1009
        %v1030 = vadd.f32 %v1025, %v1026
        %v1031 = vadd.f32 %v1026, %v1029
        %v1032 = vld [vmem:[#allocation12 + $0x40] sm:$0xff]
        %1035 = vrot.lane.b32.xlu0 %v1027, 16
        %v1036 = vpop.permute.xlu0 %1035
        %1037 = vrot.lane.b32.xlu0 %v1028, 16
        %v1038 = vpop.permute.xlu0 %1037
        %v1039 = vsel %vm472, %v1036, %v1038
        %v1041 = vadd.f32 %v1032, %v1039
        %1042 = vst [vmem:[#allocation12 + $0x40] sm:$0xff] %v1041
        %v1043 = vld [vmem:[#allocation12 + $0x48] sm:$0xff]
        %1046 = vrot.lane.b32.xlu0 %v1030, 16
        %v1047 = vpop.permute.xlu0 %1046
        %1048 = vrot.lane.b32.xlu0 %v1031, 16
        %v1049 = vpop.permute.xlu0 %1048
        %v1050 = vsel %vm472, %v1047, %v1049
        %v1052 = vadd.f32 %v1043, %v1050
        %1053 = vst [vmem:[#allocation12 + $0x48] sm:$0xff] %v1052
        %s1054 = sand.u32 %s123, 1
        %s1055 = scalar_lea.sflag [#allocation5], %s1054
        %s1056 = sand.u32 %s123, 1
        %s1057 = smul.addr %s1056, 80
        %s1058 = scalar_lea.vmem [#allocation11], %s1057
        // Predicated region
        $region57: #{multiscale_tcn_forward.4} parent=35 // pred_check
          %p1059 = pneg %p133
        $region58: #{multiscale_tcn_forward.4} parent=35 // pred_check_branch
          %1061 = sbr.rel (%p1059) target = $region60
        $region59: #{multiscale_tcn_forward.4} parent=35 // pred_region
          %s1063 = ssub.s32 1280, 1280
          %1064 = vsyncadd %s1055, %s1063
          %s1065 = smul.addr %s26, 10
          %s1066 = smul.addr %s1065, 128
          %s1067 = scalar_lea.hbm %s4, %s1066
          %s1068 = sshll.u32 %s1058, 4
          %s1069 = int_to_ptr.vmem [resolvable:$true] %s1068
          %1074 = dma.vmem_to_hbm [thread:$0]  %s1069, 1280, %s1067, %s1055, 256, 256, 16
        $region60: #{multiscale_tcn_forward.4} parent=35 // pred_fallthru
          _
        // Predicated region
        $region61: #{multiscale_tcn_forward.4} parent=35 // pred_check
          %p1075 = pneg %p154
        $region62: #{multiscale_tcn_forward.4} parent=35 // pred_check_branch
          %1077 = sbr.rel (%p1075) target = $region64
        $region63: #{multiscale_tcn_forward.4} parent=35 // pred_region
          %s1079 = ssub.s32 1280, 1280
          %1080 = vsyncadd [#allocation13], %s1079
          %s1081 = sshll.u32 [#allocation12], 4
          %s1082 = int_to_ptr.vmem [resolvable:$true] %s1081
          %1087 = dma.vmem_to_hbm [thread:$0]  %s1082, 1280, %s5, [#allocation13], 256, 256, 16
        $region64: #{multiscale_tcn_forward.4} parent=35 // pred_fallthru
          _
        // Predicated region
        $region65: #{multiscale_tcn_forward.4} parent=35 // pred_check
          %p1088 = pneg %p154
        $region66: #{multiscale_tcn_forward.4} parent=35 // pred_check_branch
          %1090 = sbr.rel (%p1088) target = $region68
        $region67: #{multiscale_tcn_forward.4} parent=35 // pred_region
          %1091 = dma.done [#allocation13], 1280
        $region68: #{multiscale_tcn_forward.4} parent=35 // pred_fallthru
          _
      $region36: #{multiscale_tcn_forward.4} parent=5 // pred_fallthru
        _
      %p1092 = scmp.le.s32.totalorder 2, %s21
      // Predicated region
      $region69: #{multiscale_tcn_forward.4} parent=5 // pred_check
        %p1093 = pneg %p1092
      $region70: #{multiscale_tcn_forward.4} parent=5 // pred_check_branch
        %1095 = sbr.rel (%p1093) target = $region72
      $region71: #{multiscale_tcn_forward.4} parent=5 // pred_region
        %s1096 = ssub.s32 %s21, 2
        // Predicated region
        $region73: #{multiscale_tcn_forward.4} parent=71 // pred_check
          %p1097 = pneg %p139
        $region74: #{multiscale_tcn_forward.4} parent=71 // pred_check_branch
          %1099 = sbr.rel (%p1097) target = $region76
        $region75: #{multiscale_tcn_forward.4} parent=71 // pred_region
          %s1100 = sand.u32 %s124, 1
          %s1101 = scalar_lea.sflag [#allocation5], %s1100
          %s1102 = sand.u32 %s124, 1
          %s1103 = smul.addr %s1102, 80
          %s1104 = scalar_lea.vmem [#allocation11], %s1103
          %1105 = dma.done %s1101, 1280
        $region76: #{multiscale_tcn_forward.4} parent=71 // pred_fallthru
          _
      $region72: #{multiscale_tcn_forward.4} parent=5 // pred_fallthru
        _
    $region6: #{multiscale_tcn_forward.4} parent=1 // loop_footer
      %s25 = sadd.s32 1, %s21
    $region7: #{multiscale_tcn_forward.4} parent=1 // loop_footer_branch
      %20 = sbr.rel target = $region3
    $region8: #{multiscale_tcn_forward.4} parent=1 // loop_exit
      _
    %1106 = vsyncpa [#allocation4], 1
    %s1107 = scalar_lea.sflag [#allocation4], 1
    %1108 = vsyncpa %s1107, 1
    %1109 = vsyncpa [#allocation7], 1
    %1110 = vsyncpa [#allocation10], 1
    %1111 = vsyncpa [#allocation5], 1
    %s1112 = scalar_lea.sflag [#allocation5], 1
    %1113 = vsyncpa %s1112, 1
    %1114 = vsyncpa [#allocation13], 1

</llo_original>
